<compile_context>
chip_gen: v7x
topology: tpu7x:2x2x1
jax: 0.10.0
libtpu: 0.0.40
codegen_flags: <defaults>
</compile_context>

<pallas_src>
import functools
import math

import jax
import jax.numpy as jnp
from jax import lax
from jax.experimental import pallas as pl
from jax.experimental.pallas import tpu as pltpu


# Above the 32 MiB scoped default; actual per-step usage is far below this.
_VMEM_LIMIT_BYTES = 64 * 1024 * 1024


def _largest_divisor_tile(dim, cap, multiple):
    """Largest tile t <= cap with dim % t == 0 and t % multiple == 0 (or t == dim)."""
    if dim <= cap:
        return dim
    t = (cap // multiple) * multiple
    while t >= multiple:
        if dim % t == 0:
            return t
        t -= multiple
    return dim  # fall back to the full (untiled) dimension


# ----------------------------------------------------------------------------
# Fused QKV projection + rotary embedding kernel.
# Grid: (M tiles, 3*num_heads).  Each output column block is one head of q, k or
# v (lane-dense, head_dim wide).  The K (= hidden) contraction is kept whole so
# no accumulator is needed; the weight is the streamed operand.
# RoPE:   rotate_half(x) * sin == roll(x, HD/2) * sin_signed
# where sin_signed has its first half negated (folded in by the wrapper), so the
# kernel only needs one XLU roll + 2 VPU muls + 1 add on the q/k blocks.
# ----------------------------------------------------------------------------
def _qkv_rope_kernel(x_ref, w_ref, cos_ref, sin_ref, o_ref, *, num_heads, head_dim):
    j = pl.program_id(1)  # block j: [0,NH) -> q head, [NH,2NH) -> k head, rest -> v head
    y = jnp.dot(x_ref[...], w_ref[...], preferred_element_type=jnp.float32)  # (tm, HD) f32

    @pl.when(j < 2 * num_heads)
    def _rope():
        rot = pltpu.roll(y, head_dim // 2, 1)  # [x2, x1]; sign already folded into sin
        o_ref[...] = (y * cos_ref[...] + rot * sin_ref[...]).astype(o_ref.dtype)

    @pl.when(j >= 2 * num_heads)
    def _passthrough():
        o_ref[...] = y.astype(o_ref.dtype)


def _qkv_rope(x2d, w_qkv, cos, sin_signed, out_dtype, *, num_heads, head_dim, block_m):
    M, K = x2d.shape
    K2, N = w_qkv.shape
    assert K == K2 and N == 3 * num_heads * head_dim
    tm = _largest_divisor_tile(M, block_m, 8)
    grid = (M // tm, 3 * num_heads)

    kernel = functools.partial(_qkv_rope_kernel, num_heads=num_heads, head_dim=head_dim)
    cost = pl.CostEstimate(
        flops=int(2 * M * K * N),
        transcendentals=0,
        bytes_accessed=int(
            x2d.size * x2d.dtype.itemsize
            + w_qkv.size * w_qkv.dtype.itemsize
            + (cos.size + sin_signed.size) * 4
            + M * N * jnp.dtype(out_dtype).itemsize
        ),
    )
    return pl.pallas_call(
        kernel,
        out_shape=jax.ShapeDtypeStruct((M, N), out_dtype),
        grid_spec=pltpu.PrefetchScalarGridSpec(
            num_scalar_prefetch=0,
            grid=grid,
            in_specs=[
                pl.BlockSpec((tm, K), lambda i, j: (i, 0)),          # activation row tile
                pl.BlockSpec((K, head_dim), lambda i, j: (0, j)),     # weight head-column tile
                pl.BlockSpec((tm, head_dim), lambda i, j: (i, 0)),    # cos (per row position)
                pl.BlockSpec((tm, head_dim), lambda i, j: (i, 0)),    # sin (sign-folded)
            ],
            out_specs=pl.BlockSpec((tm, head_dim), lambda i, j: (i, j)),
        ),
        compiler_params=pltpu.CompilerParams(
            dimension_semantics=("parallel", "parallel"),
            vmem_limit_bytes=_VMEM_LIMIT_BYTES,
        ),
        cost_estimate=cost,
    )(x2d, w_qkv, cos, sin_signed)


# ----------------------------------------------------------------------------
# Tiled linear kernel (output projection).
# ----------------------------------------------------------------------------
def _linear_kernel(x_ref, w_ref, o_ref):
    o_ref[...] = jnp.dot(
        x_ref[...], w_ref[...], preferred_element_type=jnp.float32
    ).astype(o_ref.dtype)


def _linear(x2d, w, out_dtype, *, block_m, block_n):
    M, K = x2d.shape
    K2, N = w.shape
    assert K == K2
    tm = _largest_divisor_tile(M, block_m, 8)
    tn = _largest_divisor_tile(N, block_n, 128)
    grid = (M // tm, N // tn)

    cost = pl.CostEstimate(
        flops=int(2 * M * K * N),
        transcendentals=0,
        bytes_accessed=int(
            x2d.size * x2d.dtype.itemsize
            + w.size * w.dtype.itemsize
            + M * N * jnp.dtype(out_dtype).itemsize
        ),
    )
    return pl.pallas_call(
        _linear_kernel,
        out_shape=jax.ShapeDtypeStruct((M, N), out_dtype),
        grid_spec=pltpu.PrefetchScalarGridSpec(
            num_scalar_prefetch=0,
            grid=grid,
            in_specs=[
                pl.BlockSpec((tm, K), lambda i, j: (i, 0)),
                pl.BlockSpec((K, tn), lambda i, j: (0, j)),
            ],
            out_specs=pl.BlockSpec((tm, tn), lambda i, j: (i, j)),
        ),
        compiler_params=pltpu.CompilerParams(
            dimension_semantics=("parallel", "parallel"),
            vmem_limit_bytes=_VMEM_LIMIT_BYTES,
        ),
        cost_estimate=cost,
    )(x2d, w)


# ----------------------------------------------------------------------------
# Flash-attention kernel reading q/k/v straight from the head-blocked QKV tensor.
# Grid: (batch, heads, q tiles, kv tiles); kv axis is the reduction axis (last,
# "arbitrary") with f32 accumulators in VMEM scratch.
# ----------------------------------------------------------------------------
def _flash_attn_kernel(*refs, scale, has_mask):
    if has_mask:
        q_ref, k_ref, v_ref, mask_ref, o_ref, m_sc, l_sc, acc_sc = refs
    else:
        q_ref, k_ref, v_ref, o_ref, m_sc, l_sc, acc_sc = refs
        mask_ref = None
    ki = pl.program_id(3)

    @pl.when(ki == 0)
    def _init():
        m_sc[...] = jnp.full(m_sc.shape, -jnp.inf, jnp.float32)
        l_sc[...] = jnp.zeros(l_sc.shape, jnp.float32)
        acc_sc[...] = jnp.zeros(acc_sc.shape, jnp.float32)

    q = q_ref[...]                                   # (tq, HD) bf16
    k = k_ref[...]                                   # (tk, HD) bf16
    s = lax.dot_general(                             # q @ k.T -> (tq, tk), f32 acc
        q, k, (((1,), (1,)), ((), ())), preferred_element_type=jnp.float32
    ) * scale
    if has_mask:
        s = s + mask_ref[...]                        # additive mask in f32

    m_prev = m_sc[...]
    m_new = jnp.maximum(m_prev, jnp.max(s, axis=-1, keepdims=True))
    alpha = jnp.exp(m_prev - m_new)
    p = jnp.exp(s - m_new)
    l_sc[...] = alpha * l_sc[...] + jnp.sum(p, axis=-1, keepdims=True)
    acc_sc[...] = alpha * acc_sc[...] + jnp.dot(
        p.astype(v_ref.dtype), v_ref[...], preferred_element_type=jnp.float32
    )
    m_sc[...] = m_new

    @pl.when(ki == pl.num_programs(3) - 1)
    def _finalize():
        o_ref[...] = (
            acc_sc[...] * pl.reciprocal(l_sc[...], approx=True)
        ).astype(o_ref.dtype)


def _flash_attention(qkv, mask, *, num_heads, head_dim, sm_scale,
                     block_q, block_k, out_dtype):
    B, S, threeH = qkv.shape
    assert threeH == 3 * num_heads * head_dim
    tq = _largest_divisor_tile(S, block_q, 8)
    tk = _largest_divisor_tile(S, block_k, 128)
    grid = (B, num_heads, S // tq, S // tk)
    nh = num_heads
    has_mask = mask is not None

    in_specs = [
        pl.BlockSpec((None, tq, head_dim), lambda b, h, qi, ki: (b, qi, h)),           # q head h
        pl.BlockSpec((None, tk, head_dim), lambda b, h, qi, ki: (b, ki, nh + h)),      # k head h
        pl.BlockSpec((None, tk, head_dim), lambda b, h, qi, ki: (b, ki, 2 * nh + h)),  # v head h
    ]
    inputs = [qkv, qkv, qkv]
    if has_mask:
        in_specs.append(pl.BlockSpec((None, tq, tk), lambda b, h, qi, ki: (b, qi, ki)))
        inputs.append(mask)

    kernel = functools.partial(_flash_attn_kernel, scale=sm_scale, has_mask=has_mask)
    cost = pl.CostEstimate(
        flops=int(4 * B * num_heads * S * S * head_dim),
        transcendentals=int(B * num_heads * S * S),
        bytes_accessed=int(
            qkv.size * qkv.dtype.itemsize
            + (mask.size * 4 if has_mask else 0)
            + B * S * num_heads * head_dim * jnp.dtype(out_dtype).itemsize
        ),
    )
    return pl.pallas_call(
        kernel,
        out_shape=jax.ShapeDtypeStruct((B, S, num_heads * head_dim), out_dtype),
        grid_spec=pltpu.PrefetchScalarGridSpec(
            num_scalar_prefetch=0,
            grid=grid,
            in_specs=in_specs,
            out_specs=pl.BlockSpec((None, tq, head_dim), lambda b, h, qi, ki: (b, qi, h)),
            scratch_shapes=[
                pltpu.VMEM((tq, 1), jnp.float32),         # running max m
                pltpu.VMEM((tq, 1), jnp.float32),         # running denom l
                pltpu.VMEM((tq, head_dim), jnp.float32),  # f32 output accumulator
            ],
        ),
        compiler_params=pltpu.CompilerParams(
            dimension_semantics=("parallel", "parallel", "parallel", "arbitrary"),
            vmem_limit_bytes=_VMEM_LIMIT_BYTES,
        ),
        cost_estimate=cost,
    )(*inputs)


# ----------------------------------------------------------------------------
# Rotary embedding helpers (same math as LlamaRotaryEmbedding / apply_rotary_pos_emb).
# ----------------------------------------------------------------------------
def _rotary_cache(dim, max_pos, base):
    inv_freq = 1.0 / (base ** (jnp.arange(0, dim, 2, dtype=jnp.float32) / dim))
    t = jnp.arange(max_pos, dtype=jnp.float32)
    freqs = jnp.einsum("i,j->ij", t, inv_freq)
    emb = jnp.concatenate([freqs, freqs], axis=-1)
    return jnp.cos(emb), jnp.sin(emb)


def _rotate_half(x):
    half = x.shape[-1] // 2
    return jnp.concatenate([-x[..., half:], x[..., :half]], axis=-1)


# ----------------------------------------------------------------------------
# Full LlamaAttention forward (default arguments path).
# ----------------------------------------------------------------------------
@functools.partial(
    jax.jit,
    static_argnames=(
        "num_heads", "head_dim", "rope_base", "max_position_embeddings",
        "compute_dtype", "block_m", "block_n", "block_q", "block_k",
    ),
)
def llama_attention(hidden_states, wq, wk, wv, wo, attention_mask, position_ids, *,
                    num_heads, head_dim, rope_base=10000.0,
                    max_position_embeddings=2048, compute_dtype=jnp.bfloat16,
                    block_m=256, block_n=512, block_q=256, block_k=512):
    """hidden_states: [B, S, H]; wq/wk/wv: [H, NH*HD]; wo: [NH*HD, H];
    attention_mask: [B, 1, S, S] additive (or None); position_ids: [B, S] int."""
    B, S, H = hidden_states.shape
    NH, HD = num_heads, head_dim
    assert H == NH * HD
    # TODO(synk): head_dim that is not a multiple of 128 needs a fallback layout
    # (apply RoPE in the wrapper and block attention over [B*NH, S, HD]).
    assert HD % 128 == 0, "this fast path assumes head_dim % 128 == 0"
    out_dtype = hidden_states.dtype
    cd = compute_dtype

    # --- rotary tables gathered per (b, s); rotate_half sign folded into sin ----
    cos_cache, sin_cache = _rotary_cache(HD, max(max_position_embeddings, S), rope_base)
    cos = cos_cache[position_ids].reshape(B * S, HD)                  # f32
    sin = sin_cache[position_ids].reshape(B * S, HD)
    half_sign = jnp.concatenate(
        [-jnp.ones((HD // 2,), jnp.float32), jnp.ones((HD // 2,), jnp.float32)])
    sin_signed = sin * half_sign

    # --- fused QKV projection + RoPE: one MXU pass over x, head-blocked output ---
    w_qkv = jnp.concatenate([wq, wk, wv], axis=1).astype(cd)          # [H, 3*NH*HD]
    x2d = hidden_states.reshape(B * S, H).astype(cd)
    qkv = _qkv_rope(x2d, w_qkv, cos, sin_signed, cd,
                    num_heads=NH, head_dim=HD, block_m=block_m)       # [B*S, 3*H]
    qkv = qkv.reshape(B, S, 3 * H)                                    # free reshape

    # The reference module's view() implies num_key_value_heads == num_heads, so
    # repeat_kv is the identity here.
    # TODO(synk): GQA (num_kv_heads < num_heads), past_key_value/KV-cache append,
    # prefix_token_length / remove_poi memory-token variants are not implemented.

    mask = None
    if attention_mask is not None:
        mask = attention_mask.reshape(B, S, S).astype(jnp.float32)

    # --- flash attention straight off the head-blocked QKV tensor (no transposes) -
    attn = _flash_attention(
        qkv, mask, num_heads=NH, head_dim=HD, sm_scale=1.0 / math.sqrt(HD),
        block_q=block_q, block_k=block_k, out_dtype=cd)               # [B, S, H]

    # --- output projection -------------------------------------------------------
    out = _linear(attn.reshape(B * S, H), wo.astype(cd), out_dtype,
                  block_m=block_m, block_n=block_n)
    return out.reshape(B, S, wo.shape[1])


# ----------------------------------------------------------------------------
# Pure-JAX reference with identical math and the same bf16-compute/f32-accumulate
# dtype policy as the kernels (module semantics; dtype-matched for a tight check).
# ----------------------------------------------------------------------------
def llama_attention_reference(hidden_states, wq, wk, wv, wo, attention_mask, position_ids, *,
                              num_heads, head_dim, rope_base=10000.0,
                              max_position_embeddings=2048, compute_dtype=jnp.bfloat16):
    B, S, H = hidden_states.shape
    cd = compute_dtype
    x = hidden_states.astype(cd)
    q = jnp.einsum("bsh,hd->bsd", x, wq.astype(cd), preferred_element_type=jnp.float32)
    k = jnp.einsum("bsh,hd->bsd", x, wk.astype(cd), preferred_element_type=jnp.float32)
    v = jnp.einsum("bsh,hd->bsd", x, wv.astype(cd), preferred_element_type=jnp.float32)
    q = q.reshape(B, S, num_heads, head_dim).transpose(0, 2, 1, 3)    # f32
    k = k.reshape(B, S, num_heads, head_dim).transpose(0, 2, 1, 3)
    v = v.reshape(B, S, num_heads, head_dim).transpose(0, 2, 1, 3).astype(cd)

    cos_cache, sin_cache = _rotary_cache(head_dim, max(max_position_embeddings, S), rope_base)
    cos = cos_cache[position_ids][:, None, :, :]
    sin = sin_cache[position_ids][:, None, :, :]
    q = (q * cos + _rotate_half(q) * sin).astype(cd)
    k = (k * cos + _rotate_half(k) * sin).astype(cd)

    scores = jnp.einsum("bhqd,bhkd->bhqk", q, k,
                        preferred_element_type=jnp.float32) / math.sqrt(head_dim)
    if attention_mask is not None:
        scores = scores + attention_mask.astype(jnp.float32)
    p = jax.nn.softmax(scores, axis=-1).astype(cd)
    attn = jnp.einsum("bhqk,bhkd->bhqd", p, v, preferred_element_type=jnp.float32).astype(cd)
    attn = attn.transpose(0, 2, 1, 3).reshape(B, S, num_heads * head_dim)
    out = jnp.einsum("bsd,dh->bsh", attn, wo.astype(cd), preferred_element_type=jnp.float32)
    return out.astype(hidden_states.dtype)


if __name__ == "__main__":
    # Small-but-TPU-friendly config: hidden=256, 2 heads x head_dim 128, seq 256.
    B, S = 2, 256
    num_heads = 2
    head_dim = 128
    hidden = num_heads * head_dim
    max_position_embeddings = 512

    key = jax.random.PRNGKey(0)
    kx, kq, kk, kv, ko = jax.random.split(key, 5)
    x = jax.random.normal(kx, (B, S, hidden), dtype=jnp.float32)
    w_scale = 1.0 / math.sqrt(hidden)
    wq = jax.random.normal(kq, (hidden, num_heads * head_dim), jnp.float32) * w_scale
    wk = jax.random.normal(kk, (hidden, num_heads * head_dim), jnp.float32) * w_scale
    wv = jax.random.normal(kv, (hidden, num_heads * head_dim), jnp.float32) * w_scale
    wo = jax.random.normal(ko, (num_heads * head_dim, hidden), jnp.float32) * w_scale

    position_ids = jnp.broadcast_to(jnp.arange(S, dtype=jnp.int32)[None, :], (B, S))
    # Additive causal mask of shape (bsz, 1, q_len, kv_len) as the module expects.
    row = jnp.arange(S)
    causal = jnp.where(row[None, :] <= row[:, None], 0.0, -1e9).astype(jnp.float32)
    attention_mask = jnp.broadcast_to(causal[None, None], (B, 1, S, S))

    out = llama_attention(
        x, wq, wk, wv, wo, attention_mask, position_ids,
        num_heads=num_heads, head_dim=head_dim,
        rope_base=10000.0, max_position_embeddings=max_position_embeddings)
    out = jax.block_until_ready(out)

    ref = llama_attention_reference(
        x, wq, wk, wv, wo, attention_mask, position_ids,
        num_heads=num_heads, head_dim=head_dim,
        rope_base=10000.0, max_position_embeddings=max_position_embeddings)

    assert out.shape == (B, S, hidden)
    assert jnp.allclose(out, ref, atol=3e-2, rtol=3e-2), float(jnp.max(jnp.abs(out - ref)))
    print("KERNEL_OK")
</pallas_src>

<mosaic_0001>
module attributes {stable_mosaic.version = 11 : i64} {
  func.func @_qkv_rope_kernel(%arg0: i32, %arg1: i32, %arg2: memref<256x256xbf16, #tpu.memory_space<vmem>>, %arg3: memref<256x128xbf16, #tpu.memory_space<vmem>>, %arg4: memref<256x128xf32, #tpu.memory_space<vmem>>, %arg5: memref<256x128xf32, #tpu.memory_space<vmem>>, %arg6: memref<256x128xbf16, #tpu.memory_space<vmem>>) attributes {dimension_semantics = [#tpu.dimension_semantics<parallel>, #tpu.dimension_semantics<parallel>], iteration_bounds = array<i64: 2, 6>, scalar_prefetch = 0 : i64, scratch_operands = 0 : i64, tpu.core_type = #tpu.core_type<tc>, window_params = [{transform_indices = @transform_0, window_bounds = array<i64: 256, 256>}, {transform_indices = @transform_1, window_bounds = array<i64: 256, 128>}, {transform_indices = @transform_2, window_bounds = array<i64: 256, 128>}, {transform_indices = @transform_3, window_bounds = array<i64: 256, 128>}, {transform_indices = @transform_4, window_bounds = array<i64: 256, 128>}]} {
    %c0 = arith.constant 0 : index
    %c0_0 = arith.constant 0 : index
    %0 = vector.load %arg2[%c0, %c0_0] : memref<256x256xbf16, #tpu.memory_space<vmem>>, vector<256x256xbf16>
    %c0_1 = arith.constant 0 : index
    %c0_2 = arith.constant 0 : index
    %1 = vector.load %arg3[%c0_1, %c0_2] : memref<256x128xbf16, #tpu.memory_space<vmem>>, vector<256x128xbf16>
    %cst = arith.constant dense<0.000000e+00> : vector<256x128xf32>
    %2 = tpu.matmul %0, %1, %cst {dimension_numbers = #tpu.dot_dimension_numbers<[1], [0], [0], [1], [0, 0, 1, 1], [], []>} : vector<256x256xbf16>, vector<256x128xbf16>, vector<256x128xf32> -> vector<256x128xf32>
    %c4_i32 = arith.constant 4 : i32
    %3 = arith.cmpi slt, %arg1, %c4_i32 : i32
    %4 = arith.extui %3 : i1 to i32
    %c0_i32 = arith.constant 0 : i32
    %5 = arith.cmpi ne, %4, %c0_i32 : i32
    scf.if %5 {
      %c64_i32 = arith.constant 64 : i32
      %9 = tpu.dynamic_rotate %2 by %c64_i32 dim 1 : vector<256x128xf32>, i32 -> vector<256x128xf32>
      %c0_5 = arith.constant 0 : index
      %c0_6 = arith.constant 0 : index
      %10 = vector.load %arg4[%c0_5, %c0_6] : memref<256x128xf32, #tpu.memory_space<vmem>>, vector<256x128xf32>
      %11 = arith.mulf %2, %10 : vector<256x128xf32>
      %c0_7 = arith.constant 0 : index
      %c0_8 = arith.constant 0 : index
      %12 = vector.load %arg5[%c0_7, %c0_8] : memref<256x128xf32, #tpu.memory_space<vmem>>, vector<256x128xf32>
      %13 = arith.mulf %9, %12 : vector<256x128xf32>
      %14 = arith.addf %11, %13 : vector<256x128xf32>
      %15 = arith.truncf %14 : vector<256x128xf32> to vector<256x128xbf16>
      %c0_9 = arith.constant 0 : index
      %c0_10 = arith.constant 0 : index
      %16 = vector.load %arg6[%c0_9, %c0_10] : memref<256x128xbf16, #tpu.memory_space<vmem>>, vector<256x128xbf16>
      tpu.vector_store %arg6[%c0_9, %c0_10], %15 {strides = array<i32>} : memref<256x128xbf16, #tpu.memory_space<vmem>>, vector<256x128xbf16>,
    } else {
    }
    %c4_i32_3 = arith.constant 4 : i32
    %6 = arith.cmpi sge, %arg1, %c4_i32_3 : i32
    %7 = arith.extui %6 : i1 to i32
    %c0_i32_4 = arith.constant 0 : i32
    %8 = arith.cmpi ne, %7, %c0_i32_4 : i32
    scf.if %8 {
      %9 = arith.truncf %2 : vector<256x128xf32> to vector<256x128xbf16>
      %c0_5 = arith.constant 0 : index
      %c0_6 = arith.constant 0 : index
      %10 = vector.load %arg6[%c0_5, %c0_6] : memref<256x128xbf16, #tpu.memory_space<vmem>>, vector<256x128xbf16>
      tpu.vector_store %arg6[%c0_5, %c0_6], %9 {strides = array<i32>} : memref<256x128xbf16, #tpu.memory_space<vmem>>, vector<256x128xbf16>,
    } else {
    }
    return
  }
  func.func @transform_0(%arg0: i32, %arg1: i32) -> (i32, i32) {
    %c0_i32 = arith.constant 0 : i32
    %c0_i32_0 = arith.constant 0 : i32
    return %arg0, %c0_i32 : i32, i32
  }
  func.func @transform_1(%arg0: i32, %arg1: i32) -> (i32, i32) {
    %c0_i32 = arith.constant 0 : i32
    %c0_i32_0 = arith.constant 0 : i32
    return %c0_i32, %arg1 : i32, i32
  }
  func.func @transform_2(%arg0: i32, %arg1: i32) -> (i32, i32) {
    %c0_i32 = arith.constant 0 : i32
    %c0_i32_0 = arith.constant 0 : i32
    return %arg0, %c0_i32 : i32, i32
  }
  func.func @transform_3(%arg0: i32, %arg1: i32) -> (i32, i32) {
    %c0_i32 = arith.constant 0 : i32
    %c0_i32_0 = arith.constant 0 : i32
    return %arg0, %c0_i32 : i32, i32
  }
  func.func @transform_4(%arg0: i32, %arg1: i32) -> (i32, i32) {
    %c0_i32 = arith.constant 0 : i32
    return %arg0, %arg1 : i32, i32
  }
}

module attributes {stable_mosaic.version = 11 : i64} {
  func.func @_flash_attn_kernel(%arg0: i32, %arg1: i32, %arg2: i32, %arg3: i32, %arg4: memref<1x256x128xbf16, #tpu.memory_space<vmem>>, %arg5: memref<1x256x128xbf16, #tpu.memory_space<vmem>>, %arg6: memref<1x256x128xbf16, #tpu.memory_space<vmem>>, %arg7: memref<1x256x256xf32, #tpu.memory_space<vmem>>, %arg8: memref<1x256x128xbf16, #tpu.memory_space<vmem>>, %arg9: memref<256x1xf32, #tpu.memory_space<vmem>>, %arg10: memref<256x1xf32, #tpu.memory_space<vmem>>, %arg11: memref<256x128xf32, #tpu.memory_space<vmem>>) attributes {dimension_semantics = [#tpu.dimension_semantics<parallel>, #tpu.dimension_semantics<parallel>, #tpu.dimension_semantics<parallel>, #tpu.dimension_semantics<arbitrary>], iteration_bounds = array<i64: 2, 2, 1, 1>, scalar_prefetch = 0 : i64, scratch_operands = 3 : i64, tpu.core_type = #tpu.core_type<tc>, window_params = [{transform_indices = @transform_0, window_bounds = array<i64: 1, 256, 128>}, {transform_indices = @transform_1, window_bounds = array<i64: 1, 256, 128>}, {transform_indices = @transform_2, window_bounds = array<i64: 1, 256, 128>}, {transform_indices = @transform_3, window_bounds = array<i64: 1, 256, 256>}, {transform_indices = @transform_4, window_bounds = array<i64: 1, 256, 128>}]} {
    %c0_i32 = arith.constant 0 : i32
    %0 = arith.cmpi eq, %arg3, %c0_i32 : i32
    %1 = arith.extui %0 : i1 to i32
    %c0_i32_0 = arith.constant 0 : i32
    %2 = arith.cmpi ne, %1, %c0_i32_0 : i32
    scf.if %2 {
      %cst_30 = arith.constant 0xFF800000 : f32
      %41 = vector.broadcast %cst_30 : f32 to vector<256x1xf32>
      %c0_31 = arith.constant 0 : index
      %c0_32 = arith.constant 0 : index
      %42 = vector.load %arg9[%c0_31, %c0_32] : memref<256x1xf32, #tpu.memory_space<vmem>>, vector<256x1xf32>
      tpu.vector_store %arg9[%c0_31, %c0_32], %41 {strides = array<i32>} : memref<256x1xf32, #tpu.memory_space<vmem>>, vector<256x1xf32>,
      %cst_33 = arith.constant 0.000000e+00 : f32
      %43 = vector.broadcast %cst_33 : f32 to vector<256x1xf32>
      %c0_34 = arith.constant 0 : index
      %c0_35 = arith.constant 0 : index
      %44 = vector.load %arg10[%c0_34, %c0_35] : memref<256x1xf32, #tpu.memory_space<vmem>>, vector<256x1xf32>
      tpu.vector_store %arg10[%c0_34, %c0_35], %43 {strides = array<i32>} : memref<256x1xf32, #tpu.memory_space<vmem>>, vector<256x1xf32>,
      %cst_36 = arith.constant 0.000000e+00 : f32
      %45 = vector.broadcast %cst_36 : f32 to vector<256x128xf32>
      %c0_37 = arith.constant 0 : index
      %c0_38 = arith.constant 0 : index
      %46 = vector.load %arg11[%c0_37, %c0_38] : memref<256x128xf32, #tpu.memory_space<vmem>>, vector<256x128xf32>
      tpu.vector_store %arg11[%c0_37, %c0_38], %45 {strides = array<i32>} : memref<256x128xf32, #tpu.memory_space<vmem>>, vector<256x128xf32>,
    } else {
    }
    %c0 = arith.constant 0 : index
    %c0_1 = arith.constant 0 : index
    %c0_2 = arith.constant 0 : index
    %3 = vector.load %arg4[%c0, %c0_1, %c0_2] : memref<1x256x128xbf16, #tpu.memory_space<vmem>>, vector<1x256x128xbf16>
    %4 = vector.shape_cast %3 : vector<1x256x128xbf16> to vector<256x128xbf16>
    %c0_3 = arith.constant 0 : index
    %c0_4 = arith.constant 0 : index
    %c0_5 = arith.constant 0 : index
    %5 = vector.load %arg5[%c0_3, %c0_4, %c0_5] : memref<1x256x128xbf16, #tpu.memory_space<vmem>>, vector<1x256x128xbf16>
    %6 = vector.shape_cast %5 : vector<1x256x128xbf16> to vector<256x128xbf16>
    %cst = arith.constant dense<0.000000e+00> : vector<256x256xf32>
    %7 = tpu.matmul %4, %6, %cst {dimension_numbers = #tpu.dot_dimension_numbers<[1], [1], [0], [0], [0, 0, 1, 0], [], []>} : vector<256x128xbf16>, vector<256x128xbf16>, vector<256x256xf32> -> vector<256x256xf32>
    %cst_6 = arith.constant 0.0883883461 : f32
    %8 = vector.broadcast %cst_6 : f32 to vector<256x256xf32>
    %9 = arith.mulf %7, %8 : vector<256x256xf32>
    %c0_7 = arith.constant 0 : index
    %c0_8 = arith.constant 0 : index
    %c0_9 = arith.constant 0 : index
    %10 = vector.load %arg7[%c0_7, %c0_8, %c0_9] : memref<1x256x256xf32, #tpu.memory_space<vmem>>, vector<1x256x256xf32>
    %11 = vector.shape_cast %10 : vector<1x256x256xf32> to vector<256x256xf32>
    %12 = arith.addf %9, %11 : vector<256x256xf32>
    %c0_10 = arith.constant 0 : index
    %c0_11 = arith.constant 0 : index
    %13 = vector.load %arg9[%c0_10, %c0_11] : memref<256x1xf32, #tpu.memory_space<vmem>>, vector<256x1xf32>
    %cst_12 = arith.constant dense<0xFF800000> : vector<256xf32>
    %14 = vector.multi_reduction <maximumf>, %12, %cst_12 [1] : vector<256x256xf32> to vector<256xf32>
    %15 = vector.shape_cast %14 : vector<256xf32> to vector<256x1xf32>
    %16 = arith.maximumf %13, %15 : vector<256x1xf32>
    %17 = arith.subf %13, %16 : vector<256x1xf32>
    %18 = math.exp %17 : vector<256x1xf32>
    %19 = vector.broadcast %16 : vector<256x1xf32> to vector<256x256xf32>
    %20 = arith.subf %12, %19 : vector<256x256xf32>
    %21 = math.exp %20 : vector<256x256xf32>
    %c0_13 = arith.constant 0 : index
    %c0_14 = arith.constant 0 : index
    %22 = vector.load %arg10[%c0_13, %c0_14] : memref<256x1xf32, #tpu.memory_space<vmem>>, vector<256x1xf32>
    %23 = arith.mulf %18, %22 : vector<256x1xf32>
    %cst_15 = arith.constant dense<0.000000e+00> : vector<256xf32>
    %24 = vector.multi_reduction <add>, %21, %cst_15 [1] : vector<256x256xf32> to vector<256xf32>
    %25 = vector.shape_cast %24 : vector<256xf32> to vector<256x1xf32>
    %26 = arith.addf %23, %25 : vector<256x1xf32>
    %c0_16 = arith.constant 0 : index
    %c0_17 = arith.constant 0 : index
    %27 = vector.load %arg10[%c0_16, %c0_17] : memref<256x1xf32, #tpu.memory_space<vmem>>, vector<256x1xf32>
    tpu.vector_store %arg10[%c0_16, %c0_17], %26 {strides = array<i32>} : memref<256x1xf32, #tpu.memory_space<vmem>>, vector<256x1xf32>,
    %c0_18 = arith.constant 0 : index
    %c0_19 = arith.constant 0 : index
    %28 = vector.load %arg11[%c0_18, %c0_19] : memref<256x128xf32, #tpu.memory_space<vmem>>, vector<256x128xf32>
    %29 = vector.broadcast %18 : vector<256x1xf32> to vector<256x128xf32>
    %30 = arith.mulf %29, %28 : vector<256x128xf32>
    %31 = arith.truncf %21 : vector<256x256xf32> to vector<256x256xbf16>
    %c0_20 = arith.constant 0 : index
    %c0_21 = arith.constant 0 : index
    %c0_22 = arith.constant 0 : index
    %32 = vector.load %arg6[%c0_20, %c0_21, %c0_22] : memref<1x256x128xbf16, #tpu.memory_space<vmem>>, vector<1x256x128xbf16>
    %33 = vector.shape_cast %32 : vector<1x256x128xbf16> to vector<256x128xbf16>
    %cst_23 = arith.constant dense<0.000000e+00> : vector<256x128xf32>
    %34 = tpu.matmul %31, %33, %cst_23 {dimension_numbers = #tpu.dot_dimension_numbers<[1], [0], [0], [1], [0, 0, 1, 1], [], []>} : vector<256x256xbf16>, vector<256x128xbf16>, vector<256x128xf32> -> vector<256x128xf32>
    %35 = arith.addf %30, %34 : vector<256x128xf32>
    %c0_24 = arith.constant 0 : index
    %c0_25 = arith.constant 0 : index
    %36 = vector.load %arg11[%c0_24, %c0_25] : memref<256x128xf32, #tpu.memory_space<vmem>>, vector<256x128xf32>
    tpu.vector_store %arg11[%c0_24, %c0_25], %35 {strides = array<i32>} : memref<256x128xf32, #tpu.memory_space<vmem>>, vector<256x128xf32>,
    %c0_26 = arith.constant 0 : index
    %c0_27 = arith.constant 0 : index
    %37 = vector.load %arg9[%c0_26, %c0_27] : memref<256x1xf32, #tpu.memory_space<vmem>>, vector<256x1xf32>
    tpu.vector_store %arg9[%c0_26, %c0_27], %16 {strides = array<i32>} : memref<256x1xf32, #tpu.memory_space<vmem>>, vector<256x1xf32>,
    %c0_i32_28 = arith.constant 0 : i32
    %38 = arith.cmpi eq, %arg3, %c0_i32_28 : i32
    %39 = arith.extui %38 : i1 to i32
    %c0_i32_29 = arith.constant 0 : i32
    %40 = arith.cmpi ne, %39, %c0_i32_29 : i32
    scf.if %40 {
      %c0_30 = arith.constant 0 : index
      %c0_31 = arith.constant 0 : index
      %41 = vector.load %arg11[%c0_30, %c0_31] : memref<256x128xf32, #tpu.memory_space<vmem>>, vector<256x128xf32>
      %c0_32 = arith.constant 0 : index
      %c0_33 = arith.constant 0 : index
      %42 = vector.load %arg10[%c0_32, %c0_33] : memref<256x1xf32, #tpu.memory_space<vmem>>, vector<256x1xf32>
      %43 = tpu.reciprocal %42 {approx = true} : vector<256x1xf32> -> vector<256x1xf32>
      %44 = vector.broadcast %43 : vector<256x1xf32> to vector<256x128xf32>
      %45 = arith.mulf %41, %44 : vector<256x128xf32>
      %46 = arith.truncf %45 : vector<256x128xf32> to vector<256x128xbf16>
      %c0_34 = arith.constant 0 : index
      %c0_35 = arith.constant 0 : index
      %c0_36 = arith.constant 0 : index
      %47 = vector.load %arg8[%c0_34, %c0_35, %c0_36] : memref<1x256x128xbf16, #tpu.memory_space<vmem>>, vector<1x256x128xbf16>
      %48 = vector.shape_cast %47 : vector<1x256x128xbf16> to vector<256x128xbf16>
      %49 = vector.shape_cast %46 : vector<256x128xbf16> to vector<1x256x128xbf16>
      tpu.vector_store %arg8[%c0_34, %c0_35, %c0_36], %49 {strides = array<i32>} : memref<1x256x128xbf16, #tpu.memory_space<vmem>>, vector<1x256x128xbf16>,
    } else {
    }
    return
  }
  func.func @transform_0(%arg0: i32, %arg1: i32, %arg2: i32, %arg3: i32) -> (i32, i32, i32) {
    %c0_i32 = arith.constant 0 : i32
    return %arg0, %arg2, %arg1 : i32, i32, i32
  }
  func.func @transform_1(%arg0: i32, %arg1: i32, %arg2: i32, %arg3: i32) -> (i32, i32, i32) {
    %c2_i32 = arith.constant 2 : i32
    %0 = arith.addi %c2_i32, %arg1 : i32
    %c0_i32 = arith.constant 0 : i32
    return %arg0, %arg3, %0 : i32, i32, i32
  }
  func.func @transform_2(%arg0: i32, %arg1: i32, %arg2: i32, %arg3: i32) -> (i32, i32, i32) {
    %c4_i32 = arith.constant 4 : i32
    %0 = arith.addi %c4_i32, %arg1 : i32
    %c0_i32 = arith.constant 0 : i32
    return %arg0, %arg3, %0 : i32, i32, i32
  }
  func.func @transform_3(%arg0: i32, %arg1: i32, %arg2: i32, %arg3: i32) -> (i32, i32, i32) {
    %c0_i32 = arith.constant 0 : i32
    return %arg0, %arg2, %arg3 : i32, i32, i32
  }
  func.func @transform_4(%arg0: i32, %arg1: i32, %arg2: i32, %arg3: i32) -> (i32, i32, i32) {
    %c0_i32 = arith.constant 0 : i32
    return %arg0, %arg2, %arg1 : i32, i32, i32
  }
}

module attributes {stable_mosaic.version = 11 : i64} {
  func.func @_linear_kernel(%arg0: i32, %arg1: i32, %arg2: memref<256x256xbf16, #tpu.memory_space<vmem>>, %arg3: memref<256x256xbf16, #tpu.memory_space<vmem>>, %arg4: memref<256x256xf32, #tpu.memory_space<vmem>>) attributes {dimension_semantics = [#tpu.dimension_semantics<parallel>, #tpu.dimension_semantics<parallel>], iteration_bounds = array<i64: 2, 1>, scalar_prefetch = 0 : i64, scratch_operands = 0 : i64, tpu.core_type = #tpu.core_type<tc>, window_params = [{transform_indices = @transform_0, window_bounds = array<i64: 256, 256>}, {transform_indices = @transform_1, window_bounds = array<i64: 256, 256>}, {transform_indices = @transform_2, window_bounds = array<i64: 256, 256>}]} {
    %c0 = arith.constant 0 : index
    %c0_0 = arith.constant 0 : index
    %0 = vector.load %arg2[%c0, %c0_0] : memref<256x256xbf16, #tpu.memory_space<vmem>>, vector<256x256xbf16>
    %c0_1 = arith.constant 0 : index
    %c0_2 = arith.constant 0 : index
    %1 = vector.load %arg3[%c0_1, %c0_2] : memref<256x256xbf16, #tpu.memory_space<vmem>>, vector<256x256xbf16>
    %cst = arith.constant dense<0.000000e+00> : vector<256x256xf32>
    %2 = tpu.matmul %0, %1, %cst {dimension_numbers = #tpu.dot_dimension_numbers<[1], [0], [0], [1], [0, 0, 1, 1], [], []>} : vector<256x256xbf16>, vector<256x256xbf16>, vector<256x256xf32> -> vector<256x256xf32>
    %c0_3 = arith.constant 0 : index
    %c0_4 = arith.constant 0 : index
    %3 = vector.load %arg4[%c0_3, %c0_4] : memref<256x256xf32, #tpu.memory_space<vmem>>, vector<256x256xf32>
    tpu.vector_store %arg4[%c0_3, %c0_4], %2 {strides = array<i32>} : memref<256x256xf32, #tpu.memory_space<vmem>>, vector<256x256xf32>,
    return
  }
  func.func @transform_0(%arg0: i32, %arg1: i32) -> (i32, i32) {
    %c0_i32 = arith.constant 0 : i32
    %c0_i32_0 = arith.constant 0 : i32
    return %arg0, %c0_i32 : i32, i32
  }
  func.func @transform_1(%arg0: i32, %arg1: i32) -> (i32, i32) {
    %c0_i32 = arith.constant 0 : i32
    %c0_i32_0 = arith.constant 0 : i32
    return %c0_i32, %arg1 : i32, i32
  }
  func.func @transform_2(%arg0: i32, %arg1: i32) -> (i32, i32) {
    %c0_i32 = arith.constant 0 : i32
    return %arg0, %arg1 : i32, i32
  }
}

</mosaic_0001>

<llo_original>
// kernel: llama_attention.3
$region0: #{llama_attention.3}
  #allocation0 [shape = 'u32[]', space=smem, size = 0x4, offset = 0x4, fixed_abs, tag = 'smem constant byte address 0x4 - core index']
  #allocation1 [shape = 'u32[144,128]{1,0:T(1,128)}', space=vmem, size = 0x12000, scoped, tag = 'internal scratch']
  %s0 = inlined_call_operand.hbm [shape: bf16[512,256], index: 0, kind: input, shape index: {}]
  %s1 = inlined_call_operand.hbm [shape: bf16[256,768], index: 1, kind: input, shape index: {}]
  %s2 = inlined_call_operand.hbm [shape: f32[512,128], index: 2, kind: input, shape index: {}]
  %s3 = inlined_call_operand.hbm [shape: f32[512,128], index: 3, kind: input, shape index: {}]
  %s4 = inlined_call_operand.hbm [shape: bf16[512,768], index: 4, kind: output, shape index: {}]
  %s5 = sld [smem:[#allocation0]]
  $region73: #{llama_attention.3} parent=0
    _
  %s7 = ssub.s32 1, %s5
  %s8 = scalar_select 0, %s7, %s5
  $region1: #{llama_attention.3} parent=0
    #allocation2 [shape = 'u8[262144]{0}', space=vmem, size = 0x40000, scoped, tag = 'input window, operand 0']
    #allocation3 [shape = 's32[2]{0}', space=sflag, size = 0x8, scoped, tag = 'scoped memory for llama_attention.3']
    #allocation4 [shape = 's32[2]{0}', space=sflag, size = 0x8, scoped, tag = 'scoped memory for llama_attention.3']
    #allocation5 [shape = 'u8[131072]{0}', space=vmem, size = 0x20000, scoped, tag = 'input window, operand 1']
    #allocation6 [shape = 's32[2]{0}', space=sflag, size = 0x8, scoped, tag = 'scoped memory for llama_attention.3']
    #allocation7 [shape = 'u8[262144]{0}', space=vmem, size = 0x40000, scoped, tag = 'input window, operand 2']
    #allocation8 [shape = 'u8[262144]{0}', space=vmem, size = 0x40000, scoped, tag = 'input window, operand 3']
    #allocation9 [shape = 's32[2]{0}', space=sflag, size = 0x8, scoped, tag = 'scoped memory for llama_attention.3']
    #allocation10 [shape = 'u8[131072]{0}', space=vmem, size = 0x20000, scoped, tag = 'output window, operand 0']
    %9 = vsyncpa [#allocation3], 0
    %s10 = scalar_lea.sflag [#allocation3], 1
    %11 = vsyncpa %s10, 0
    %12 = vsyncpa [#allocation6], 0
    %s13 = scalar_lea.sflag [#allocation6], 1
    %14 = vsyncpa %s13, 0
    %15 = vsyncpa [#allocation9], 0
    %s16 = scalar_lea.sflag [#allocation9], 1
    %17 = vsyncpa %s16, 0
    %18 = vsyncpa [#allocation4], 0
    %s19 = scalar_lea.sflag [#allocation4], 1
    %20 = vsyncpa %s19, 0
    loop: start=0, step=1, limit=14
    $region2: #{llama_attention.3} parent=1 // loop_pre_header
      _
    $region3: #{llama_attention.3} parent=1 // loop_header
      %s22 = sphi 0, %s26
      %p23 = scmp.ge.s32.totalorder %s22, 14
      %s29 = sphi 0, %s41
      %s30 = sphi 0, %s37
      %s31 = sphi 0, %s29
      %s32 = sphi 0, %s30
      %s33 = sphi 0, %s31
      %s34 = sphi 0, %s32
      %s44 = sphi 0, %s46
      %s47 = sphi 0, %s44
      %s48 = sphi 0, %s47
      %s64 = sphi 0, %s48
      %s70 = sphi 0, %s72
      %s73 = sphi 0, %s70
      %s74 = sphi 0, %s73
      %s90 = sphi 0, %s74
      %s96 = sphi 0, %s98
      %s99 = sphi 0, %s96
      %s100 = sphi 0, %s99
      %s116 = sphi 0, %s100
      %s122 = sphi 0, %s124
      %s125 = sphi 0, %s122
      %s126 = sphi 0, %s125
      %s142 = sphi 0, %s126
      %s150 = sphi 0, %s152
      %s153 = sphi 0, %s150
      %s154 = sphi 0, %s153
      %s170 = sphi 0, %s154
    $region4: #{llama_attention.3} parent=1 // loop_header_branch
      %25 = sbr.rel (%p23) target = $region8
    $region5: #{llama_attention.3} parent=1 // loop_body
      %s27 = ssub.s32 %s22, 1
      %s28 = ssub.s32 %s22, 2
      %s35 = sadd.s32 1, %s30
      %p36 = scmp.ge.s32.totalorder %s35, 6
      %s37 = scalar_select %p36, 0, %s35
      %s38 = sadd.s32 1, %s29
      %s39 = scalar_select %p36, %s38, %s29
      %p40 = scmp.ge.s32.totalorder %s39, 2
      %s41 = scalar_select %p40, 0, %s39
      %s42 = ssub.s32 %s29, %s41
      %p43 = scmp.eq.s32.totalorder %s42, 0
      %s45 = sadd.s32 %s44, 1
      %s46 = scalar_select %p43, %s44, %s45
      %p49 = pneg %p43
      %p50 = scmp.eq.s32.totalorder %s22, 11
      %p51 = por %p49, %p50
      %p52 = scmp.ne.s32.totalorder %s44, %s47
      %p53 = scmp.eq.s32.totalorder %s22, 0
      %p54 = por %p52, %p53
      %p55 = scmp.ne.s32.totalorder %s44, %s47
      %p56 = scmp.eq.s32.totalorder %s27, 11
      %p57 = por %p55, %p56
      %p58 = scmp.ne.s32.totalorder %s47, %s48
      %p59 = scmp.eq.s32.totalorder %s27, 0
      %p60 = por %p58, %p59
      %p61 = scmp.ne.s32.totalorder %s47, %s48
      %p62 = scmp.eq.s32.totalorder %s28, 11
      %p63 = por %p61, %p62
      %p65 = scmp.ne.s32.totalorder %s48, %s64
      %p66 = scmp.eq.s32.totalorder %s28, 0
      %p67 = por %p65, %p66
      %s68 = ssub.s32 %s30, %s37
      %p69 = scmp.eq.s32.totalorder %s68, 0
      %s71 = sadd.s32 %s70, 1
      %s72 = scalar_select %p69, %s70, %s71
      %p75 = pneg %p69
      %p76 = scmp.eq.s32.totalorder %s22, 11
      %p77 = por %p75, %p76
      %p78 = scmp.ne.s32.totalorder %s70, %s73
      %p79 = scmp.eq.s32.totalorder %s22, 0
      %p80 = por %p78, %p79
      %p81 = scmp.ne.s32.totalorder %s70, %s73
      %p82 = scmp.eq.s32.totalorder %s27, 11
      %p83 = por %p81, %p82
      %p84 = scmp.ne.s32.totalorder %s73, %s74
      %p85 = scmp.eq.s32.totalorder %s27, 0
      %p86 = por %p84, %p85
      %p87 = scmp.ne.s32.totalorder %s73, %s74
      %p88 = scmp.eq.s32.totalorder %s28, 11
      %p89 = por %p87, %p88
      %p91 = scmp.ne.s32.totalorder %s74, %s90
      %p92 = scmp.eq.s32.totalorder %s28, 0
      %p93 = por %p91, %p92
      %s94 = ssub.s32 %s29, %s41
      %p95 = scmp.eq.s32.totalorder %s94, 0
      %s97 = sadd.s32 %s96, 1
      %s98 = scalar_select %p95, %s96, %s97
      %p101 = pneg %p95
      %p102 = scmp.eq.s32.totalorder %s22, 11
      %p103 = por %p101, %p102
      %p104 = scmp.ne.s32.totalorder %s96, %s99
      %p105 = scmp.eq.s32.totalorder %s22, 0
      %p106 = por %p104, %p105
      %p107 = scmp.ne.s32.totalorder %s96, %s99
      %p108 = scmp.eq.s32.totalorder %s27, 11
      %p109 = por %p107, %p108
      %p110 = scmp.ne.s32.totalorder %s99, %s100
      %p111 = scmp.eq.s32.totalorder %s27, 0
      %p112 = por %p110, %p111
      %p113 = scmp.ne.s32.totalorder %s99, %s100
      %p114 = scmp.eq.s32.totalorder %s28, 11
      %p115 = por %p113, %p114
      %p117 = scmp.ne.s32.totalorder %s100, %s116
      %p118 = scmp.eq.s32.totalorder %s28, 0
      %p119 = por %p117, %p118
      %s120 = ssub.s32 %s29, %s41
      %p121 = scmp.eq.s32.totalorder %s120, 0
      %s123 = sadd.s32 %s122, 1
      %s124 = scalar_select %p121, %s122, %s123
      %p127 = pneg %p121
      %p128 = scmp.eq.s32.totalorder %s22, 11
      %p129 = por %p127, %p128
      %p130 = scmp.ne.s32.totalorder %s122, %s125
      %p131 = scmp.eq.s32.totalorder %s22, 0
      %p132 = por %p130, %p131
      %p133 = scmp.ne.s32.totalorder %s122, %s125
      %p134 = scmp.eq.s32.totalorder %s27, 11
      %p135 = por %p133, %p134
      %p136 = scmp.ne.s32.totalorder %s125, %s126
      %p137 = scmp.eq.s32.totalorder %s27, 0
      %p138 = por %p136, %p137
      %p139 = scmp.ne.s32.totalorder %s125, %s126
      %p140 = scmp.eq.s32.totalorder %s28, 11
      %p141 = por %p139, %p140
      %p143 = scmp.ne.s32.totalorder %s126, %s142
      %p144 = scmp.eq.s32.totalorder %s28, 0
      %p145 = por %p143, %p144
      %s146 = ssub.s32 %s29, %s41
      %s147 = ssub.s32 %s30, %s37
      %s148 = sor.u32 %s146, %s147
      %p149 = scmp.eq.s32.totalorder %s148, 0
      %s151 = sadd.s32 %s150, 1
      %s152 = scalar_select %p149, %s150, %s151
      %p155 = pneg %p149
      %p156 = scmp.eq.s32.totalorder %s22, 11
      %p157 = por %p155, %p156
      %p158 = scmp.ne.s32.totalorder %s150, %s153
      %p159 = scmp.eq.s32.totalorder %s22, 0
      %p160 = por %p158, %p159
      %p161 = scmp.ne.s32.totalorder %s150, %s153
      %p162 = scmp.eq.s32.totalorder %s27, 11
      %p163 = por %p161, %p162
      %p164 = scmp.ne.s32.totalorder %s153, %s154
      %p165 = scmp.eq.s32.totalorder %s27, 0
      %p166 = por %p164, %p165
      %p167 = scmp.ne.s32.totalorder %s153, %s154
      %p168 = scmp.eq.s32.totalorder %s28, 11
      %p169 = por %p167, %p168
      %p171 = scmp.ne.s32.totalorder %s154, %s170
      %p172 = scmp.eq.s32.totalorder %s28, 0
      %p173 = por %p171, %p172
      %p174 = scmp.le.s32.totalorder 1, %s22
      %p175 = scmp.lt.s32.totalorder %s22, 13
      %p176 = pnand %p174, %p175
      %p177 = pneg %p176
      // Predicated region
      $region9: #{llama_attention.3} parent=5 // pred_check
        _
      $region10: #{llama_attention.3} parent=5 // pred_check_branch
        %179 = sbr.rel (%p176) target = $region12
      $region11: #{llama_attention.3} parent=5 // pred_region
        %s180 = ssub.s32 %s22, 1
      $region12: #{llama_attention.3} parent=5 // pred_fallthru
        _
      %p181 = scmp.lt.s32.totalorder %s22, 12
      // Predicated region
      $region13: #{llama_attention.3} parent=5 // pred_check
        %p182 = pneg %p181
      $region14: #{llama_attention.3} parent=5 // pred_check_branch
        %184 = sbr.rel (%p182) target = $region16
      $region15: #{llama_attention.3} parent=5 // pred_region
        // Predicated region
        $region17: #{llama_attention.3} parent=15 // pred_check
          %p185 = pneg %p54
        $region18: #{llama_attention.3} parent=15 // pred_check_branch
          %187 = sbr.rel (%p185) target = $region20
        $region19: #{llama_attention.3} parent=15 // pred_region
          %s188 = sand.u32 %s44, 1
          %s189 = scalar_lea.sflag [#allocation3], %s188
          %s190 = sand.u32 %s44, 1
          %s191 = smul.addr %s190, 256
          %s192 = scalar_lea.vmem [#allocation2], %s191
          %s193 = smul.u32 32, %s29
          %s195 = ssub.s32 4096, 4096
          %196 = vsyncadd %s189, %s195
          %s197 = smul.addr %s193, 2
          %s198 = smul.addr %s197, 64
          %s199 = scalar_lea.hbm %s0, %s198
          %s200 = sshll.u32 %s192, 4
          %s201 = int_to_ptr.vmem [resolvable:$true] %s200
          %206 = dma.hbm_to_vmem [thread:$0]  %s199, 4096, %s201, %s189, 128, 128, 8
        $region20: #{llama_attention.3} parent=15 // pred_fallthru
          _
        // Predicated region
        $region21: #{llama_attention.3} parent=15 // pred_check
          %p207 = pneg %p80
        $region22: #{llama_attention.3} parent=15 // pred_check_branch
          %209 = sbr.rel (%p207) target = $region24
        $region23: #{llama_attention.3} parent=15 // pred_region
          %s210 = sand.u32 %s22, 1
          %s211 = scalar_lea.sflag [#allocation6], %s210
          %s212 = sand.u32 %s70, 1
          %s213 = smul.addr %s212, 128
          %s214 = scalar_lea.vmem [#allocation5], %s213
          %s216 = ssub.s32 2048, 2048
          %217 = vsyncadd %s211, %s216
          %s218 = smul.addr %s30, 64
          %s219 = scalar_lea.hbm %s1, %s218
          %s220 = sshll.u32 %s214, 4
          %s221 = int_to_ptr.vmem [resolvable:$true] %s220
          %226 = dma.hbm_to_vmem [thread:$0]  %s219, 2048, %s221, %s211, 384, 64, 4
        $region24: #{llama_attention.3} parent=15 // pred_fallthru
          _
        // Predicated region
        $region25: #{llama_attention.3} parent=15 // pred_check
          %p227 = pneg %p106
        $region26: #{llama_attention.3} parent=15 // pred_check_branch
          %229 = sbr.rel (%p227) target = $region28
        $region27: #{llama_attention.3} parent=15 // pred_region
          %s230 = sand.u32 %s22, 1
          %s231 = scalar_lea.sflag [#allocation6], %s230
          %s232 = sand.u32 %s96, 1
          %s233 = smul.addr %s232, 256
          %s234 = scalar_lea.vmem [#allocation7], %s233
          %s235 = smul.u32 32, %s29
          %s237 = ssub.s32 4096, 4096
          %238 = vsyncadd %s231, %s237
          %s239 = smul.addr %s235, 128
          %s240 = scalar_lea.hbm %s2, %s239
          %s241 = sshll.u32 %s234, 4
          %s242 = int_to_ptr.vmem [resolvable:$true] %s241
          %247 = dma.hbm_to_vmem [thread:$0]  %s240, 4096, %s242, %s231, 128, 128, 8
        $region28: #{llama_attention.3} parent=15 // pred_fallthru
          _
        // Predicated region
        $region29: #{llama_attention.3} parent=15 // pred_check
          %p248 = pneg %p132
        $region30: #{llama_attention.3} parent=15 // pred_check_branch
          %250 = sbr.rel (%p248) target = $region32
        $region31: #{llama_attention.3} parent=15 // pred_region
          %s251 = sand.u32 %s122, 1
          %s252 = scalar_lea.sflag [#allocation9], %s251
          %s253 = sand.u32 %s122, 1
          %s254 = smul.addr %s253, 256
          %s255 = scalar_lea.vmem [#allocation8], %s254
          %s256 = smul.u32 32, %s29
          %s258 = ssub.s32 4096, 4096
          %259 = vsyncadd %s252, %s258
          %s260 = smul.addr %s256, 128
          %s261 = scalar_lea.hbm %s3, %s260
          %s262 = sshll.u32 %s255, 4
          %s263 = int_to_ptr.vmem [resolvable:$true] %s262
          %268 = dma.hbm_to_vmem [thread:$0]  %s261, 4096, %s263, %s252, 128, 128, 8
        $region32: #{llama_attention.3} parent=15 // pred_fallthru
          _
      $region16: #{llama_attention.3} parent=5 // pred_fallthru
        _
      %p269 = scmp.le.s32.totalorder 1, %s22
      %p270 = scmp.lt.s32.totalorder %s22, 13
      %p271 = pnand %p269, %p270
      %p272 = pneg %p271
      // Predicated region
      $region33: #{llama_attention.3} parent=5 // pred_check
        _
      $region34: #{llama_attention.3} parent=5 // pred_check_branch
        %274 = sbr.rel (%p271) target = $region36
      $region35: #{llama_attention.3} parent=5 // pred_region
        %s275 = ssub.s32 %s22, 1
        %s276 = sand.u32 %s47, 1
        %s277 = scalar_lea.sflag [#allocation3], %s276
        %s278 = sand.u32 %s47, 1
        %s279 = smul.addr %s278, 256
        %s280 = scalar_lea.vmem [#allocation2], %s279
        // Predicated region
        $region37: #{llama_attention.3} parent=35 // pred_check
          %p281 = pneg %p60
        $region38: #{llama_attention.3} parent=35 // pred_check_branch
          %283 = sbr.rel (%p281) target = $region40
        $region39: #{llama_attention.3} parent=35 // pred_region
          %284 = dma.done %s277, 4096
        $region40: #{llama_attention.3} parent=35 // pred_fallthru
          _
        %s285 = sand.u32 %s27, 1
        %s286 = scalar_lea.sflag [#allocation6], %s285
        %s287 = sand.u32 %s73, 1
        %s288 = smul.addr %s287, 128
        %s289 = scalar_lea.vmem [#allocation5], %s288
        // Predicated region
        $region41: #{llama_attention.3} parent=35 // pred_check
          %p290 = pneg %p86
        $region42: #{llama_attention.3} parent=35 // pred_check_branch
          %292 = sbr.rel (%p290) target = $region44
        $region43: #{llama_attention.3} parent=35 // pred_region
          %293 = dma.done %s286, 2048
        $region44: #{llama_attention.3} parent=35 // pred_fallthru
          _
        %s294 = sand.u32 %s27, 1
        %s295 = scalar_lea.sflag [#allocation6], %s294
        %s296 = sand.u32 %s99, 1
        %s297 = smul.addr %s296, 256
        %s298 = scalar_lea.vmem [#allocation7], %s297
        // Predicated region
        $region45: #{llama_attention.3} parent=35 // pred_check
          %p299 = pneg %p112
        $region46: #{llama_attention.3} parent=35 // pred_check_branch
          %301 = sbr.rel (%p299) target = $region48
        $region47: #{llama_attention.3} parent=35 // pred_region
          %302 = dma.done %s295, 4096
        $region48: #{llama_attention.3} parent=35 // pred_fallthru
          _
        %s303 = sand.u32 %s125, 1
        %s304 = scalar_lea.sflag [#allocation9], %s303
        %s305 = sand.u32 %s125, 1
        %s306 = smul.addr %s305, 256
        %s307 = scalar_lea.vmem [#allocation8], %s306
        // Predicated region
        $region49: #{llama_attention.3} parent=35 // pred_check
          %p308 = pneg %p138
        $region50: #{llama_attention.3} parent=35 // pred_check_branch
          %310 = sbr.rel (%p308) target = $region52
        $region51: #{llama_attention.3} parent=35 // pred_region
          %311 = dma.done %s304, 4096
        $region52: #{llama_attention.3} parent=35 // pred_fallthru
          _
        %s312 = sand.u32 %s47, 1
        %s313 = scalar_lea.sflag [#allocation3], %s312
        %s314 = sand.u32 %s47, 1
        %s315 = smul.addr %s314, 256
        %s316 = scalar_lea.vmem [#allocation2], %s315
        %p317 = pneg %p60
        %p318 = pneg %p57
        %s319 = sand.u32 %s27, 1
        %s320 = scalar_lea.sflag [#allocation6], %s319
        %s321 = sand.u32 %s73, 1
        %s322 = smul.addr %s321, 128
        %s323 = scalar_lea.vmem [#allocation5], %s322
        %p324 = pneg %p86
        %p325 = pneg %p83
        %s326 = sand.u32 %s27, 1
        %s327 = scalar_lea.sflag [#allocation6], %s326
        %s328 = sand.u32 %s99, 1
        %s329 = smul.addr %s328, 256
        %s330 = scalar_lea.vmem [#allocation7], %s329
        %p331 = pneg %p112
        %p332 = pneg %p109
        %s333 = sand.u32 %s125, 1
        %s334 = scalar_lea.sflag [#allocation9], %s333
        %s335 = sand.u32 %s125, 1
        %s336 = smul.addr %s335, 256
        %s337 = scalar_lea.vmem [#allocation8], %s336
        %p338 = pneg %p138
        %p339 = pneg %p135
        %p340 = pneg %p166
        %p341 = pneg %p163
        %s342 = sand.u32 %s153, 1
        %s343 = scalar_lea.sflag [#allocation4], %s342
        %s344 = sand.u32 %s153, 1
        %s345 = smul.addr %s344, 128
        %s346 = scalar_lea.vmem [#allocation10], %s345
        %s347 = smul.u32 32, %s31
        %s348 = smul.u32 32, %s31
        %s349 = smul.u32 32, %s31
        %s350 = smul.u32 32, %s31
        %v352 = vld [vmem:[%s280] sm:$0xff]
        %v353 = vld [vmem:[%s280 + $0x8] sm:$0xff]
        %v354 = vld [vmem:[%s280 + $0x10] sm:$0xff]
        %v355 = vld [vmem:[%s280 + $0x18] sm:$0xff]
        %v356 = vld [vmem:[%s280 + $0x20] sm:$0xff]
        %v357 = vld [vmem:[%s280 + $0x28] sm:$0xff]
        %v358 = vld [vmem:[%s280 + $0x30] sm:$0xff]
        %v359 = vld [vmem:[%s280 + $0x38] sm:$0xff]
        %v360 = vld [vmem:[%s280 + $0x40] sm:$0xff]
        %v361 = vld [vmem:[%s280 + $0x48] sm:$0xff]
        %v362 = vld [vmem:[%s280 + $0x50] sm:$0xff]
        %v363 = vld [vmem:[%s280 + $0x58] sm:$0xff]
        %v364 = vld [vmem:[%s280 + $0x60] sm:$0xff]
        %v365 = vld [vmem:[%s280 + $0x68] sm:$0xff]
        %v366 = vld [vmem:[%s280 + $0x70] sm:$0xff]
        %v367 = vld [vmem:[%s280 + $0x78] sm:$0xff]
        %v368 = vld [vmem:[%s280 + $0x80] sm:$0xff]
        %v369 = vld [vmem:[%s280 + $0x88] sm:$0xff]
        %v370 = vld [vmem:[%s280 + $0x90] sm:$0xff]
        %v371 = vld [vmem:[%s280 + $0x98] sm:$0xff]
        %v372 = vld [vmem:[%s280 + $0xa0] sm:$0xff]
        %v373 = vld [vmem:[%s280 + $0xa8] sm:$0xff]
        %v374 = vld [vmem:[%s280 + $0xb0] sm:$0xff]
        %v375 = vld [vmem:[%s280 + $0xb8] sm:$0xff]
        %v376 = vld [vmem:[%s280 + $0xc0] sm:$0xff]
        %v377 = vld [vmem:[%s280 + $0xc8] sm:$0xff]
        %v378 = vld [vmem:[%s280 + $0xd0] sm:$0xff]
        %v379 = vld [vmem:[%s280 + $0xd8] sm:$0xff]
        %v380 = vld [vmem:[%s280 + $0xe0] sm:$0xff]
        %v381 = vld [vmem:[%s280 + $0xe8] sm:$0xff]
        %v382 = vld [vmem:[%s280 + $0xf0] sm:$0xff]
        %v383 = vld [vmem:[%s280 + $0xf8] sm:$0xff]
        %v384 = vld [vmem:[%s289] sm:$0xf]
        %v385 = vld [vmem:[%s289 + $0x4] sm:$0xf]
        %v386 = vld [vmem:[%s289 + $0x8] sm:$0xf]
        %v387 = vld [vmem:[%s289 + $0xc] sm:$0xf]
        %v388 = vld [vmem:[%s289 + $0x10] sm:$0xf]
        %v389 = vld [vmem:[%s289 + $0x14] sm:$0xf]
        %v390 = vld [vmem:[%s289 + $0x18] sm:$0xf]
        %v391 = vld [vmem:[%s289 + $0x1c] sm:$0xf]
        %v392 = vld [vmem:[%s289 + $0x20] sm:$0xf]
        %v393 = vld [vmem:[%s289 + $0x24] sm:$0xf]
        %v394 = vld [vmem:[%s289 + $0x28] sm:$0xf]
        %v395 = vld [vmem:[%s289 + $0x2c] sm:$0xf]
        %v396 = vld [vmem:[%s289 + $0x30] sm:$0xf]
        %v397 = vld [vmem:[%s289 + $0x34] sm:$0xf]
        %v398 = vld [vmem:[%s289 + $0x38] sm:$0xf]
        %v399 = vld [vmem:[%s289 + $0x3c] sm:$0xf]
        %v400 = vld [vmem:[%s289 + $0x40] sm:$0xf]
        %v401 = vld [vmem:[%s289 + $0x44] sm:$0xf]
        %v402 = vld [vmem:[%s289 + $0x48] sm:$0xf]
        %v403 = vld [vmem:[%s289 + $0x4c] sm:$0xf]
        %v404 = vld [vmem:[%s289 + $0x50] sm:$0xf]
        %v405 = vld [vmem:[%s289 + $0x54] sm:$0xf]
        %v406 = vld [vmem:[%s289 + $0x58] sm:$0xf]
        %v407 = vld [vmem:[%s289 + $0x5c] sm:$0xf]
        %v408 = vld [vmem:[%s289 + $0x60] sm:$0xf]
        %v409 = vld [vmem:[%s289 + $0x64] sm:$0xf]
        %v410 = vld [vmem:[%s289 + $0x68] sm:$0xf]
        %v411 = vld [vmem:[%s289 + $0x6c] sm:$0xf]
        %v412 = vld [vmem:[%s289 + $0x70] sm:$0xf]
        %v413 = vld [vmem:[%s289 + $0x74] sm:$0xf]
        %v414 = vld [vmem:[%s289 + $0x78] sm:$0xf]
        %v415 = vld [vmem:[%s289 + $0x7c] sm:$0xf]
        %v448 = vunpack.c.l.b16 %v352
        %v449 = vunpack.c.h.b16 %v352
        %v450 = vunpack.c.l.b16 %v353
        %v451 = vunpack.c.h.b16 %v353
        %v452 = vunpack.c.l.b16 %v354
        %v453 = vunpack.c.h.b16 %v354
        %v454 = vunpack.c.l.b16 %v355
        %v455 = vunpack.c.h.b16 %v355
        %v456 = vunpack.c.l.b16 %v356
        %v457 = vunpack.c.h.b16 %v356
        %v458 = vunpack.c.l.b16 %v357
        %v459 = vunpack.c.h.b16 %v357
        %v460 = vunpack.c.l.b16 %v358
        %v461 = vunpack.c.h.b16 %v358
        %v462 = vunpack.c.l.b16 %v359
        %v463 = vunpack.c.h.b16 %v359
        %v464 = vunpack.c.l.b16 %v360
        %v465 = vunpack.c.h.b16 %v360
        %v466 = vunpack.c.l.b16 %v361
        %v467 = vunpack.c.h.b16 %v361
        %v468 = vunpack.c.l.b16 %v362
        %v469 = vunpack.c.h.b16 %v362
        %v470 = vunpack.c.l.b16 %v363
        %v471 = vunpack.c.h.b16 %v363
        %v472 = vunpack.c.l.b16 %v364
        %v473 = vunpack.c.h.b16 %v364
        %v474 = vunpack.c.l.b16 %v365
        %v475 = vunpack.c.h.b16 %v365
        %v476 = vunpack.c.l.b16 %v366
        %v477 = vunpack.c.h.b16 %v366
        %v478 = vunpack.c.l.b16 %v367
        %v479 = vunpack.c.h.b16 %v367
        %v480 = vunpack.c.l.b16 %v368
        %v481 = vunpack.c.h.b16 %v368
        %v482 = vunpack.c.l.b16 %v369
        %v483 = vunpack.c.h.b16 %v369
        %v484 = vunpack.c.l.b16 %v370
        %v485 = vunpack.c.h.b16 %v370
        %v486 = vunpack.c.l.b16 %v371
        %v487 = vunpack.c.h.b16 %v371
        %v488 = vunpack.c.l.b16 %v372
        %v489 = vunpack.c.h.b16 %v372
        %v490 = vunpack.c.l.b16 %v373
        %v491 = vunpack.c.h.b16 %v373
        %v492 = vunpack.c.l.b16 %v374
        %v493 = vunpack.c.h.b16 %v374
        %v494 = vunpack.c.l.b16 %v375
        %v495 = vunpack.c.h.b16 %v375
        %v496 = vunpack.c.l.b16 %v376
        %v497 = vunpack.c.h.b16 %v376
        %v498 = vunpack.c.l.b16 %v377
        %v499 = vunpack.c.h.b16 %v377
        %v500 = vunpack.c.l.b16 %v378
        %v501 = vunpack.c.h.b16 %v378
        %v502 = vunpack.c.l.b16 %v379
        %v503 = vunpack.c.h.b16 %v379
        %v504 = vunpack.c.l.b16 %v380
        %v505 = vunpack.c.h.b16 %v380
        %v506 = vunpack.c.l.b16 %v381
        %v507 = vunpack.c.h.b16 %v381
        %v508 = vunpack.c.l.b16 %v382
        %v509 = vunpack.c.h.b16 %v382
        %v510 = vunpack.c.l.b16 %v383
        %v511 = vunpack.c.h.b16 %v383
        %v512 = vpack.c.b16 %v450, %v448
        %v513 = vpack.c.b16 %v451, %v449
        %v514 = vpack.c.b16 %v454, %v452
        %v515 = vpack.c.b16 %v455, %v453
        %v516 = vpack.c.b16 %v458, %v456
        %v517 = vpack.c.b16 %v459, %v457
        %v518 = vpack.c.b16 %v462, %v460
        %v519 = vpack.c.b16 %v463, %v461
        %v520 = vpack.c.b16 %v466, %v464
        %v521 = vpack.c.b16 %v467, %v465
        %v522 = vpack.c.b16 %v470, %v468
        %v523 = vpack.c.b16 %v471, %v469
        %v524 = vpack.c.b16 %v474, %v472
        %v525 = vpack.c.b16 %v475, %v473
        %v526 = vpack.c.b16 %v478, %v476
        %v527 = vpack.c.b16 %v479, %v477
        %v528 = vpack.c.b16 %v482, %v480
        %v529 = vpack.c.b16 %v483, %v481
        %v530 = vpack.c.b16 %v486, %v484
        %v531 = vpack.c.b16 %v487, %v485
        %v532 = vpack.c.b16 %v490, %v488
        %v533 = vpack.c.b16 %v491, %v489
        %v534 = vpack.c.b16 %v494, %v492
        %v535 = vpack.c.b16 %v495, %v493
        %v536 = vpack.c.b16 %v498, %v496
        %v537 = vpack.c.b16 %v499, %v497
        %v538 = vpack.c.b16 %v502, %v500
        %v539 = vpack.c.b16 %v503, %v501
        %v540 = vpack.c.b16 %v506, %v504
        %v541 = vpack.c.b16 %v507, %v505
        %v542 = vpack.c.b16 %v510, %v508
        %v543 = vpack.c.b16 %v511, %v509
        %v608 = vunpack.c.l.b16 %v384
        %v609 = vunpack.c.l.b16 %v385
        %v610 = vunpack.c.l.b16 %v386
        %v611 = vunpack.c.l.b16 %v387
        %v612 = vunpack.c.l.b16 %v388
        %v613 = vunpack.c.l.b16 %v389
        %v614 = vunpack.c.l.b16 %v390
        %v615 = vunpack.c.l.b16 %v391
        %v616 = vunpack.c.l.b16 %v392
        %v617 = vunpack.c.l.b16 %v393
        %v618 = vunpack.c.l.b16 %v394
        %v619 = vunpack.c.l.b16 %v395
        %v620 = vunpack.c.l.b16 %v396
        %v621 = vunpack.c.l.b16 %v397
        %v622 = vunpack.c.l.b16 %v398
        %v623 = vunpack.c.l.b16 %v399
        %v624 = vunpack.c.l.b16 %v400
        %v625 = vunpack.c.l.b16 %v401
        %v626 = vunpack.c.l.b16 %v402
        %v627 = vunpack.c.l.b16 %v403
        %v628 = vunpack.c.l.b16 %v404
        %v629 = vunpack.c.l.b16 %v405
        %v630 = vunpack.c.l.b16 %v406
        %v631 = vunpack.c.l.b16 %v407
        %v632 = vunpack.c.l.b16 %v408
        %v633 = vunpack.c.l.b16 %v409
        %v634 = vunpack.c.l.b16 %v410
        %v635 = vunpack.c.l.b16 %v411
        %v636 = vunpack.c.l.b16 %v412
        %v637 = vunpack.c.l.b16 %v413
        %v638 = vunpack.c.l.b16 %v414
        %v639 = vunpack.c.l.b16 %v415
        %v640 = vpack.c.b16 %v609, %v608
        %v641 = vpack.c.b16 %v611, %v610
        %v642 = vpack.c.b16 %v613, %v612
        %v643 = vpack.c.b16 %v615, %v614
        %v644 = vpack.c.b16 %v617, %v616
        %v645 = vpack.c.b16 %v619, %v618
        %v646 = vpack.c.b16 %v621, %v620
        %v647 = vpack.c.b16 %v623, %v622
        %v648 = vpack.c.b16 %v625, %v624
        %v649 = vpack.c.b16 %v627, %v626
        %v650 = vpack.c.b16 %v629, %v628
        %v651 = vpack.c.b16 %v631, %v630
        %v652 = vpack.c.b16 %v633, %v632
        %v653 = vpack.c.b16 %v635, %v634
        %v654 = vpack.c.b16 %v637, %v636
        %v655 = vpack.c.b16 %v639, %v638
        %672 = vmatprep.subr.bf16.mxu0 0
        %673 = vmatpush1.bf16.msra.mxu0 %v640
        %674 = vmatprep.subr.bf16.mxu0 0
        %675 = vmatpush1.bf16.msra.mxu0 %v641
        %676 = vmatprep.subr.bf16.mxu0 0
        %677 = vmatpush1.bf16.msra.mxu0 %v642
        %678 = vmatprep.subr.bf16.mxu0 0
        %679 = vmatpush1.bf16.msra.mxu0 %v643
        %680 = vmatprep.subr.bf16.mxu0 0
        %681 = vmatpush1.bf16.msra.mxu0 %v644
        %682 = vmatprep.subr.bf16.mxu0 0
        %683 = vmatpush1.bf16.msra.mxu0 %v645
        %684 = vmatprep.subr.bf16.mxu0 0
        %685 = vmatpush1.bf16.msra.mxu0 %v646
        %686 = vmatprep.subr.bf16.mxu0 0
        %687 = vmatpush1.bf16.msra.mxu0 %v647
        %688 = vmatprep.subr.bf16.mxu0 0
        %689 = vmatpush1.bf16.msra.mxu0 %v648
        %690 = vmatprep.subr.bf16.mxu0 0
        %691 = vmatpush1.bf16.msra.mxu0 %v649
        %692 = vmatprep.subr.bf16.mxu0 0
        %693 = vmatpush1.bf16.msra.mxu0 %v650
        %694 = vmatprep.subr.bf16.mxu0 0
        %695 = vmatpush1.bf16.msra.mxu0 %v651
        %696 = vmatprep.subr.bf16.mxu0 0
        %697 = vmatpush1.bf16.msra.mxu0 %v652
        %698 = vmatprep.subr.bf16.mxu0 0
        %699 = vmatpush1.bf16.msra.mxu0 %v653
        %700 = vmatprep.subr.bf16.mxu0 0
        %701 = vmatpush1.bf16.msra.mxu0 %v654
        %702 = vmatprep.subr.bf16.mxu0 0
        %703 = vmatpush1.bf16.msra.mxu0 %v655
        %704 = vmatprep.mubr.bf16.mxu0 %v513
        %705 = vmatmul.mubr.bf16.gmra.mrb[0].mxu0 %v512
        %v706 = vpop.f32.mrb[0].mxu0
        %v707 = vadd.f32 0.0, %v706
        %v708 = vpop.f32.mrb[0].mxu0
        %v709 = vpop.f32.mrb[0].mxu0
        %v710 = vadd.f32 0.0, %v709
        %v711 = vpop.f32.mrb[0].mxu0
        %712 = vmatprep.mubr.bf16.mxu0 %v515
        %713 = vmatmul.mubr.bf16.gmra.mrb[0].mxu0 %v514
        %v714 = vpop.f32.mrb[0].mxu0
        %v715 = vadd.f32 0.0, %v714
        %v716 = vpop.f32.mrb[0].mxu0
        %v717 = vpop.f32.mrb[0].mxu0
        %v718 = vadd.f32 0.0, %v717
        %v719 = vpop.f32.mrb[0].mxu0
        %720 = vmatprep.mubr.bf16.mxu0 %v517
        %721 = vmatmul.mubr.bf16.gmra.mrb[0].mxu0 %v516
        %v722 = vpop.f32.mrb[0].mxu0
        %v723 = vadd.f32 0.0, %v722
        %v724 = vpop.f32.mrb[0].mxu0
        %v725 = vpop.f32.mrb[0].mxu0
        %v726 = vadd.f32 0.0, %v725
        %v727 = vpop.f32.mrb[0].mxu0
        %728 = vmatprep.mubr.bf16.mxu0 %v519
        %729 = vmatmul.mubr.bf16.gmra.mrb[0].mxu0 %v518
        %v730 = vpop.f32.mrb[0].mxu0
        %v731 = vadd.f32 0.0, %v730
        %v732 = vpop.f32.mrb[0].mxu0
        %v733 = vpop.f32.mrb[0].mxu0
        %v734 = vadd.f32 0.0, %v733
        %v735 = vpop.f32.mrb[0].mxu0
        %736 = vmatprep.mubr.bf16.mxu0 %v521
        %737 = vmatmul.mubr.bf16.gmra.mrb[0].mxu0 %v520
        %v738 = vpop.f32.mrb[0].mxu0
        %v739 = vadd.f32 0.0, %v738
        %v740 = vpop.f32.mrb[0].mxu0
        %v741 = vpop.f32.mrb[0].mxu0
        %v742 = vadd.f32 0.0, %v741
        %v743 = vpop.f32.mrb[0].mxu0
        %744 = vmatprep.mubr.bf16.mxu0 %v523
        %745 = vmatmul.mubr.bf16.gmra.mrb[0].mxu0 %v522
        %v746 = vpop.f32.mrb[0].mxu0
        %v747 = vadd.f32 0.0, %v746
        %v748 = vpop.f32.mrb[0].mxu0
        %v749 = vpop.f32.mrb[0].mxu0
        %v750 = vadd.f32 0.0, %v749
        %v751 = vpop.f32.mrb[0].mxu0
        %752 = vmatprep.mubr.bf16.mxu0 %v525
        %753 = vmatmul.mubr.bf16.gmra.mrb[0].mxu0 %v524
        %v754 = vpop.f32.mrb[0].mxu0
        %v755 = vadd.f32 0.0, %v754
        %v756 = vpop.f32.mrb[0].mxu0
        %v757 = vpop.f32.mrb[0].mxu0
        %v758 = vadd.f32 0.0, %v757
        %v759 = vpop.f32.mrb[0].mxu0
        %760 = vmatprep.mubr.bf16.mxu0 %v527
        %761 = vmatmul.mubr.bf16.gmra.mrb[0].mxu0 %v526
        %v762 = vpop.f32.mrb[0].mxu0
        %v763 = vadd.f32 0.0, %v762
        %v764 = vpop.f32.mrb[0].mxu0
        %v765 = vpop.f32.mrb[0].mxu0
        %v766 = vadd.f32 0.0, %v765
        %v767 = vpop.f32.mrb[0].mxu0
        %768 = vmatprep.mubr.bf16.mxu0 %v529
        %769 = vmatmul.mubr.bf16.gmra.mrb[0].mxu0 %v528
        %v770 = vpop.f32.mrb[0].mxu0
        %v771 = vadd.f32 0.0, %v770
        %v772 = vpop.f32.mrb[0].mxu0
        %v773 = vpop.f32.mrb[0].mxu0
        %v774 = vadd.f32 0.0, %v773
        %v775 = vpop.f32.mrb[0].mxu0
        %776 = vmatprep.mubr.bf16.mxu0 %v531
        %777 = vmatmul.mubr.bf16.gmra.mrb[0].mxu0 %v530
        %v778 = vpop.f32.mrb[0].mxu0
        %v779 = vadd.f32 0.0, %v778
        %v780 = vpop.f32.mrb[0].mxu0
        %v781 = vpop.f32.mrb[0].mxu0
        %v782 = vadd.f32 0.0, %v781
        %v783 = vpop.f32.mrb[0].mxu0
        %784 = vmatprep.mubr.bf16.mxu0 %v533
        %785 = vmatmul.mubr.bf16.gmra.mrb[0].mxu0 %v532
        %v786 = vpop.f32.mrb[0].mxu0
        %v787 = vadd.f32 0.0, %v786
        %v788 = vpop.f32.mrb[0].mxu0
        %v789 = vpop.f32.mrb[0].mxu0
        %v790 = vadd.f32 0.0, %v789
        %v791 = vpop.f32.mrb[0].mxu0
        %792 = vmatprep.mubr.bf16.mxu0 %v535
        %793 = vmatmul.mubr.bf16.gmra.mrb[0].mxu0 %v534
        %v794 = vpop.f32.mrb[0].mxu0
        %v795 = vadd.f32 0.0, %v794
        %v796 = vpop.f32.mrb[0].mxu0
        %v797 = vpop.f32.mrb[0].mxu0
        %v798 = vadd.f32 0.0, %v797
        %v799 = vpop.f32.mrb[0].mxu0
        %800 = vmatprep.mubr.bf16.mxu0 %v537
        %801 = vmatmul.mubr.bf16.gmra.mrb[0].mxu0 %v536
        %v802 = vpop.f32.mrb[0].mxu0
        %v803 = vadd.f32 0.0, %v802
        %v804 = vpop.f32.mrb[0].mxu0
        %v805 = vpop.f32.mrb[0].mxu0
        %v806 = vadd.f32 0.0, %v805
        %v807 = vpop.f32.mrb[0].mxu0
        %808 = vmatprep.mubr.bf16.mxu0 %v539
        %809 = vmatmul.mubr.bf16.gmra.mrb[0].mxu0 %v538
        %v810 = vpop.f32.mrb[0].mxu0
        %v811 = vadd.f32 0.0, %v810
        %v812 = vpop.f32.mrb[0].mxu0
        %v813 = vpop.f32.mrb[0].mxu0
        %v814 = vadd.f32 0.0, %v813
        %v815 = vpop.f32.mrb[0].mxu0
        %816 = vmatprep.mubr.bf16.mxu0 %v541
        %817 = vmatmul.mubr.bf16.gmra.mrb[0].mxu0 %v540
        %v818 = vpop.f32.mrb[0].mxu0
        %v819 = vadd.f32 0.0, %v818
        %v820 = vpop.f32.mrb[0].mxu0
        %v821 = vpop.f32.mrb[0].mxu0
        %v822 = vadd.f32 0.0, %v821
        %v823 = vpop.f32.mrb[0].mxu0
        %824 = vmatprep.mubr.bf16.mxu0 %v543
        %825 = vmatmul.mubr.bf16.gmra.mrb[0].mxu0 %v542
        %v826 = vpop.f32.mrb[0].mxu0
        %v827 = vadd.f32 0.0, %v826
        %v828 = vpop.f32.mrb[0].mxu0
        %v829 = vpop.f32.mrb[0].mxu0
        %v830 = vadd.f32 0.0, %v829
        %v831 = vpop.f32.mrb[0].mxu0
        %832 = vdwg.mxu0
        %p833 = scmp.lt.s32.totalorder %s32, 4
        // Predicated region
        $region53: #{llama_attention.3} parent=35 // pred_check
          %p834 = pneg %p833
        $region54: #{llama_attention.3} parent=35 // pred_check_branch
          %836 = sbr.rel (%p834) target = $region56
        $region55: #{llama_attention.3} parent=35 // pred_region
          %837 = vrot.lane.b32.xlu0 %v707, 64
          %v838 = vpop.permute.xlu0 %837
          %839 = vrot.lane.b32.xlu0 %v710, 64
          %v840 = vpop.permute.xlu0 %839
          %841 = vrot.lane.b32.xlu0 %v715, 64
          %v842 = vpop.permute.xlu0 %841
          %843 = vrot.lane.b32.xlu0 %v718, 64
          %v844 = vpop.permute.xlu0 %843
          %845 = vrot.lane.b32.xlu0 %v723, 64
          %v846 = vpop.permute.xlu0 %845
          %847 = vrot.lane.b32.xlu0 %v726, 64
          %v848 = vpop.permute.xlu0 %847
          %849 = vrot.lane.b32.xlu0 %v731, 64
          %v850 = vpop.permute.xlu0 %849
          %851 = vrot.lane.b32.xlu0 %v734, 64
          %v852 = vpop.permute.xlu0 %851
          %853 = vrot.lane.b32.xlu0 %v739, 64
          %v854 = vpop.permute.xlu0 %853
          %855 = vrot.lane.b32.xlu0 %v742, 64
          %v856 = vpop.permute.xlu0 %855
          %857 = vrot.lane.b32.xlu0 %v747, 64
          %v858 = vpop.permute.xlu0 %857
          %859 = vrot.lane.b32.xlu0 %v750, 64
          %v860 = vpop.permute.xlu0 %859
          %861 = vrot.lane.b32.xlu0 %v755, 64
          %v862 = vpop.permute.xlu0 %861
          %863 = vrot.lane.b32.xlu0 %v758, 64
          %v864 = vpop.permute.xlu0 %863
          %865 = vrot.lane.b32.xlu0 %v763, 64
          %v866 = vpop.permute.xlu0 %865
          %867 = vrot.lane.b32.xlu0 %v766, 64
          %v868 = vpop.permute.xlu0 %867
          %869 = vrot.lane.b32.xlu0 %v771, 64
          %v870 = vpop.permute.xlu0 %869
          %871 = vrot.lane.b32.xlu0 %v774, 64
          %v872 = vpop.permute.xlu0 %871
          %873 = vrot.lane.b32.xlu0 %v779, 64
          %v874 = vpop.permute.xlu0 %873
          %875 = vrot.lane.b32.xlu0 %v782, 64
          %v876 = vpop.permute.xlu0 %875
          %877 = vrot.lane.b32.xlu0 %v787, 64
          %v878 = vpop.permute.xlu0 %877
          %879 = vrot.lane.b32.xlu0 %v790, 64
          %v880 = vpop.permute.xlu0 %879
          %881 = vrot.lane.b32.xlu0 %v795, 64
          %v882 = vpop.permute.xlu0 %881
          %883 = vrot.lane.b32.xlu0 %v798, 64
          %v884 = vpop.permute.xlu0 %883
          %885 = vrot.lane.b32.xlu0 %v803, 64
          %v886 = vpop.permute.xlu0 %885
          %887 = vrot.lane.b32.xlu0 %v806, 64
          %v888 = vpop.permute.xlu0 %887
          %889 = vrot.lane.b32.xlu0 %v811, 64
          %v890 = vpop.permute.xlu0 %889
          %891 = vrot.lane.b32.xlu0 %v814, 64
          %v892 = vpop.permute.xlu0 %891
          %893 = vrot.lane.b32.xlu0 %v819, 64
          %v894 = vpop.permute.xlu0 %893
          %895 = vrot.lane.b32.xlu0 %v822, 64
          %v896 = vpop.permute.xlu0 %895
          %897 = vrot.lane.b32.xlu0 %v827, 64
          %v898 = vpop.permute.xlu0 %897
          %899 = vrot.lane.b32.xlu0 %v830, 64
          %v900 = vpop.permute.xlu0 %899
          %v901 = vld [vmem:[%s298] sm:$0xff]
          %v902 = vld [vmem:[%s298 + $0x8] sm:$0xff]
          %v903 = vld [vmem:[%s298 + $0x10] sm:$0xff]
          %v904 = vld [vmem:[%s298 + $0x18] sm:$0xff]
          %v905 = vld [vmem:[%s298 + $0x20] sm:$0xff]
          %v906 = vld [vmem:[%s298 + $0x28] sm:$0xff]
          %v907 = vld [vmem:[%s298 + $0x30] sm:$0xff]
          %v908 = vld [vmem:[%s298 + $0x38] sm:$0xff]
          %v909 = vld [vmem:[%s298 + $0x40] sm:$0xff]
          %v910 = vld [vmem:[%s298 + $0x48] sm:$0xff]
          %v911 = vld [vmem:[%s298 + $0x50] sm:$0xff]
          %v912 = vld [vmem:[%s298 + $0x58] sm:$0xff]
          %v913 = vld [vmem:[%s298 + $0x60] sm:$0xff]
          %v914 = vld [vmem:[%s298 + $0x68] sm:$0xff]
          %v915 = vld [vmem:[%s298 + $0x70] sm:$0xff]
          %v916 = vld [vmem:[%s298 + $0x78] sm:$0xff]
          %v917 = vld [vmem:[%s298 + $0x80] sm:$0xff]
          %v918 = vld [vmem:[%s298 + $0x88] sm:$0xff]
          %v919 = vld [vmem:[%s298 + $0x90] sm:$0xff]
          %v920 = vld [vmem:[%s298 + $0x98] sm:$0xff]
          %v921 = vld [vmem:[%s298 + $0xa0] sm:$0xff]
          %v922 = vld [vmem:[%s298 + $0xa8] sm:$0xff]
          %v923 = vld [vmem:[%s298 + $0xb0] sm:$0xff]
          %v924 = vld [vmem:[%s298 + $0xb8] sm:$0xff]
          %v925 = vld [vmem:[%s298 + $0xc0] sm:$0xff]
          %v926 = vld [vmem:[%s298 + $0xc8] sm:$0xff]
          %v927 = vld [vmem:[%s298 + $0xd0] sm:$0xff]
          %v928 = vld [vmem:[%s298 + $0xd8] sm:$0xff]
          %v929 = vld [vmem:[%s298 + $0xe0] sm:$0xff]
          %v930 = vld [vmem:[%s298 + $0xe8] sm:$0xff]
          %v931 = vld [vmem:[%s298 + $0xf0] sm:$0xff]
          %v932 = vld [vmem:[%s298 + $0xf8] sm:$0xff]
          %v933 = vmul.f32 %v707, %v901
          %v934 = vmul.f32 %v710, %v902
          %v935 = vmul.f32 %v715, %v903
          %v936 = vmul.f32 %v718, %v904
          %v937 = vmul.f32 %v723, %v905
          %v938 = vmul.f32 %v726, %v906
          %v939 = vmul.f32 %v731, %v907
          %v940 = vmul.f32 %v734, %v908
          %v941 = vmul.f32 %v739, %v909
          %v942 = vmul.f32 %v742, %v910
          %v943 = vmul.f32 %v747, %v911
          %v944 = vmul.f32 %v750, %v912
          %v945 = vmul.f32 %v755, %v913
          %v946 = vmul.f32 %v758, %v914
          %v947 = vmul.f32 %v763, %v915
          %v948 = vmul.f32 %v766, %v916
          %v949 = vmul.f32 %v771, %v917
          %v950 = vmul.f32 %v774, %v918
          %v951 = vmul.f32 %v779, %v919
          %v952 = vmul.f32 %v782, %v920
          %v953 = vmul.f32 %v787, %v921
          %v954 = vmul.f32 %v790, %v922
          %v955 = vmul.f32 %v795, %v923
          %v956 = vmul.f32 %v798, %v924
          %v957 = vmul.f32 %v803, %v925
          %v958 = vmul.f32 %v806, %v926
          %v959 = vmul.f32 %v811, %v927
          %v960 = vmul.f32 %v814, %v928
          %v961 = vmul.f32 %v819, %v929
          %v962 = vmul.f32 %v822, %v930
          %v963 = vmul.f32 %v827, %v931
          %v964 = vmul.f32 %v830, %v932
          %v965 = vld [vmem:[%s307] sm:$0xff]
          %v966 = vld [vmem:[%s307 + $0x8] sm:$0xff]
          %v967 = vld [vmem:[%s307 + $0x10] sm:$0xff]
          %v968 = vld [vmem:[%s307 + $0x18] sm:$0xff]
          %v969 = vld [vmem:[%s307 + $0x20] sm:$0xff]
          %v970 = vld [vmem:[%s307 + $0x28] sm:$0xff]
          %v971 = vld [vmem:[%s307 + $0x30] sm:$0xff]
          %v972 = vld [vmem:[%s307 + $0x38] sm:$0xff]
          %v973 = vld [vmem:[%s307 + $0x40] sm:$0xff]
          %v974 = vld [vmem:[%s307 + $0x48] sm:$0xff]
          %v975 = vld [vmem:[%s307 + $0x50] sm:$0xff]
          %v976 = vld [vmem:[%s307 + $0x58] sm:$0xff]
          %v977 = vld [vmem:[%s307 + $0x60] sm:$0xff]
          %v978 = vld [vmem:[%s307 + $0x68] sm:$0xff]
          %v979 = vld [vmem:[%s307 + $0x70] sm:$0xff]
          %v980 = vld [vmem:[%s307 + $0x78] sm:$0xff]
          %v981 = vld [vmem:[%s307 + $0x80] sm:$0xff]
          %v982 = vld [vmem:[%s307 + $0x88] sm:$0xff]
          %v983 = vld [vmem:[%s307 + $0x90] sm:$0xff]
          %v984 = vld [vmem:[%s307 + $0x98] sm:$0xff]
          %v985 = vld [vmem:[%s307 + $0xa0] sm:$0xff]
          %v986 = vld [vmem:[%s307 + $0xa8] sm:$0xff]
          %v987 = vld [vmem:[%s307 + $0xb0] sm:$0xff]
          %v988 = vld [vmem:[%s307 + $0xb8] sm:$0xff]
          %v989 = vld [vmem:[%s307 + $0xc0] sm:$0xff]
          %v990 = vld [vmem:[%s307 + $0xc8] sm:$0xff]
          %v991 = vld [vmem:[%s307 + $0xd0] sm:$0xff]
          %v992 = vld [vmem:[%s307 + $0xd8] sm:$0xff]
          %v993 = vld [vmem:[%s307 + $0xe0] sm:$0xff]
          %v994 = vld [vmem:[%s307 + $0xe8] sm:$0xff]
          %v995 = vld [vmem:[%s307 + $0xf0] sm:$0xff]
          %v996 = vld [vmem:[%s307 + $0xf8] sm:$0xff]
          %v997 = vmul.f32 %v838, %v965
          %v998 = vmul.f32 %v840, %v966
          %v999 = vmul.f32 %v842, %v967
          %v1000 = vmul.f32 %v844, %v968
          %v1001 = vmul.f32 %v846, %v969
          %v1002 = vmul.f32 %v848, %v970
          %v1003 = vmul.f32 %v850, %v971
          %v1004 = vmul.f32 %v852, %v972
          %v1005 = vmul.f32 %v854, %v973
          %v1006 = vmul.f32 %v856, %v974
          %v1007 = vmul.f32 %v858, %v975
          %v1008 = vmul.f32 %v860, %v976
          %v1009 = vmul.f32 %v862, %v977
          %v1010 = vmul.f32 %v864, %v978
          %v1011 = vmul.f32 %v866, %v979
          %v1012 = vmul.f32 %v868, %v980
          %v1013 = vmul.f32 %v870, %v981
          %v1014 = vmul.f32 %v872, %v982
          %v1015 = vmul.f32 %v874, %v983
          %v1016 = vmul.f32 %v876, %v984
          %v1017 = vmul.f32 %v878, %v985
          %v1018 = vmul.f32 %v880, %v986
          %v1019 = vmul.f32 %v882, %v987
          %v1020 = vmul.f32 %v884, %v988
          %v1021 = vmul.f32 %v886, %v989
          %v1022 = vmul.f32 %v888, %v990
          %v1023 = vmul.f32 %v890, %v991
          %v1024 = vmul.f32 %v892, %v992
          %v1025 = vmul.f32 %v894, %v993
          %v1026 = vmul.f32 %v896, %v994
          %v1027 = vmul.f32 %v898, %v995
          %v1028 = vmul.f32 %v900, %v996
          %v1029 = vadd.f32 %v933, %v997
          %v1030 = vadd.f32 %v934, %v998
          %v1031 = vadd.f32 %v935, %v999
          %v1032 = vadd.f32 %v936, %v1000
          %v1033 = vadd.f32 %v937, %v1001
          %v1034 = vadd.f32 %v938, %v1002
          %v1035 = vadd.f32 %v939, %v1003
          %v1036 = vadd.f32 %v940, %v1004
          %v1037 = vadd.f32 %v941, %v1005
          %v1038 = vadd.f32 %v942, %v1006
          %v1039 = vadd.f32 %v943, %v1007
          %v1040 = vadd.f32 %v944, %v1008
          %v1041 = vadd.f32 %v945, %v1009
          %v1042 = vadd.f32 %v946, %v1010
          %v1043 = vadd.f32 %v947, %v1011
          %v1044 = vadd.f32 %v948, %v1012
          %v1045 = vadd.f32 %v949, %v1013
          %v1046 = vadd.f32 %v950, %v1014
          %v1047 = vadd.f32 %v951, %v1015
          %v1048 = vadd.f32 %v952, %v1016
          %v1049 = vadd.f32 %v953, %v1017
          %v1050 = vadd.f32 %v954, %v1018
          %v1051 = vadd.f32 %v955, %v1019
          %v1052 = vadd.f32 %v956, %v1020
          %v1053 = vadd.f32 %v957, %v1021
          %v1054 = vadd.f32 %v958, %v1022
          %v1055 = vadd.f32 %v959, %v1023
          %v1056 = vadd.f32 %v960, %v1024
          %v1057 = vadd.f32 %v961, %v1025
          %v1058 = vadd.f32 %v962, %v1026
          %v1059 = vadd.f32 %v963, %v1027
          %v1060 = vadd.f32 %v964, %v1028
          %v1061 = vpack.c.bf16 %v1030, %v1029
          %v1062 = vpack.c.bf16 %v1032, %v1031
          %v1063 = vpack.c.bf16 %v1034, %v1033
          %v1064 = vpack.c.bf16 %v1036, %v1035
          %v1065 = vpack.c.bf16 %v1038, %v1037
          %v1066 = vpack.c.bf16 %v1040, %v1039
          %v1067 = vpack.c.bf16 %v1042, %v1041
          %v1068 = vpack.c.bf16 %v1044, %v1043
          %v1069 = vpack.c.bf16 %v1046, %v1045
          %v1070 = vpack.c.bf16 %v1048, %v1047
          %v1071 = vpack.c.bf16 %v1050, %v1049
          %v1072 = vpack.c.bf16 %v1052, %v1051
          %v1073 = vpack.c.bf16 %v1054, %v1053
          %v1074 = vpack.c.bf16 %v1056, %v1055
          %v1075 = vpack.c.bf16 %v1058, %v1057
          %v1076 = vpack.c.bf16 %v1060, %v1059
          %v1093 = vunpack.c.l.b16 %v1061
          %v1094 = vunpack.c.h.b16 %v1061
          %v1095 = vunpack.c.l.b16 %v1062
          %v1096 = vunpack.c.h.b16 %v1062
          %v1097 = vunpack.c.l.b16 %v1063
          %v1098 = vunpack.c.h.b16 %v1063
          %v1099 = vunpack.c.l.b16 %v1064
          %v1100 = vunpack.c.h.b16 %v1064
          %v1101 = vunpack.c.l.b16 %v1065
          %v1102 = vunpack.c.h.b16 %v1065
          %v1103 = vunpack.c.l.b16 %v1066
          %v1104 = vunpack.c.h.b16 %v1066
          %v1105 = vunpack.c.l.b16 %v1067
          %v1106 = vunpack.c.h.b16 %v1067
          %v1107 = vunpack.c.l.b16 %v1068
          %v1108 = vunpack.c.h.b16 %v1068
          %v1109 = vunpack.c.l.b16 %v1069
          %v1110 = vunpack.c.h.b16 %v1069
          %v1111 = vunpack.c.l.b16 %v1070
          %v1112 = vunpack.c.h.b16 %v1070
          %v1113 = vunpack.c.l.b16 %v1071
          %v1114 = vunpack.c.h.b16 %v1071
          %v1115 = vunpack.c.l.b16 %v1072
          %v1116 = vunpack.c.h.b16 %v1072
          %v1117 = vunpack.c.l.b16 %v1073
          %v1118 = vunpack.c.h.b16 %v1073
          %v1119 = vunpack.c.l.b16 %v1074
          %v1120 = vunpack.c.h.b16 %v1074
          %v1121 = vunpack.c.l.b16 %v1075
          %v1122 = vunpack.c.h.b16 %v1075
          %v1123 = vunpack.c.l.b16 %v1076
          %v1124 = vunpack.c.h.b16 %v1076
          %v1125 = vpack.c.b16 %v1093, %v1093
          %v1126 = vpack.c.b16 %v1094, %v1094
          %v1127 = vpack.c.b16 %v1095, %v1095
          %v1128 = vpack.c.b16 %v1096, %v1096
          %v1129 = vpack.c.b16 %v1097, %v1097
          %v1130 = vpack.c.b16 %v1098, %v1098
          %v1131 = vpack.c.b16 %v1099, %v1099
          %v1132 = vpack.c.b16 %v1100, %v1100
          %v1133 = vpack.c.b16 %v1101, %v1101
          %v1134 = vpack.c.b16 %v1102, %v1102
          %v1135 = vpack.c.b16 %v1103, %v1103
          %v1136 = vpack.c.b16 %v1104, %v1104
          %v1137 = vpack.c.b16 %v1105, %v1105
          %v1138 = vpack.c.b16 %v1106, %v1106
          %v1139 = vpack.c.b16 %v1107, %v1107
          %v1140 = vpack.c.b16 %v1108, %v1108
          %v1141 = vpack.c.b16 %v1109, %v1109
          %v1142 = vpack.c.b16 %v1110, %v1110
          %v1143 = vpack.c.b16 %v1111, %v1111
          %v1144 = vpack.c.b16 %v1112, %v1112
          %v1145 = vpack.c.b16 %v1113, %v1113
          %v1146 = vpack.c.b16 %v1114, %v1114
          %v1147 = vpack.c.b16 %v1115, %v1115
          %v1148 = vpack.c.b16 %v1116, %v1116
          %v1149 = vpack.c.b16 %v1117, %v1117
          %v1150 = vpack.c.b16 %v1118, %v1118
          %v1151 = vpack.c.b16 %v1119, %v1119
          %v1152 = vpack.c.b16 %v1120, %v1120
          %v1153 = vpack.c.b16 %v1121, %v1121
          %v1154 = vpack.c.b16 %v1122, %v1122
          %v1155 = vpack.c.b16 %v1123, %v1123
          %v1156 = vpack.c.b16 %v1124, %v1124
          %1189 = vst [vmem:[%s346] sm:$0xf] %v1125
          %1190 = vst [vmem:[%s346 + $0x4] sm:$0xf] %v1126
          %1191 = vst [vmem:[%s346 + $0x8] sm:$0xf] %v1127
          %1192 = vst [vmem:[%s346 + $0xc] sm:$0xf] %v1128
          %1193 = vst [vmem:[%s346 + $0x10] sm:$0xf] %v1129
          %1194 = vst [vmem:[%s346 + $0x14] sm:$0xf] %v1130
          %1195 = vst [vmem:[%s346 + $0x18] sm:$0xf] %v1131
          %1196 = vst [vmem:[%s346 + $0x1c] sm:$0xf] %v1132
          %1197 = vst [vmem:[%s346 + $0x20] sm:$0xf] %v1133
          %1198 = vst [vmem:[%s346 + $0x24] sm:$0xf] %v1134
          %1199 = vst [vmem:[%s346 + $0x28] sm:$0xf] %v1135
          %1200 = vst [vmem:[%s346 + $0x2c] sm:$0xf] %v1136
          %1201 = vst [vmem:[%s346 + $0x30] sm:$0xf] %v1137
          %1202 = vst [vmem:[%s346 + $0x34] sm:$0xf] %v1138
          %1203 = vst [vmem:[%s346 + $0x38] sm:$0xf] %v1139
          %1204 = vst [vmem:[%s346 + $0x3c] sm:$0xf] %v1140
          %1205 = vst [vmem:[%s346 + $0x40] sm:$0xf] %v1141
          %1206 = vst [vmem:[%s346 + $0x44] sm:$0xf] %v1142
          %1207 = vst [vmem:[%s346 + $0x48] sm:$0xf] %v1143
          %1208 = vst [vmem:[%s346 + $0x4c] sm:$0xf] %v1144
          %1209 = vst [vmem:[%s346 + $0x50] sm:$0xf] %v1145
          %1210 = vst [vmem:[%s346 + $0x54] sm:$0xf] %v1146
          %1211 = vst [vmem:[%s346 + $0x58] sm:$0xf] %v1147
          %1212 = vst [vmem:[%s346 + $0x5c] sm:$0xf] %v1148
          %1213 = vst [vmem:[%s346 + $0x60] sm:$0xf] %v1149
          %1214 = vst [vmem:[%s346 + $0x64] sm:$0xf] %v1150
          %1215 = vst [vmem:[%s346 + $0x68] sm:$0xf] %v1151
          %1216 = vst [vmem:[%s346 + $0x6c] sm:$0xf] %v1152
          %1217 = vst [vmem:[%s346 + $0x70] sm:$0xf] %v1153
          %1218 = vst [vmem:[%s346 + $0x74] sm:$0xf] %v1154
          %1219 = vst [vmem:[%s346 + $0x78] sm:$0xf] %v1155
          %1220 = vst [vmem:[%s346 + $0x7c] sm:$0xf] %v1156
        $region56: #{llama_attention.3} parent=35 // pred_fallthru
          _
        %p1221 = scmp.ge.s32.totalorder %s32, 4
        // Predicated region
        $region57: #{llama_attention.3} parent=35 // pred_check
          %p1222 = pneg %p1221
        $region58: #{llama_attention.3} parent=35 // pred_check_branch
          %1224 = sbr.rel (%p1222) target = $region60
        $region59: #{llama_attention.3} parent=35 // pred_region
          %v1225 = vpack.c.bf16 %v710, %v707
          %v1226 = vpack.c.bf16 %v718, %v715
          %v1227 = vpack.c.bf16 %v726, %v723
          %v1228 = vpack.c.bf16 %v734, %v731
          %v1229 = vpack.c.bf16 %v742, %v739
          %v1230 = vpack.c.bf16 %v750, %v747
          %v1231 = vpack.c.bf16 %v758, %v755
          %v1232 = vpack.c.bf16 %v766, %v763
          %v1233 = vpack.c.bf16 %v774, %v771
          %v1234 = vpack.c.bf16 %v782, %v779
          %v1235 = vpack.c.bf16 %v790, %v787
          %v1236 = vpack.c.bf16 %v798, %v795
          %v1237 = vpack.c.bf16 %v806, %v803
          %v1238 = vpack.c.bf16 %v814, %v811
          %v1239 = vpack.c.bf16 %v822, %v819
          %v1240 = vpack.c.bf16 %v830, %v827
          %v1257 = vunpack.c.l.b16 %v1225
          %v1258 = vunpack.c.h.b16 %v1225
          %v1259 = vunpack.c.l.b16 %v1226
          %v1260 = vunpack.c.h.b16 %v1226
          %v1261 = vunpack.c.l.b16 %v1227
          %v1262 = vunpack.c.h.b16 %v1227
          %v1263 = vunpack.c.l.b16 %v1228
          %v1264 = vunpack.c.h.b16 %v1228
          %v1265 = vunpack.c.l.b16 %v1229
          %v1266 = vunpack.c.h.b16 %v1229
          %v1267 = vunpack.c.l.b16 %v1230
          %v1268 = vunpack.c.h.b16 %v1230
          %v1269 = vunpack.c.l.b16 %v1231
          %v1270 = vunpack.c.h.b16 %v1231
          %v1271 = vunpack.c.l.b16 %v1232
          %v1272 = vunpack.c.h.b16 %v1232
          %v1273 = vunpack.c.l.b16 %v1233
          %v1274 = vunpack.c.h.b16 %v1233
          %v1275 = vunpack.c.l.b16 %v1234
          %v1276 = vunpack.c.h.b16 %v1234
          %v1277 = vunpack.c.l.b16 %v1235
          %v1278 = vunpack.c.h.b16 %v1235
          %v1279 = vunpack.c.l.b16 %v1236
          %v1280 = vunpack.c.h.b16 %v1236
          %v1281 = vunpack.c.l.b16 %v1237
          %v1282 = vunpack.c.h.b16 %v1237
          %v1283 = vunpack.c.l.b16 %v1238
          %v1284 = vunpack.c.h.b16 %v1238
          %v1285 = vunpack.c.l.b16 %v1239
          %v1286 = vunpack.c.h.b16 %v1239
          %v1287 = vunpack.c.l.b16 %v1240
          %v1288 = vunpack.c.h.b16 %v1240
          %v1289 = vpack.c.b16 %v1257, %v1257
          %v1290 = vpack.c.b16 %v1258, %v1258
          %v1291 = vpack.c.b16 %v1259, %v1259
          %v1292 = vpack.c.b16 %v1260, %v1260
          %v1293 = vpack.c.b16 %v1261, %v1261
          %v1294 = vpack.c.b16 %v1262, %v1262
          %v1295 = vpack.c.b16 %v1263, %v1263
          %v1296 = vpack.c.b16 %v1264, %v1264
          %v1297 = vpack.c.b16 %v1265, %v1265
          %v1298 = vpack.c.b16 %v1266, %v1266
          %v1299 = vpack.c.b16 %v1267, %v1267
          %v1300 = vpack.c.b16 %v1268, %v1268
          %v1301 = vpack.c.b16 %v1269, %v1269
          %v1302 = vpack.c.b16 %v1270, %v1270
          %v1303 = vpack.c.b16 %v1271, %v1271
          %v1304 = vpack.c.b16 %v1272, %v1272
          %v1305 = vpack.c.b16 %v1273, %v1273
          %v1306 = vpack.c.b16 %v1274, %v1274
          %v1307 = vpack.c.b16 %v1275, %v1275
          %v1308 = vpack.c.b16 %v1276, %v1276
          %v1309 = vpack.c.b16 %v1277, %v1277
          %v1310 = vpack.c.b16 %v1278, %v1278
          %v1311 = vpack.c.b16 %v1279, %v1279
          %v1312 = vpack.c.b16 %v1280, %v1280
          %v1313 = vpack.c.b16 %v1281, %v1281
          %v1314 = vpack.c.b16 %v1282, %v1282
          %v1315 = vpack.c.b16 %v1283, %v1283
          %v1316 = vpack.c.b16 %v1284, %v1284
          %v1317 = vpack.c.b16 %v1285, %v1285
          %v1318 = vpack.c.b16 %v1286, %v1286
          %v1319 = vpack.c.b16 %v1287, %v1287
          %v1320 = vpack.c.b16 %v1288, %v1288
          %1353 = vst [vmem:[%s346] sm:$0xf] %v1289
          %1354 = vst [vmem:[%s346 + $0x4] sm:$0xf] %v1290
          %1355 = vst [vmem:[%s346 + $0x8] sm:$0xf] %v1291
          %1356 = vst [vmem:[%s346 + $0xc] sm:$0xf] %v1292
          %1357 = vst [vmem:[%s346 + $0x10] sm:$0xf] %v1293
          %1358 = vst [vmem:[%s346 + $0x14] sm:$0xf] %v1294
          %1359 = vst [vmem:[%s346 + $0x18] sm:$0xf] %v1295
          %1360 = vst [vmem:[%s346 + $0x1c] sm:$0xf] %v1296
          %1361 = vst [vmem:[%s346 + $0x20] sm:$0xf] %v1297
          %1362 = vst [vmem:[%s346 + $0x24] sm:$0xf] %v1298
          %1363 = vst [vmem:[%s346 + $0x28] sm:$0xf] %v1299
          %1364 = vst [vmem:[%s346 + $0x2c] sm:$0xf] %v1300
          %1365 = vst [vmem:[%s346 + $0x30] sm:$0xf] %v1301
          %1366 = vst [vmem:[%s346 + $0x34] sm:$0xf] %v1302
          %1367 = vst [vmem:[%s346 + $0x38] sm:$0xf] %v1303
          %1368 = vst [vmem:[%s346 + $0x3c] sm:$0xf] %v1304
          %1369 = vst [vmem:[%s346 + $0x40] sm:$0xf] %v1305
          %1370 = vst [vmem:[%s346 + $0x44] sm:$0xf] %v1306
          %1371 = vst [vmem:[%s346 + $0x48] sm:$0xf] %v1307
          %1372 = vst [vmem:[%s346 + $0x4c] sm:$0xf] %v1308
          %1373 = vst [vmem:[%s346 + $0x50] sm:$0xf] %v1309
          %1374 = vst [vmem:[%s346 + $0x54] sm:$0xf] %v1310
          %1375 = vst [vmem:[%s346 + $0x58] sm:$0xf] %v1311
          %1376 = vst [vmem:[%s346 + $0x5c] sm:$0xf] %v1312
          %1377 = vst [vmem:[%s346 + $0x60] sm:$0xf] %v1313
          %1378 = vst [vmem:[%s346 + $0x64] sm:$0xf] %v1314
          %1379 = vst [vmem:[%s346 + $0x68] sm:$0xf] %v1315
          %1380 = vst [vmem:[%s346 + $0x6c] sm:$0xf] %v1316
          %1381 = vst [vmem:[%s346 + $0x70] sm:$0xf] %v1317
          %1382 = vst [vmem:[%s346 + $0x74] sm:$0xf] %v1318
          %1383 = vst [vmem:[%s346 + $0x78] sm:$0xf] %v1319
          %1384 = vst [vmem:[%s346 + $0x7c] sm:$0xf] %v1320
        $region60: #{llama_attention.3} parent=35 // pred_fallthru
          _
        %s1385 = sand.u32 %s153, 1
        %s1386 = scalar_lea.sflag [#allocation4], %s1385
        %s1387 = sand.u32 %s153, 1
        %s1388 = smul.addr %s1387, 128
        %s1389 = scalar_lea.vmem [#allocation10], %s1388
        // Predicated region
        $region61: #{llama_attention.3} parent=35 // pred_check
          %p1390 = pneg %p163
        $region62: #{llama_attention.3} parent=35 // pred_check_branch
          %1392 = sbr.rel (%p1390) target = $region64
        $region63: #{llama_attention.3} parent=35 // pred_region
          %s1393 = smul.u32 32, %s31
          %s1395 = ssub.s32 2048, 2048
          %1396 = vsyncadd %s1386, %s1395
          %s1397 = smul.addr %s1393, 6
          %s1398 = sadd.s32 %s32, %s1397
          %s1399 = smul.addr %s1398, 64
          %s1400 = scalar_lea.hbm %s4, %s1399
          %s1401 = sshll.u32 %s1389, 4
          %s1402 = int_to_ptr.vmem [resolvable:$true] %s1401
          %1407 = dma.vmem_to_hbm [thread:$0]  %s1402, 2048, %s1400, %s1386, 64, 384, 4
        $region64: #{llama_attention.3} parent=35 // pred_fallthru
          _
      $region36: #{llama_attention.3} parent=5 // pred_fallthru
        _
      %p1408 = scmp.le.s32.totalorder 2, %s22
      // Predicated region
      $region65: #{llama_attention.3} parent=5 // pred_check
        %p1409 = pneg %p1408
      $region66: #{llama_attention.3} parent=5 // pred_check_branch
        %1411 = sbr.rel (%p1409) target = $region68
      $region67: #{llama_attention.3} parent=5 // pred_region
        %s1412 = ssub.s32 %s22, 2
        // Predicated region
        $region69: #{llama_attention.3} parent=67 // pred_check
          %p1413 = pneg %p169
        $region70: #{llama_attention.3} parent=67 // pred_check_branch
          %1415 = sbr.rel (%p1413) target = $region72
        $region71: #{llama_attention.3} parent=67 // pred_region
          %s1416 = sand.u32 %s154, 1
          %s1417 = scalar_lea.sflag [#allocation4], %s1416
          %s1418 = sand.u32 %s154, 1
          %s1419 = smul.addr %s1418, 128
          %s1420 = scalar_lea.vmem [#allocation10], %s1419
          %1421 = dma.done %s1417, 2048
        $region72: #{llama_attention.3} parent=67 // pred_fallthru
          _
      $region68: #{llama_attention.3} parent=5 // pred_fallthru
        _
    $region6: #{llama_attention.3} parent=1 // loop_footer
      %s26 = sadd.s32 1, %s22
    $region7: #{llama_attention.3} parent=1 // loop_footer_branch
      %21 = sbr.rel target = $region3
    $region8: #{llama_attention.3} parent=1 // loop_exit
      _
    %1422 = vsyncpa [#allocation3], 1
    %s1423 = scalar_lea.sflag [#allocation3], 1
    %1424 = vsyncpa %s1423, 1
    %1425 = vsyncpa [#allocation6], 1
    %s1426 = scalar_lea.sflag [#allocation6], 1
    %1427 = vsyncpa %s1426, 1
    %1428 = vsyncpa [#allocation9], 1
    %s1429 = scalar_lea.sflag [#allocation9], 1
    %1430 = vsyncpa %s1429, 1
    %1431 = vsyncpa [#allocation4], 1
    %s1432 = scalar_lea.sflag [#allocation4], 1
    %1433 = vsyncpa %s1432, 1

// kernel: llama_attention.5
$region0: #{llama_attention.5}
  #allocation0 [shape = 'u32[]', space=smem, size = 0x4, offset = 0x4, fixed_abs, tag = 'smem constant byte address 0x4 - core index']
  #allocation1 [shape = 'u32[144,128]{1,0:T(1,128)}', space=vmem, size = 0x12000, scoped, tag = 'internal scratch']
  %s0 = inlined_call_operand.hbm [shape: bf16[512,256], index: 0, kind: input, shape index: {}]
  %s1 = inlined_call_operand.hbm [shape: bf16[256,256], index: 1, kind: input, shape index: {}]
  %s2 = inlined_call_operand.hbm [shape: f32[512,256], index: 2, kind: output, shape index: {}]
  %s3 = sld [smem:[#allocation0]]
  $region49: #{llama_attention.5} parent=0
    _
  %s5 = ssub.s32 1, %s3
  %s6 = scalar_select 0, %s5, %s3
  $region1: #{llama_attention.5} parent=0
    #allocation2 [shape = 'u8[262144]{0}', space=vmem, size = 0x40000, scoped, tag = 'input window, operand 0']
    #allocation3 [shape = 's32[2]{0}', space=sflag, size = 0x8, scoped, tag = 'scoped memory for llama_attention.5']
    #allocation4 [shape = 's32[2]{0}', space=sflag, size = 0x8, scoped, tag = 'scoped memory for llama_attention.5']
    #allocation5 [shape = 'u8[131072]{0}', space=vmem, size = 0x20000, scoped, tag = 'input window, operand 1, single buffered']
    #allocation6 [shape = 's32[1]{0}', space=sflag, size = 0x4, scoped, tag = 'scoped memory for llama_attention.5']
    #allocation7 [shape = 'u8[524288]{0}', space=vmem, size = 0x80000, scoped, tag = 'output window, operand 0']
    %7 = vsyncpa [#allocation3], 0
    %s8 = scalar_lea.sflag [#allocation3], 1
    %9 = vsyncpa %s8, 0
    %10 = vsyncpa [#allocation6], 0
    %11 = vsyncpa [#allocation4], 0
    %s12 = scalar_lea.sflag [#allocation4], 1
    %13 = vsyncpa %s12, 0
    loop: start=0, step=1, limit=4
    $region2: #{llama_attention.5} parent=1 // loop_pre_header
      _
    $region3: #{llama_attention.5} parent=1 // loop_header
      %s15 = sphi 0, %s19
      %p16 = scmp.ge.s32.totalorder %s15, 4
      %s22 = sphi 0, %s34
      %s23 = sphi 0, %s30
      %s24 = sphi 0, %s22
      %s25 = sphi 0, %s23
      %s26 = sphi 0, %s24
      %s27 = sphi 0, %s25
      %s37 = sphi 0, %s39
      %s40 = sphi 0, %s37
      %s41 = sphi 0, %s40
      %s57 = sphi 0, %s41
      %s63 = sphi 0, %s65
      %s66 = sphi 0, %s63
      %s67 = sphi 0, %s66
      %s83 = sphi 0, %s67
      %s91 = sphi 0, %s93
      %s94 = sphi 0, %s91
      %s95 = sphi 0, %s94
      %s111 = sphi 0, %s95
    $region4: #{llama_attention.5} parent=1 // loop_header_branch
      %18 = sbr.rel (%p16) target = $region8
    $region5: #{llama_attention.5} parent=1 // loop_body
      %s20 = ssub.s32 %s15, 1
      %s21 = ssub.s32 %s15, 2
      %s28 = sadd.s32 1, %s23
      %p29 = scmp.ge.s32.totalorder %s28, 1
      %s30 = scalar_select %p29, 0, %s28
      %s31 = sadd.s32 1, %s22
      %s32 = scalar_select %p29, %s31, %s22
      %p33 = scmp.ge.s32.totalorder %s32, 2
      %s34 = scalar_select %p33, 0, %s32
      %s35 = ssub.s32 %s22, %s34
      %p36 = scmp.eq.s32.totalorder %s35, 0
      %s38 = sadd.s32 %s37, 1
      %s39 = scalar_select %p36, %s37, %s38
      %p42 = pneg %p36
      %p43 = scmp.eq.s32.totalorder %s15, 1
      %p44 = por %p42, %p43
      %p45 = scmp.ne.s32.totalorder %s37, %s40
      %p46 = scmp.eq.s32.totalorder %s15, 0
      %p47 = por %p45, %p46
      %p48 = scmp.ne.s32.totalorder %s37, %s40
      %p49 = scmp.eq.s32.totalorder %s20, 1
      %p50 = por %p48, %p49
      %p51 = scmp.ne.s32.totalorder %s40, %s41
      %p52 = scmp.eq.s32.totalorder %s20, 0
      %p53 = por %p51, %p52
      %p54 = scmp.ne.s32.totalorder %s40, %s41
      %p55 = scmp.eq.s32.totalorder %s21, 1
      %p56 = por %p54, %p55
      %p58 = scmp.ne.s32.totalorder %s41, %s57
      %p59 = scmp.eq.s32.totalorder %s21, 0
      %p60 = por %p58, %p59
      %s61 = ssub.s32 %s23, %s30
      %p62 = scmp.eq.s32.totalorder %s61, 0
      %s64 = sadd.s32 %s63, 1
      %s65 = scalar_select %p62, %s63, %s64
      %p68 = pneg %p62
      %p69 = scmp.eq.s32.totalorder %s15, 1
      %p70 = por %p68, %p69
      %p71 = scmp.ne.s32.totalorder %s63, %s66
      %p72 = scmp.eq.s32.totalorder %s15, 0
      %p73 = por %p71, %p72
      %p74 = scmp.ne.s32.totalorder %s63, %s66
      %p75 = scmp.eq.s32.totalorder %s20, 1
      %p76 = por %p74, %p75
      %p77 = scmp.ne.s32.totalorder %s66, %s67
      %p78 = scmp.eq.s32.totalorder %s20, 0
      %p79 = por %p77, %p78
      %p80 = scmp.ne.s32.totalorder %s66, %s67
      %p81 = scmp.eq.s32.totalorder %s21, 1
      %p82 = por %p80, %p81
      %p84 = scmp.ne.s32.totalorder %s67, %s83
      %p85 = scmp.eq.s32.totalorder %s21, 0
      %p86 = por %p84, %p85
      %s87 = ssub.s32 %s22, %s34
      %s88 = ssub.s32 %s23, %s30
      %s89 = sor.u32 %s87, %s88
      %p90 = scmp.eq.s32.totalorder %s89, 0
      %s92 = sadd.s32 %s91, 1
      %s93 = scalar_select %p90, %s91, %s92
      %p96 = pneg %p90
      %p97 = scmp.eq.s32.totalorder %s15, 1
      %p98 = por %p96, %p97
      %p99 = scmp.ne.s32.totalorder %s91, %s94
      %p100 = scmp.eq.s32.totalorder %s15, 0
      %p101 = por %p99, %p100
      %p102 = scmp.ne.s32.totalorder %s91, %s94
      %p103 = scmp.eq.s32.totalorder %s20, 1
      %p104 = por %p102, %p103
      %p105 = scmp.ne.s32.totalorder %s94, %s95
      %p106 = scmp.eq.s32.totalorder %s20, 0
      %p107 = por %p105, %p106
      %p108 = scmp.ne.s32.totalorder %s94, %s95
      %p109 = scmp.eq.s32.totalorder %s21, 1
      %p110 = por %p108, %p109
      %p112 = scmp.ne.s32.totalorder %s95, %s111
      %p113 = scmp.eq.s32.totalorder %s21, 0
      %p114 = por %p112, %p113
      %p115 = scmp.le.s32.totalorder 1, %s15
      %p116 = scmp.lt.s32.totalorder %s15, 3
      %p117 = pnand %p115, %p116
      %p118 = pneg %p117
      // Predicated region
      $region9: #{llama_attention.5} parent=5 // pred_check
        _
      $region10: #{llama_attention.5} parent=5 // pred_check_branch
        %120 = sbr.rel (%p117) target = $region12
      $region11: #{llama_attention.5} parent=5 // pred_region
        %s121 = ssub.s32 %s15, 1
        // Predicated region
        $region13: #{llama_attention.5} parent=11 // pred_check
          %p122 = pneg %p79
        $region14: #{llama_attention.5} parent=11 // pred_check_branch
          %124 = sbr.rel (%p122) target = $region16
        $region15: #{llama_attention.5} parent=11 // pred_region
          %s125 = smul.u32 2, %s25
          %s127 = ssub.s32 4096, 4096
          %128 = vsyncadd [#allocation6], %s127
          %s129 = smul.addr %s125, 64
          %s130 = scalar_lea.hbm %s1, %s129
          %s131 = sshll.u32 [#allocation5], 4
          %s132 = int_to_ptr.vmem [resolvable:$true] %s131
          %137 = dma.hbm_to_vmem [thread:$0]  %s130, 4096, %s132, [#allocation6], 128, 128, 8
        $region16: #{llama_attention.5} parent=11 // pred_fallthru
          _
      $region12: #{llama_attention.5} parent=5 // pred_fallthru
        _
      %p138 = scmp.lt.s32.totalorder %s15, 2
      // Predicated region
      $region17: #{llama_attention.5} parent=5 // pred_check
        %p139 = pneg %p138
      $region18: #{llama_attention.5} parent=5 // pred_check_branch
        %141 = sbr.rel (%p139) target = $region20
      $region19: #{llama_attention.5} parent=5 // pred_region
        // Predicated region
        $region21: #{llama_attention.5} parent=19 // pred_check
          %p142 = pneg %p47
        $region22: #{llama_attention.5} parent=19 // pred_check_branch
          %144 = sbr.rel (%p142) target = $region24
        $region23: #{llama_attention.5} parent=19 // pred_region
          %s145 = sand.u32 %s37, 1
          %s146 = scalar_lea.sflag [#allocation3], %s145
          %s147 = sand.u32 %s37, 1
          %s148 = smul.addr %s147, 256
          %s149 = scalar_lea.vmem [#allocation2], %s148
          %s150 = smul.u32 32, %s22
          %s152 = ssub.s32 4096, 4096
          %153 = vsyncadd %s146, %s152
          %s154 = smul.addr %s150, 2
          %s155 = smul.addr %s154, 64
          %s156 = scalar_lea.hbm %s0, %s155
          %s157 = sshll.u32 %s149, 4
          %s158 = int_to_ptr.vmem [resolvable:$true] %s157
          %163 = dma.hbm_to_vmem [thread:$0]  %s156, 4096, %s158, %s146, 128, 128, 8
        $region24: #{llama_attention.5} parent=19 // pred_fallthru
          _
      $region20: #{llama_attention.5} parent=5 // pred_fallthru
        _
      %p164 = scmp.le.s32.totalorder 1, %s15
      %p165 = scmp.lt.s32.totalorder %s15, 3
      %p166 = pnand %p164, %p165
      %p167 = pneg %p166
      // Predicated region
      $region25: #{llama_attention.5} parent=5 // pred_check
        _
      $region26: #{llama_attention.5} parent=5 // pred_check_branch
        %169 = sbr.rel (%p166) target = $region28
      $region27: #{llama_attention.5} parent=5 // pred_region
        %s170 = ssub.s32 %s15, 1
        %s171 = sand.u32 %s40, 1
        %s172 = scalar_lea.sflag [#allocation3], %s171
        %s173 = sand.u32 %s40, 1
        %s174 = smul.addr %s173, 256
        %s175 = scalar_lea.vmem [#allocation2], %s174
        // Predicated region
        $region29: #{llama_attention.5} parent=27 // pred_check
          %p176 = pneg %p53
        $region30: #{llama_attention.5} parent=27 // pred_check_branch
          %178 = sbr.rel (%p176) target = $region32
        $region31: #{llama_attention.5} parent=27 // pred_region
          %179 = dma.done %s172, 4096
        $region32: #{llama_attention.5} parent=27 // pred_fallthru
          _
        // Predicated region
        $region33: #{llama_attention.5} parent=27 // pred_check
          %p180 = pneg %p79
        $region34: #{llama_attention.5} parent=27 // pred_check_branch
          %182 = sbr.rel (%p180) target = $region36
        $region35: #{llama_attention.5} parent=27 // pred_region
          %183 = dma.done [#allocation6], 4096
        $region36: #{llama_attention.5} parent=27 // pred_fallthru
          _
        %s184 = sand.u32 %s40, 1
        %s185 = scalar_lea.sflag [#allocation3], %s184
        %s186 = sand.u32 %s40, 1
        %s187 = smul.addr %s186, 256
        %s188 = scalar_lea.vmem [#allocation2], %s187
        %p189 = pneg %p53
        %p190 = pneg %p50
        %p191 = pneg %p79
        %p192 = pneg %p76
        %p193 = pneg %p107
        %p194 = pneg %p104
        %s195 = sand.u32 %s94, 1
        %s196 = scalar_lea.sflag [#allocation4], %s195
        %s197 = sand.u32 %s94, 1
        %s198 = smul.addr %s197, 512
        %s199 = scalar_lea.vmem [#allocation7], %s198
        %s200 = smul.u32 32, %s24
        %s201 = smul.u32 2, %s25
        %s202 = smul.u32 32, %s24
        %s203 = smul.u32 2, %s25
        %v204 = vld [vmem:[%s175] sm:$0xff]
        %v205 = vld [vmem:[%s175 + $0x8] sm:$0xff]
        %v206 = vld [vmem:[%s175 + $0x10] sm:$0xff]
        %v207 = vld [vmem:[%s175 + $0x18] sm:$0xff]
        %v208 = vld [vmem:[%s175 + $0x20] sm:$0xff]
        %v209 = vld [vmem:[%s175 + $0x28] sm:$0xff]
        %v210 = vld [vmem:[%s175 + $0x30] sm:$0xff]
        %v211 = vld [vmem:[%s175 + $0x38] sm:$0xff]
        %v212 = vld [vmem:[%s175 + $0x40] sm:$0xff]
        %v213 = vld [vmem:[%s175 + $0x48] sm:$0xff]
        %v214 = vld [vmem:[%s175 + $0x50] sm:$0xff]
        %v215 = vld [vmem:[%s175 + $0x58] sm:$0xff]
        %v216 = vld [vmem:[%s175 + $0x60] sm:$0xff]
        %v217 = vld [vmem:[%s175 + $0x68] sm:$0xff]
        %v218 = vld [vmem:[%s175 + $0x70] sm:$0xff]
        %v219 = vld [vmem:[%s175 + $0x78] sm:$0xff]
        %v220 = vld [vmem:[%s175 + $0x80] sm:$0xff]
        %v221 = vld [vmem:[%s175 + $0x88] sm:$0xff]
        %v222 = vld [vmem:[%s175 + $0x90] sm:$0xff]
        %v223 = vld [vmem:[%s175 + $0x98] sm:$0xff]
        %v224 = vld [vmem:[%s175 + $0xa0] sm:$0xff]
        %v225 = vld [vmem:[%s175 + $0xa8] sm:$0xff]
        %v226 = vld [vmem:[%s175 + $0xb0] sm:$0xff]
        %v227 = vld [vmem:[%s175 + $0xb8] sm:$0xff]
        %v228 = vld [vmem:[%s175 + $0xc0] sm:$0xff]
        %v229 = vld [vmem:[%s175 + $0xc8] sm:$0xff]
        %v230 = vld [vmem:[%s175 + $0xd0] sm:$0xff]
        %v231 = vld [vmem:[%s175 + $0xd8] sm:$0xff]
        %v232 = vld [vmem:[%s175 + $0xe0] sm:$0xff]
        %v233 = vld [vmem:[%s175 + $0xe8] sm:$0xff]
        %v234 = vld [vmem:[%s175 + $0xf0] sm:$0xff]
        %v235 = vld [vmem:[%s175 + $0xf8] sm:$0xff]
        %v236 = vld [vmem:[#allocation5] sm:$0xff]
        %v237 = vld [vmem:[#allocation5 + $0x8] sm:$0xff]
        %v238 = vld [vmem:[#allocation5 + $0x10] sm:$0xff]
        %v239 = vld [vmem:[#allocation5 + $0x18] sm:$0xff]
        %v240 = vld [vmem:[#allocation5 + $0x20] sm:$0xff]
        %v241 = vld [vmem:[#allocation5 + $0x28] sm:$0xff]
        %v242 = vld [vmem:[#allocation5 + $0x30] sm:$0xff]
        %v243 = vld [vmem:[#allocation5 + $0x38] sm:$0xff]
        %v244 = vld [vmem:[#allocation5 + $0x40] sm:$0xff]
        %v245 = vld [vmem:[#allocation5 + $0x48] sm:$0xff]
        %v246 = vld [vmem:[#allocation5 + $0x50] sm:$0xff]
        %v247 = vld [vmem:[#allocation5 + $0x58] sm:$0xff]
        %v248 = vld [vmem:[#allocation5 + $0x60] sm:$0xff]
        %v249 = vld [vmem:[#allocation5 + $0x68] sm:$0xff]
        %v250 = vld [vmem:[#allocation5 + $0x70] sm:$0xff]
        %v251 = vld [vmem:[#allocation5 + $0x78] sm:$0xff]
        %v252 = vld [vmem:[#allocation5 + $0x80] sm:$0xff]
        %v253 = vld [vmem:[#allocation5 + $0x88] sm:$0xff]
        %v254 = vld [vmem:[#allocation5 + $0x90] sm:$0xff]
        %v255 = vld [vmem:[#allocation5 + $0x98] sm:$0xff]
        %v256 = vld [vmem:[#allocation5 + $0xa0] sm:$0xff]
        %v257 = vld [vmem:[#allocation5 + $0xa8] sm:$0xff]
        %v258 = vld [vmem:[#allocation5 + $0xb0] sm:$0xff]
        %v259 = vld [vmem:[#allocation5 + $0xb8] sm:$0xff]
        %v260 = vld [vmem:[#allocation5 + $0xc0] sm:$0xff]
        %v261 = vld [vmem:[#allocation5 + $0xc8] sm:$0xff]
        %v262 = vld [vmem:[#allocation5 + $0xd0] sm:$0xff]
        %v263 = vld [vmem:[#allocation5 + $0xd8] sm:$0xff]
        %v264 = vld [vmem:[#allocation5 + $0xe0] sm:$0xff]
        %v265 = vld [vmem:[#allocation5 + $0xe8] sm:$0xff]
        %v266 = vld [vmem:[#allocation5 + $0xf0] sm:$0xff]
        %v267 = vld [vmem:[#allocation5 + $0xf8] sm:$0xff]
        %v300 = vunpack.c.l.b16 %v204
        %v301 = vunpack.c.h.b16 %v204
        %v302 = vunpack.c.l.b16 %v205
        %v303 = vunpack.c.h.b16 %v205
        %v304 = vunpack.c.l.b16 %v206
        %v305 = vunpack.c.h.b16 %v206
        %v306 = vunpack.c.l.b16 %v207
        %v307 = vunpack.c.h.b16 %v207
        %v308 = vunpack.c.l.b16 %v208
        %v309 = vunpack.c.h.b16 %v208
        %v310 = vunpack.c.l.b16 %v209
        %v311 = vunpack.c.h.b16 %v209
        %v312 = vunpack.c.l.b16 %v210
        %v313 = vunpack.c.h.b16 %v210
        %v314 = vunpack.c.l.b16 %v211
        %v315 = vunpack.c.h.b16 %v211
        %v316 = vunpack.c.l.b16 %v212
        %v317 = vunpack.c.h.b16 %v212
        %v318 = vunpack.c.l.b16 %v213
        %v319 = vunpack.c.h.b16 %v213
        %v320 = vunpack.c.l.b16 %v214
        %v321 = vunpack.c.h.b16 %v214
        %v322 = vunpack.c.l.b16 %v215
        %v323 = vunpack.c.h.b16 %v215
        %v324 = vunpack.c.l.b16 %v216
        %v325 = vunpack.c.h.b16 %v216
        %v326 = vunpack.c.l.b16 %v217
        %v327 = vunpack.c.h.b16 %v217
        %v328 = vunpack.c.l.b16 %v218
        %v329 = vunpack.c.h.b16 %v218
        %v330 = vunpack.c.l.b16 %v219
        %v331 = vunpack.c.h.b16 %v219
        %v332 = vunpack.c.l.b16 %v220
        %v333 = vunpack.c.h.b16 %v220
        %v334 = vunpack.c.l.b16 %v221
        %v335 = vunpack.c.h.b16 %v221
        %v336 = vunpack.c.l.b16 %v222
        %v337 = vunpack.c.h.b16 %v222
        %v338 = vunpack.c.l.b16 %v223
        %v339 = vunpack.c.h.b16 %v223
        %v340 = vunpack.c.l.b16 %v224
        %v341 = vunpack.c.h.b16 %v224
        %v342 = vunpack.c.l.b16 %v225
        %v343 = vunpack.c.h.b16 %v225
        %v344 = vunpack.c.l.b16 %v226
        %v345 = vunpack.c.h.b16 %v226
        %v346 = vunpack.c.l.b16 %v227
        %v347 = vunpack.c.h.b16 %v227
        %v348 = vunpack.c.l.b16 %v228
        %v349 = vunpack.c.h.b16 %v228
        %v350 = vunpack.c.l.b16 %v229
        %v351 = vunpack.c.h.b16 %v229
        %v352 = vunpack.c.l.b16 %v230
        %v353 = vunpack.c.h.b16 %v230
        %v354 = vunpack.c.l.b16 %v231
        %v355 = vunpack.c.h.b16 %v231
        %v356 = vunpack.c.l.b16 %v232
        %v357 = vunpack.c.h.b16 %v232
        %v358 = vunpack.c.l.b16 %v233
        %v359 = vunpack.c.h.b16 %v233
        %v360 = vunpack.c.l.b16 %v234
        %v361 = vunpack.c.h.b16 %v234
        %v362 = vunpack.c.l.b16 %v235
        %v363 = vunpack.c.h.b16 %v235
        %v364 = vpack.c.b16 %v302, %v300
        %v365 = vpack.c.b16 %v303, %v301
        %v366 = vpack.c.b16 %v306, %v304
        %v367 = vpack.c.b16 %v307, %v305
        %v368 = vpack.c.b16 %v310, %v308
        %v369 = vpack.c.b16 %v311, %v309
        %v370 = vpack.c.b16 %v314, %v312
        %v371 = vpack.c.b16 %v315, %v313
        %v372 = vpack.c.b16 %v318, %v316
        %v373 = vpack.c.b16 %v319, %v317
        %v374 = vpack.c.b16 %v322, %v320
        %v375 = vpack.c.b16 %v323, %v321
        %v376 = vpack.c.b16 %v326, %v324
        %v377 = vpack.c.b16 %v327, %v325
        %v378 = vpack.c.b16 %v330, %v328
        %v379 = vpack.c.b16 %v331, %v329
        %v380 = vpack.c.b16 %v334, %v332
        %v381 = vpack.c.b16 %v335, %v333
        %v382 = vpack.c.b16 %v338, %v336
        %v383 = vpack.c.b16 %v339, %v337
        %v384 = vpack.c.b16 %v342, %v340
        %v385 = vpack.c.b16 %v343, %v341
        %v386 = vpack.c.b16 %v346, %v344
        %v387 = vpack.c.b16 %v347, %v345
        %v388 = vpack.c.b16 %v350, %v348
        %v389 = vpack.c.b16 %v351, %v349
        %v390 = vpack.c.b16 %v354, %v352
        %v391 = vpack.c.b16 %v355, %v353
        %v392 = vpack.c.b16 %v358, %v356
        %v393 = vpack.c.b16 %v359, %v357
        %v394 = vpack.c.b16 %v362, %v360
        %v395 = vpack.c.b16 %v363, %v361
        %v460 = vunpack.c.l.b16 %v236
        %v461 = vunpack.c.h.b16 %v236
        %v462 = vunpack.c.l.b16 %v237
        %v463 = vunpack.c.h.b16 %v237
        %v464 = vunpack.c.l.b16 %v238
        %v465 = vunpack.c.h.b16 %v238
        %v466 = vunpack.c.l.b16 %v239
        %v467 = vunpack.c.h.b16 %v239
        %v468 = vunpack.c.l.b16 %v240
        %v469 = vunpack.c.h.b16 %v240
        %v470 = vunpack.c.l.b16 %v241
        %v471 = vunpack.c.h.b16 %v241
        %v472 = vunpack.c.l.b16 %v242
        %v473 = vunpack.c.h.b16 %v242
        %v474 = vunpack.c.l.b16 %v243
        %v475 = vunpack.c.h.b16 %v243
        %v476 = vunpack.c.l.b16 %v244
        %v477 = vunpack.c.h.b16 %v244
        %v478 = vunpack.c.l.b16 %v245
        %v479 = vunpack.c.h.b16 %v245
        %v480 = vunpack.c.l.b16 %v246
        %v481 = vunpack.c.h.b16 %v246
        %v482 = vunpack.c.l.b16 %v247
        %v483 = vunpack.c.h.b16 %v247
        %v484 = vunpack.c.l.b16 %v248
        %v485 = vunpack.c.h.b16 %v248
        %v486 = vunpack.c.l.b16 %v249
        %v487 = vunpack.c.h.b16 %v249
        %v488 = vunpack.c.l.b16 %v250
        %v489 = vunpack.c.h.b16 %v250
        %v490 = vunpack.c.l.b16 %v251
        %v491 = vunpack.c.h.b16 %v251
        %v492 = vunpack.c.l.b16 %v252
        %v493 = vunpack.c.h.b16 %v252
        %v494 = vunpack.c.l.b16 %v253
        %v495 = vunpack.c.h.b16 %v253
        %v496 = vunpack.c.l.b16 %v254
        %v497 = vunpack.c.h.b16 %v254
        %v498 = vunpack.c.l.b16 %v255
        %v499 = vunpack.c.h.b16 %v255
        %v500 = vunpack.c.l.b16 %v256
        %v501 = vunpack.c.h.b16 %v256
        %v502 = vunpack.c.l.b16 %v257
        %v503 = vunpack.c.h.b16 %v257
        %v504 = vunpack.c.l.b16 %v258
        %v505 = vunpack.c.h.b16 %v258
        %v506 = vunpack.c.l.b16 %v259
        %v507 = vunpack.c.h.b16 %v259
        %v508 = vunpack.c.l.b16 %v260
        %v509 = vunpack.c.h.b16 %v260
        %v510 = vunpack.c.l.b16 %v261
        %v511 = vunpack.c.h.b16 %v261
        %v512 = vunpack.c.l.b16 %v262
        %v513 = vunpack.c.h.b16 %v262
        %v514 = vunpack.c.l.b16 %v263
        %v515 = vunpack.c.h.b16 %v263
        %v516 = vunpack.c.l.b16 %v264
        %v517 = vunpack.c.h.b16 %v264
        %v518 = vunpack.c.l.b16 %v265
        %v519 = vunpack.c.h.b16 %v265
        %v520 = vunpack.c.l.b16 %v266
        %v521 = vunpack.c.h.b16 %v266
        %v522 = vunpack.c.l.b16 %v267
        %v523 = vunpack.c.h.b16 %v267
        %v524 = vpack.c.b16 %v462, %v460
        %v525 = vpack.c.b16 %v463, %v461
        %v526 = vpack.c.b16 %v466, %v464
        %v527 = vpack.c.b16 %v467, %v465
        %v528 = vpack.c.b16 %v470, %v468
        %v529 = vpack.c.b16 %v471, %v469
        %v530 = vpack.c.b16 %v474, %v472
        %v531 = vpack.c.b16 %v475, %v473
        %v532 = vpack.c.b16 %v478, %v476
        %v533 = vpack.c.b16 %v479, %v477
        %v534 = vpack.c.b16 %v482, %v480
        %v535 = vpack.c.b16 %v483, %v481
        %v536 = vpack.c.b16 %v486, %v484
        %v537 = vpack.c.b16 %v487, %v485
        %v538 = vpack.c.b16 %v490, %v488
        %v539 = vpack.c.b16 %v491, %v489
        %v540 = vpack.c.b16 %v494, %v492
        %v541 = vpack.c.b16 %v495, %v493
        %v542 = vpack.c.b16 %v498, %v496
        %v543 = vpack.c.b16 %v499, %v497
        %v544 = vpack.c.b16 %v502, %v500
        %v545 = vpack.c.b16 %v503, %v501
        %v546 = vpack.c.b16 %v506, %v504
        %v547 = vpack.c.b16 %v507, %v505
        %v548 = vpack.c.b16 %v510, %v508
        %v549 = vpack.c.b16 %v511, %v509
        %v550 = vpack.c.b16 %v514, %v512
        %v551 = vpack.c.b16 %v515, %v513
        %v552 = vpack.c.b16 %v518, %v516
        %v553 = vpack.c.b16 %v519, %v517
        %v554 = vpack.c.b16 %v522, %v520
        %v555 = vpack.c.b16 %v523, %v521
        %588 = vmatprep.subr.bf16.mxu0 %v525
        %589 = vmatpush1.bf16.msra.mxu0 %v524
        %590 = vmatprep.subr.bf16.mxu0 %v527
        %591 = vmatpush1.bf16.msra.mxu0 %v526
        %592 = vmatprep.subr.bf16.mxu0 %v529
        %593 = vmatpush1.bf16.msra.mxu0 %v528
        %594 = vmatprep.subr.bf16.mxu0 %v531
        %595 = vmatpush1.bf16.msra.mxu0 %v530
        %596 = vmatprep.subr.bf16.mxu0 %v533
        %597 = vmatpush1.bf16.msra.mxu0 %v532
        %598 = vmatprep.subr.bf16.mxu0 %v535
        %599 = vmatpush1.bf16.msra.mxu0 %v534
        %600 = vmatprep.subr.bf16.mxu0 %v537
        %601 = vmatpush1.bf16.msra.mxu0 %v536
        %602 = vmatprep.subr.bf16.mxu0 %v539
        %603 = vmatpush1.bf16.msra.mxu0 %v538
        %604 = vmatprep.subr.bf16.mxu0 %v541
        %605 = vmatpush1.bf16.msra.mxu0 %v540
        %606 = vmatprep.subr.bf16.mxu0 %v543
        %607 = vmatpush1.bf16.msra.mxu0 %v542
        %608 = vmatprep.subr.bf16.mxu0 %v545
        %609 = vmatpush1.bf16.msra.mxu0 %v544
        %610 = vmatprep.subr.bf16.mxu0 %v547
        %611 = vmatpush1.bf16.msra.mxu0 %v546
        %612 = vmatprep.subr.bf16.mxu0 %v549
        %613 = vmatpush1.bf16.msra.mxu0 %v548
        %614 = vmatprep.subr.bf16.mxu0 %v551
        %615 = vmatpush1.bf16.msra.mxu0 %v550
        %616 = vmatprep.subr.bf16.mxu0 %v553
        %617 = vmatpush1.bf16.msra.mxu0 %v552
        %618 = vmatprep.subr.bf16.mxu0 %v555
        %619 = vmatpush1.bf16.msra.mxu0 %v554
        %620 = vmatprep.mubr.bf16.mxu0 %v365
        %621 = vmatmul.mubr.bf16.gmra.mrb[0].mxu0 %v364
        %v622 = vpop.f32.mrb[0].mxu0
        %v623 = vadd.f32 0.0, %v622
        %v624 = vpop.f32.mrb[0].mxu0
        %v625 = vadd.f32 0.0, %v624
        %v626 = vpop.f32.mrb[0].mxu0
        %v627 = vadd.f32 0.0, %v626
        %v628 = vpop.f32.mrb[0].mxu0
        %v629 = vadd.f32 0.0, %v628
        %630 = vmatprep.mubr.bf16.mxu0 %v367
        %631 = vmatmul.mubr.bf16.gmra.mrb[0].mxu0 %v366
        %v632 = vpop.f32.mrb[0].mxu0
        %v633 = vadd.f32 0.0, %v632
        %v634 = vpop.f32.mrb[0].mxu0
        %v635 = vadd.f32 0.0, %v634
        %v636 = vpop.f32.mrb[0].mxu0
        %v637 = vadd.f32 0.0, %v636
        %v638 = vpop.f32.mrb[0].mxu0
        %v639 = vadd.f32 0.0, %v638
        %640 = vmatprep.mubr.bf16.mxu0 %v369
        %641 = vmatmul.mubr.bf16.gmra.mrb[0].mxu0 %v368
        %v642 = vpop.f32.mrb[0].mxu0
        %v643 = vadd.f32 0.0, %v642
        %v644 = vpop.f32.mrb[0].mxu0
        %v645 = vadd.f32 0.0, %v644
        %v646 = vpop.f32.mrb[0].mxu0
        %v647 = vadd.f32 0.0, %v646
        %v648 = vpop.f32.mrb[0].mxu0
        %v649 = vadd.f32 0.0, %v648
        %650 = vmatprep.mubr.bf16.mxu0 %v371
        %651 = vmatmul.mubr.bf16.gmra.mrb[0].mxu0 %v370
        %v652 = vpop.f32.mrb[0].mxu0
        %v653 = vadd.f32 0.0, %v652
        %v654 = vpop.f32.mrb[0].mxu0
        %v655 = vadd.f32 0.0, %v654
        %v656 = vpop.f32.mrb[0].mxu0
        %v657 = vadd.f32 0.0, %v656
        %v658 = vpop.f32.mrb[0].mxu0
        %v659 = vadd.f32 0.0, %v658
        %660 = vmatprep.mubr.bf16.mxu0 %v373
        %661 = vmatmul.mubr.bf16.gmra.mrb[0].mxu0 %v372
        %v662 = vpop.f32.mrb[0].mxu0
        %v663 = vadd.f32 0.0, %v662
        %v664 = vpop.f32.mrb[0].mxu0
        %v665 = vadd.f32 0.0, %v664
        %v666 = vpop.f32.mrb[0].mxu0
        %v667 = vadd.f32 0.0, %v666
        %v668 = vpop.f32.mrb[0].mxu0
        %v669 = vadd.f32 0.0, %v668
        %670 = vmatprep.mubr.bf16.mxu0 %v375
        %671 = vmatmul.mubr.bf16.gmra.mrb[0].mxu0 %v374
        %v672 = vpop.f32.mrb[0].mxu0
        %v673 = vadd.f32 0.0, %v672
        %v674 = vpop.f32.mrb[0].mxu0
        %v675 = vadd.f32 0.0, %v674
        %v676 = vpop.f32.mrb[0].mxu0
        %v677 = vadd.f32 0.0, %v676
        %v678 = vpop.f32.mrb[0].mxu0
        %v679 = vadd.f32 0.0, %v678
        %680 = vmatprep.mubr.bf16.mxu0 %v377
        %681 = vmatmul.mubr.bf16.gmra.mrb[0].mxu0 %v376
        %v682 = vpop.f32.mrb[0].mxu0
        %v683 = vadd.f32 0.0, %v682
        %v684 = vpop.f32.mrb[0].mxu0
        %v685 = vadd.f32 0.0, %v684
        %v686 = vpop.f32.mrb[0].mxu0
        %v687 = vadd.f32 0.0, %v686
        %v688 = vpop.f32.mrb[0].mxu0
        %v689 = vadd.f32 0.0, %v688
        %690 = vmatprep.mubr.bf16.mxu0 %v379
        %691 = vmatmul.mubr.bf16.gmra.mrb[0].mxu0 %v378
        %v692 = vpop.f32.mrb[0].mxu0
        %v693 = vadd.f32 0.0, %v692
        %v694 = vpop.f32.mrb[0].mxu0
        %v695 = vadd.f32 0.0, %v694
        %v696 = vpop.f32.mrb[0].mxu0
        %v697 = vadd.f32 0.0, %v696
        %v698 = vpop.f32.mrb[0].mxu0
        %v699 = vadd.f32 0.0, %v698
        %700 = vmatprep.mubr.bf16.mxu0 %v381
        %701 = vmatmul.mubr.bf16.gmra.mrb[0].mxu0 %v380
        %v702 = vpop.f32.mrb[0].mxu0
        %v703 = vadd.f32 0.0, %v702
        %v704 = vpop.f32.mrb[0].mxu0
        %v705 = vadd.f32 0.0, %v704
        %v706 = vpop.f32.mrb[0].mxu0
        %v707 = vadd.f32 0.0, %v706
        %v708 = vpop.f32.mrb[0].mxu0
        %v709 = vadd.f32 0.0, %v708
        %710 = vmatprep.mubr.bf16.mxu0 %v383
        %711 = vmatmul.mubr.bf16.gmra.mrb[0].mxu0 %v382
        %v712 = vpop.f32.mrb[0].mxu0
        %v713 = vadd.f32 0.0, %v712
        %v714 = vpop.f32.mrb[0].mxu0
        %v715 = vadd.f32 0.0, %v714
        %v716 = vpop.f32.mrb[0].mxu0
        %v717 = vadd.f32 0.0, %v716
        %v718 = vpop.f32.mrb[0].mxu0
        %v719 = vadd.f32 0.0, %v718
        %720 = vmatprep.mubr.bf16.mxu0 %v385
        %721 = vmatmul.mubr.bf16.gmra.mrb[0].mxu0 %v384
        %v722 = vpop.f32.mrb[0].mxu0
        %v723 = vadd.f32 0.0, %v722
        %v724 = vpop.f32.mrb[0].mxu0
        %v725 = vadd.f32 0.0, %v724
        %v726 = vpop.f32.mrb[0].mxu0
        %v727 = vadd.f32 0.0, %v726
        %v728 = vpop.f32.mrb[0].mxu0
        %v729 = vadd.f32 0.0, %v728
        %730 = vmatprep.mubr.bf16.mxu0 %v387
        %731 = vmatmul.mubr.bf16.gmra.mrb[0].mxu0 %v386
        %v732 = vpop.f32.mrb[0].mxu0
        %v733 = vadd.f32 0.0, %v732
        %v734 = vpop.f32.mrb[0].mxu0
        %v735 = vadd.f32 0.0, %v734
        %v736 = vpop.f32.mrb[0].mxu0
        %v737 = vadd.f32 0.0, %v736
        %v738 = vpop.f32.mrb[0].mxu0
        %v739 = vadd.f32 0.0, %v738
        %740 = vmatprep.mubr.bf16.mxu0 %v389
        %741 = vmatmul.mubr.bf16.gmra.mrb[0].mxu0 %v388
        %v742 = vpop.f32.mrb[0].mxu0
        %v743 = vadd.f32 0.0, %v742
        %v744 = vpop.f32.mrb[0].mxu0
        %v745 = vadd.f32 0.0, %v744
        %v746 = vpop.f32.mrb[0].mxu0
        %v747 = vadd.f32 0.0, %v746
        %v748 = vpop.f32.mrb[0].mxu0
        %v749 = vadd.f32 0.0, %v748
        %750 = vmatprep.mubr.bf16.mxu0 %v391
        %751 = vmatmul.mubr.bf16.gmra.mrb[0].mxu0 %v390
        %v752 = vpop.f32.mrb[0].mxu0
        %v753 = vadd.f32 0.0, %v752
        %v754 = vpop.f32.mrb[0].mxu0
        %v755 = vadd.f32 0.0, %v754
        %v756 = vpop.f32.mrb[0].mxu0
        %v757 = vadd.f32 0.0, %v756
        %v758 = vpop.f32.mrb[0].mxu0
        %v759 = vadd.f32 0.0, %v758
        %760 = vmatprep.mubr.bf16.mxu0 %v393
        %761 = vmatmul.mubr.bf16.gmra.mrb[0].mxu0 %v392
        %v762 = vpop.f32.mrb[0].mxu0
        %v763 = vadd.f32 0.0, %v762
        %v764 = vpop.f32.mrb[0].mxu0
        %v765 = vadd.f32 0.0, %v764
        %v766 = vpop.f32.mrb[0].mxu0
        %v767 = vadd.f32 0.0, %v766
        %v768 = vpop.f32.mrb[0].mxu0
        %v769 = vadd.f32 0.0, %v768
        %770 = vmatprep.mubr.bf16.mxu0 %v395
        %771 = vmatmul.mubr.bf16.gmra.mrb[0].mxu0 %v394
        %v772 = vpop.f32.mrb[0].mxu0
        %v773 = vadd.f32 0.0, %v772
        %v774 = vpop.f32.mrb[0].mxu0
        %v775 = vadd.f32 0.0, %v774
        %v776 = vpop.f32.mrb[0].mxu0
        %v777 = vadd.f32 0.0, %v776
        %v778 = vpop.f32.mrb[0].mxu0
        %v779 = vadd.f32 0.0, %v778
        %780 = vdwg.mxu0
        %781 = vst [vmem:[%s199] sm:$0xff] %v623
        %782 = vst [vmem:[%s199 + $0x8] sm:$0xff] %v625
        %783 = vst [vmem:[%s199 + $0x10] sm:$0xff] %v627
        %784 = vst [vmem:[%s199 + $0x18] sm:$0xff] %v629
        %785 = vst [vmem:[%s199 + $0x20] sm:$0xff] %v633
        %786 = vst [vmem:[%s199 + $0x28] sm:$0xff] %v635
        %787 = vst [vmem:[%s199 + $0x30] sm:$0xff] %v637
        %788 = vst [vmem:[%s199 + $0x38] sm:$0xff] %v639
        %789 = vst [vmem:[%s199 + $0x40] sm:$0xff] %v643
        %790 = vst [vmem:[%s199 + $0x48] sm:$0xff] %v645
        %791 = vst [vmem:[%s199 + $0x50] sm:$0xff] %v647
        %792 = vst [vmem:[%s199 + $0x58] sm:$0xff] %v649
        %793 = vst [vmem:[%s199 + $0x60] sm:$0xff] %v653
        %794 = vst [vmem:[%s199 + $0x68] sm:$0xff] %v655
        %795 = vst [vmem:[%s199 + $0x70] sm:$0xff] %v657
        %796 = vst [vmem:[%s199 + $0x78] sm:$0xff] %v659
        %797 = vst [vmem:[%s199 + $0x80] sm:$0xff] %v663
        %798 = vst [vmem:[%s199 + $0x88] sm:$0xff] %v665
        %799 = vst [vmem:[%s199 + $0x90] sm:$0xff] %v667
        %800 = vst [vmem:[%s199 + $0x98] sm:$0xff] %v669
        %801 = vst [vmem:[%s199 + $0xa0] sm:$0xff] %v673
        %802 = vst [vmem:[%s199 + $0xa8] sm:$0xff] %v675
        %803 = vst [vmem:[%s199 + $0xb0] sm:$0xff] %v677
        %804 = vst [vmem:[%s199 + $0xb8] sm:$0xff] %v679
        %805 = vst [vmem:[%s199 + $0xc0] sm:$0xff] %v683
        %806 = vst [vmem:[%s199 + $0xc8] sm:$0xff] %v685
        %807 = vst [vmem:[%s199 + $0xd0] sm:$0xff] %v687
        %808 = vst [vmem:[%s199 + $0xd8] sm:$0xff] %v689
        %809 = vst [vmem:[%s199 + $0xe0] sm:$0xff] %v693
        %810 = vst [vmem:[%s199 + $0xe8] sm:$0xff] %v695
        %811 = vst [vmem:[%s199 + $0xf0] sm:$0xff] %v697
        %812 = vst [vmem:[%s199 + $0xf8] sm:$0xff] %v699
        %813 = vst [vmem:[%s199 + $0x100] sm:$0xff] %v703
        %814 = vst [vmem:[%s199 + $0x108] sm:$0xff] %v705
        %815 = vst [vmem:[%s199 + $0x110] sm:$0xff] %v707
        %816 = vst [vmem:[%s199 + $0x118] sm:$0xff] %v709
        %817 = vst [vmem:[%s199 + $0x120] sm:$0xff] %v713
        %818 = vst [vmem:[%s199 + $0x128] sm:$0xff] %v715
        %819 = vst [vmem:[%s199 + $0x130] sm:$0xff] %v717
        %820 = vst [vmem:[%s199 + $0x138] sm:$0xff] %v719
        %821 = vst [vmem:[%s199 + $0x140] sm:$0xff] %v723
        %822 = vst [vmem:[%s199 + $0x148] sm:$0xff] %v725
        %823 = vst [vmem:[%s199 + $0x150] sm:$0xff] %v727
        %824 = vst [vmem:[%s199 + $0x158] sm:$0xff] %v729
        %825 = vst [vmem:[%s199 + $0x160] sm:$0xff] %v733
        %826 = vst [vmem:[%s199 + $0x168] sm:$0xff] %v735
        %827 = vst [vmem:[%s199 + $0x170] sm:$0xff] %v737
        %828 = vst [vmem:[%s199 + $0x178] sm:$0xff] %v739
        %829 = vst [vmem:[%s199 + $0x180] sm:$0xff] %v743
        %830 = vst [vmem:[%s199 + $0x188] sm:$0xff] %v745
        %831 = vst [vmem:[%s199 + $0x190] sm:$0xff] %v747
        %832 = vst [vmem:[%s199 + $0x198] sm:$0xff] %v749
        %833 = vst [vmem:[%s199 + $0x1a0] sm:$0xff] %v753
        %834 = vst [vmem:[%s199 + $0x1a8] sm:$0xff] %v755
        %835 = vst [vmem:[%s199 + $0x1b0] sm:$0xff] %v757
        %836 = vst [vmem:[%s199 + $0x1b8] sm:$0xff] %v759
        %837 = vst [vmem:[%s199 + $0x1c0] sm:$0xff] %v763
        %838 = vst [vmem:[%s199 + $0x1c8] sm:$0xff] %v765
        %839 = vst [vmem:[%s199 + $0x1d0] sm:$0xff] %v767
        %840 = vst [vmem:[%s199 + $0x1d8] sm:$0xff] %v769
        %841 = vst [vmem:[%s199 + $0x1e0] sm:$0xff] %v773
        %842 = vst [vmem:[%s199 + $0x1e8] sm:$0xff] %v775
        %843 = vst [vmem:[%s199 + $0x1f0] sm:$0xff] %v777
        %844 = vst [vmem:[%s199 + $0x1f8] sm:$0xff] %v779
        %s845 = sand.u32 %s94, 1
        %s846 = scalar_lea.sflag [#allocation4], %s845
        %s847 = sand.u32 %s94, 1
        %s848 = smul.addr %s847, 512
        %s849 = scalar_lea.vmem [#allocation7], %s848
        // Predicated region
        $region37: #{llama_attention.5} parent=27 // pred_check
          %p850 = pneg %p104
        $region38: #{llama_attention.5} parent=27 // pred_check_branch
          %852 = sbr.rel (%p850) target = $region40
        $region39: #{llama_attention.5} parent=27 // pred_region
          %s853 = smul.u32 32, %s24
          %s854 = smul.u32 2, %s25
          %s856 = ssub.s32 8192, 8192
          %857 = vsyncadd %s846, %s856
          %s858 = smul.addr %s853, 2
          %s859 = sadd.s32 %s854, %s858
          %s860 = smul.addr %s859, 128
          %s861 = scalar_lea.hbm %s2, %s860
          %s862 = sshll.u32 %s849, 4
          %s863 = int_to_ptr.vmem [resolvable:$true] %s862
          %868 = dma.vmem_to_hbm [thread:$0]  %s863, 8192, %s861, %s846, 256, 256, 16
        $region40: #{llama_attention.5} parent=27 // pred_fallthru
          _
      $region28: #{llama_attention.5} parent=5 // pred_fallthru
        _
      %p869 = scmp.le.s32.totalorder 2, %s15
      // Predicated region
      $region41: #{llama_attention.5} parent=5 // pred_check
        %p870 = pneg %p869
      $region42: #{llama_attention.5} parent=5 // pred_check_branch
        %872 = sbr.rel (%p870) target = $region44
      $region43: #{llama_attention.5} parent=5 // pred_region
        %s873 = ssub.s32 %s15, 2
        // Predicated region
        $region45: #{llama_attention.5} parent=43 // pred_check
          %p874 = pneg %p110
        $region46: #{llama_attention.5} parent=43 // pred_check_branch
          %876 = sbr.rel (%p874) target = $region48
        $region47: #{llama_attention.5} parent=43 // pred_region
          %s877 = sand.u32 %s95, 1
          %s878 = scalar_lea.sflag [#allocation4], %s877
          %s879 = sand.u32 %s95, 1
          %s880 = smul.addr %s879, 512
          %s881 = scalar_lea.vmem [#allocation7], %s880
          %882 = dma.done %s878, 8192
        $region48: #{llama_attention.5} parent=43 // pred_fallthru
          _
      $region44: #{llama_attention.5} parent=5 // pred_fallthru
        _
    $region6: #{llama_attention.5} parent=1 // loop_footer
      %s19 = sadd.s32 1, %s15
    $region7: #{llama_attention.5} parent=1 // loop_footer_branch
      %14 = sbr.rel target = $region3
    $region8: #{llama_attention.5} parent=1 // loop_exit
      _
    %883 = vsyncpa [#allocation3], 1
    %s884 = scalar_lea.sflag [#allocation3], 1
    %885 = vsyncpa %s884, 1
    %886 = vsyncpa [#allocation6], 1
    %887 = vsyncpa [#allocation4], 1
    %s888 = scalar_lea.sflag [#allocation4], 1
    %889 = vsyncpa %s888, 1

// kernel: llama_attention.4
$region0: #{llama_attention.4}
  #allocation0 [shape = 'u32[]', space=smem, size = 0x4, offset = 0x4, fixed_abs, tag = 'smem constant byte address 0x4 - core index']
  #allocation1 [shape = 'u32[144,128]{1,0:T(1,128)}', space=vmem, size = 0x12000, scoped, tag = 'internal scratch']
  #allocation2 [shape = 'f32[256,1]{1,0:T(8,128)}', space=vmem, size = 0x20000, scoped, tag = 'scratch operand']
  #allocation3 [shape = 'f32[256,1]{1,0:T(8,128)}', space=vmem, size = 0x20000, scoped, tag = 'scratch operand']
  #allocation4 [shape = 'f32[256,128]{1,0:T(8,128)}', space=vmem, size = 0x20000, scoped, tag = 'scratch operand']
  %s0 = inlined_call_operand.hbm [shape: bf16[2,256,768], index: 0, kind: input, shape index: {}, may-alias: {0,1,2}]
  %s1 = inlined_call_operand.hbm [shape: bf16[2,256,768], index: 1, kind: input, shape index: {}, may-alias: {0,1,2}]
  %s2 = inlined_call_operand.hbm [shape: bf16[2,256,768], index: 2, kind: input, shape index: {}, may-alias: {0,1,2}]
  %s3 = inlined_call_operand.hbm [shape: f32[2,256,256], index: 3, kind: input, shape index: {}]
  %s4 = inlined_call_operand.hbm [shape: bf16[2,256,256], index: 4, kind: output, shape index: {}]
  %s5 = sld [smem:[#allocation0]]
  $region73: #{llama_attention.4} parent=0
    _
  %s7 = ssub.s32 1, %s5
  %s8 = scalar_select 0, %s7, %s5
  $region1: #{llama_attention.4} parent=0
    #allocation5 [shape = 'u8[131072]{0}', space=vmem, size = 0x20000, scoped, tag = 'input window, operand 0']
    #allocation6 [shape = 's32[2]{0}', space=sflag, size = 0x8, scoped, tag = 'scoped memory for llama_attention.4']
    #allocation7 [shape = 's32[2]{0}', space=sflag, size = 0x8, scoped, tag = 'scoped memory for llama_attention.4']
    #allocation8 [shape = 'u8[131072]{0}', space=vmem, size = 0x20000, scoped, tag = 'input window, operand 1']
    #allocation9 [shape = 's32[2]{0}', space=sflag, size = 0x8, scoped, tag = 'scoped memory for llama_attention.4']
    #allocation10 [shape = 'u8[131072]{0}', space=vmem, size = 0x20000, scoped, tag = 'input window, operand 2']
    #allocation11 [shape = 'u8[524288]{0}', space=vmem, size = 0x80000, scoped, tag = 'input window, operand 3']
    #allocation12 [shape = 's32[2]{0}', space=sflag, size = 0x8, scoped, tag = 'scoped memory for llama_attention.4']
    #allocation13 [shape = 'u8[131072]{0}', space=vmem, size = 0x20000, scoped, tag = 'output window, operand 0']
    %9 = vsyncpa [#allocation6], 0
    %s10 = scalar_lea.sflag [#allocation6], 1
    %11 = vsyncpa %s10, 0
    %12 = vsyncpa [#allocation9], 0
    %s13 = scalar_lea.sflag [#allocation9], 1
    %14 = vsyncpa %s13, 0
    %15 = vsyncpa [#allocation12], 0
    %s16 = scalar_lea.sflag [#allocation12], 1
    %17 = vsyncpa %s16, 0
    %18 = vsyncpa [#allocation7], 0
    %s19 = scalar_lea.sflag [#allocation7], 1
    %20 = vsyncpa %s19, 0
    loop: start=0, step=1, limit=6
    $region2: #{llama_attention.4} parent=1 // loop_pre_header
      _
    $region3: #{llama_attention.4} parent=1 // loop_header
      %s22 = sphi 0, %s26
      %p23 = scmp.ge.s32.totalorder %s22, 6
      %s29 = sphi 0, %s55
      %s30 = sphi 0, %s51
      %s31 = sphi 0, %s47
      %s32 = sphi 0, %s43
      %s33 = sphi 0, %s29
      %s34 = sphi 0, %s30
      %s35 = sphi 0, %s31
      %s36 = sphi 0, %s32
      %s37 = sphi 0, %s33
      %s38 = sphi 0, %s34
      %s39 = sphi 0, %s35
      %s40 = sphi 0, %s36
      %s62 = sphi 0, %s64
      %s65 = sphi 0, %s62
      %s66 = sphi 0, %s65
      %s82 = sphi 0, %s66
      %s94 = sphi 0, %s96
      %s97 = sphi 0, %s94
      %s98 = sphi 0, %s97
      %s114 = sphi 0, %s98
      %s126 = sphi 0, %s128
      %s129 = sphi 0, %s126
      %s130 = sphi 0, %s129
      %s146 = sphi 0, %s130
      %s156 = sphi 0, %s158
      %s159 = sphi 0, %s156
      %s160 = sphi 0, %s159
      %s176 = sphi 0, %s160
      %s186 = sphi 0, %s188
      %s189 = sphi 0, %s186
      %s190 = sphi 0, %s189
      %s206 = sphi 0, %s190
    $region4: #{llama_attention.4} parent=1 // loop_header_branch
      %25 = sbr.rel (%p23) target = $region8
    $region5: #{llama_attention.4} parent=1 // loop_body
      %s27 = ssub.s32 %s22, 1
      %s28 = ssub.s32 %s22, 2
      %s41 = sadd.s32 1, %s32
      %p42 = scmp.ge.s32.totalorder %s41, 1
      %s43 = scalar_select %p42, 0, %s41
      %s44 = sadd.s32 1, %s31
      %s45 = scalar_select %p42, %s44, %s31
      %p46 = scmp.ge.s32.totalorder %s45, 1
      %s47 = scalar_select %p46, 0, %s45
      %s48 = sadd.s32 1, %s30
      %s49 = scalar_select %p46, %s48, %s30
      %p50 = scmp.ge.s32.totalorder %s49, 2
      %s51 = scalar_select %p50, 0, %s49
      %s52 = sadd.s32 1, %s29
      %s53 = scalar_select %p50, %s52, %s29
      %p54 = scmp.ge.s32.totalorder %s53, 2
      %s55 = scalar_select %p54, 0, %s53
      %s56 = ssub.s32 %s29, %s55
      %s57 = ssub.s32 %s31, %s47
      %s58 = sor.u32 %s56, %s57
      %s59 = ssub.s32 %s30, %s51
      %s60 = sor.u32 %s58, %s59
      %p61 = scmp.eq.s32.totalorder %s60, 0
      %s63 = sadd.s32 %s62, 1
      %s64 = scalar_select %p61, %s62, %s63
      %p67 = pneg %p61
      %p68 = scmp.eq.s32.totalorder %s22, 3
      %p69 = por %p67, %p68
      %p70 = scmp.ne.s32.totalorder %s62, %s65
      %p71 = scmp.eq.s32.totalorder %s22, 0
      %p72 = por %p70, %p71
      %p73 = scmp.ne.s32.totalorder %s62, %s65
      %p74 = scmp.eq.s32.totalorder %s27, 3
      %p75 = por %p73, %p74
      %p76 = scmp.ne.s32.totalorder %s65, %s66
      %p77 = scmp.eq.s32.totalorder %s27, 0
      %p78 = por %p76, %p77
      %p79 = scmp.ne.s32.totalorder %s65, %s66
      %p80 = scmp.eq.s32.totalorder %s28, 3
      %p81 = por %p79, %p80
      %p83 = scmp.ne.s32.totalorder %s66, %s82
      %p84 = scmp.eq.s32.totalorder %s28, 0
      %p85 = por %p83, %p84
      %s86 = sadd.s32 %s30, 2
      %s87 = sadd.s32 %s51, 2
      %s88 = ssub.s32 %s29, %s55
      %s89 = ssub.s32 %s32, %s43
      %s90 = sor.u32 %s88, %s89
      %s91 = ssub.s32 %s86, %s87
      %s92 = sor.u32 %s90, %s91
      %p93 = scmp.eq.s32.totalorder %s92, 0
      %s95 = sadd.s32 %s94, 1
      %s96 = scalar_select %p93, %s94, %s95
      %p99 = pneg %p93
      %p100 = scmp.eq.s32.totalorder %s22, 3
      %p101 = por %p99, %p100
      %p102 = scmp.ne.s32.totalorder %s94, %s97
      %p103 = scmp.eq.s32.totalorder %s22, 0
      %p104 = por %p102, %p103
      %p105 = scmp.ne.s32.totalorder %s94, %s97
      %p106 = scmp.eq.s32.totalorder %s27, 3
      %p107 = por %p105, %p106
      %p108 = scmp.ne.s32.totalorder %s97, %s98
      %p109 = scmp.eq.s32.totalorder %s27, 0
      %p110 = por %p108, %p109
      %p111 = scmp.ne.s32.totalorder %s97, %s98
      %p112 = scmp.eq.s32.totalorder %s28, 3
      %p113 = por %p111, %p112
      %p115 = scmp.ne.s32.totalorder %s98, %s114
      %p116 = scmp.eq.s32.totalorder %s28, 0
      %p117 = por %p115, %p116
      %s118 = sadd.s32 %s30, 4
      %s119 = sadd.s32 %s51, 4
      %s120 = ssub.s32 %s29, %s55
      %s121 = ssub.s32 %s32, %s43
      %s122 = sor.u32 %s120, %s121
      %s123 = ssub.s32 %s118, %s119
      %s124 = sor.u32 %s122, %s123
      %p125 = scmp.eq.s32.totalorder %s124, 0
      %s127 = sadd.s32 %s126, 1
      %s128 = scalar_select %p125, %s126, %s127
      %p131 = pneg %p125
      %p132 = scmp.eq.s32.totalorder %s22, 3
      %p133 = por %p131, %p132
      %p134 = scmp.ne.s32.totalorder %s126, %s129
      %p135 = scmp.eq.s32.totalorder %s22, 0
      %p136 = por %p134, %p135
      %p137 = scmp.ne.s32.totalorder %s126, %s129
      %p138 = scmp.eq.s32.totalorder %s27, 3
      %p139 = por %p137, %p138
      %p140 = scmp.ne.s32.totalorder %s129, %s130
      %p141 = scmp.eq.s32.totalorder %s27, 0
      %p142 = por %p140, %p141
      %p143 = scmp.ne.s32.totalorder %s129, %s130
      %p144 = scmp.eq.s32.totalorder %s28, 3
      %p145 = por %p143, %p144
      %p147 = scmp.ne.s32.totalorder %s130, %s146
      %p148 = scmp.eq.s32.totalorder %s28, 0
      %p149 = por %p147, %p148
      %s150 = ssub.s32 %s29, %s55
      %s151 = ssub.s32 %s31, %s47
      %s152 = sor.u32 %s150, %s151
      %s153 = ssub.s32 %s32, %s43
      %s154 = sor.u32 %s152, %s153
      %p155 = scmp.eq.s32.totalorder %s154, 0
      %s157 = sadd.s32 %s156, 1
      %s158 = scalar_select %p155, %s156, %s157
      %p161 = pneg %p155
      %p162 = scmp.eq.s32.totalorder %s22, 3
      %p163 = por %p161, %p162
      %p164 = scmp.ne.s32.totalorder %s156, %s159
      %p165 = scmp.eq.s32.totalorder %s22, 0
      %p166 = por %p164, %p165
      %p167 = scmp.ne.s32.totalorder %s156, %s159
      %p168 = scmp.eq.s32.totalorder %s27, 3
      %p169 = por %p167, %p168
      %p170 = scmp.ne.s32.totalorder %s159, %s160
      %p171 = scmp.eq.s32.totalorder %s27, 0
      %p172 = por %p170, %p171
      %p173 = scmp.ne.s32.totalorder %s159, %s160
      %p174 = scmp.eq.s32.totalorder %s28, 3
      %p175 = por %p173, %p174
      %p177 = scmp.ne.s32.totalorder %s160, %s176
      %p178 = scmp.eq.s32.totalorder %s28, 0
      %p179 = por %p177, %p178
      %s180 = ssub.s32 %s29, %s55
      %s181 = ssub.s32 %s31, %s47
      %s182 = sor.u32 %s180, %s181
      %s183 = ssub.s32 %s30, %s51
      %s184 = sor.u32 %s182, %s183
      %p185 = scmp.eq.s32.totalorder %s184, 0
      %s187 = sadd.s32 %s186, 1
      %s188 = scalar_select %p185, %s186, %s187
      %p191 = pneg %p185
      %p192 = scmp.eq.s32.totalorder %s22, 3
      %p193 = por %p191, %p192
      %p194 = scmp.ne.s32.totalorder %s186, %s189
      %p195 = scmp.eq.s32.totalorder %s22, 0
      %p196 = por %p194, %p195
      %p197 = scmp.ne.s32.totalorder %s186, %s189
      %p198 = scmp.eq.s32.totalorder %s27, 3
      %p199 = por %p197, %p198
      %p200 = scmp.ne.s32.totalorder %s189, %s190
      %p201 = scmp.eq.s32.totalorder %s27, 0
      %p202 = por %p200, %p201
      %p203 = scmp.ne.s32.totalorder %s189, %s190
      %p204 = scmp.eq.s32.totalorder %s28, 3
      %p205 = por %p203, %p204
      %p207 = scmp.ne.s32.totalorder %s190, %s206
      %p208 = scmp.eq.s32.totalorder %s28, 0
      %p209 = por %p207, %p208
      %p210 = scmp.le.s32.totalorder 1, %s22
      %p211 = scmp.lt.s32.totalorder %s22, 5
      %p212 = pnand %p210, %p211
      %p213 = pneg %p212
      // Predicated region
      $region9: #{llama_attention.4} parent=5 // pred_check
        _
      $region10: #{llama_attention.4} parent=5 // pred_check_branch
        %215 = sbr.rel (%p212) target = $region12
      $region11: #{llama_attention.4} parent=5 // pred_region
        %s216 = ssub.s32 %s22, 1
      $region12: #{llama_attention.4} parent=5 // pred_fallthru
        _
      %p217 = scmp.lt.s32.totalorder %s22, 4
      // Predicated region
      $region13: #{llama_attention.4} parent=5 // pred_check
        %p218 = pneg %p217
      $region14: #{llama_attention.4} parent=5 // pred_check_branch
        %220 = sbr.rel (%p218) target = $region16
      $region15: #{llama_attention.4} parent=5 // pred_region
        // Predicated region
        $region17: #{llama_attention.4} parent=15 // pred_check
          %p221 = pneg %p72
        $region18: #{llama_attention.4} parent=15 // pred_check_branch
          %223 = sbr.rel (%p221) target = $region20
        $region19: #{llama_attention.4} parent=15 // pred_region
          %s224 = sand.u32 %s62, 1
          %s225 = scalar_lea.sflag [#allocation6], %s224
          %s226 = sand.u32 %s62, 1
          %s227 = smul.addr %s226, 128
          %s228 = scalar_lea.vmem [#allocation5], %s227
          %s229 = smul.u32 32, %s31
          %s231 = ssub.s32 2048, 2048
          %232 = vsyncadd %s225, %s231
          %s233 = smul.addr %s229, 6
          %s234 = sadd.s32 %s30, %s233
          %s235 = smul.addr %s29, 192
          %s236 = sadd.s32 %s234, %s235
          %s237 = smul.addr %s236, 64
          %s238 = scalar_lea.hbm %s0, %s237
          %s239 = sshll.u32 %s228, 4
          %s240 = int_to_ptr.vmem [resolvable:$true] %s239
          %245 = dma.hbm_to_vmem [thread:$0]  %s238, 2048, %s240, %s225, 384, 64, 4
        $region20: #{llama_attention.4} parent=15 // pred_fallthru
          _
        // Predicated region
        $region21: #{llama_attention.4} parent=15 // pred_check
          %p246 = pneg %p104
        $region22: #{llama_attention.4} parent=15 // pred_check_branch
          %248 = sbr.rel (%p246) target = $region24
        $region23: #{llama_attention.4} parent=15 // pred_region
          %s249 = sand.u32 %s22, 1
          %s250 = scalar_lea.sflag [#allocation9], %s249
          %s251 = sand.u32 %s94, 1
          %s252 = smul.addr %s251, 128
          %s253 = scalar_lea.vmem [#allocation8], %s252
          %s254 = sadd.s32 %s30, 2
          %s255 = smul.u32 32, %s32
          %s257 = ssub.s32 2048, 2048
          %258 = vsyncadd %s250, %s257
          %s259 = smul.addr %s255, 6
          %s260 = sadd.s32 %s254, %s259
          %s261 = smul.addr %s29, 192
          %s262 = sadd.s32 %s260, %s261
          %s263 = smul.addr %s262, 64
          %s264 = scalar_lea.hbm %s1, %s263
          %s265 = sshll.u32 %s253, 4
          %s266 = int_to_ptr.vmem [resolvable:$true] %s265
          %271 = dma.hbm_to_vmem [thread:$0]  %s264, 2048, %s266, %s250, 384, 64, 4
        $region24: #{llama_attention.4} parent=15 // pred_fallthru
          _
        // Predicated region
        $region25: #{llama_attention.4} parent=15 // pred_check
          %p272 = pneg %p136
        $region26: #{llama_attention.4} parent=15 // pred_check_branch
          %274 = sbr.rel (%p272) target = $region28
        $region27: #{llama_attention.4} parent=15 // pred_region
          %s275 = sand.u32 %s22, 1
          %s276 = scalar_lea.sflag [#allocation9], %s275
          %s277 = sand.u32 %s126, 1
          %s278 = smul.addr %s277, 128
          %s279 = scalar_lea.vmem [#allocation10], %s278
          %s280 = sadd.s32 %s30, 4
          %s281 = smul.u32 32, %s32
          %s283 = ssub.s32 2048, 2048
          %284 = vsyncadd %s276, %s283
          %s285 = smul.addr %s281, 6
          %s286 = sadd.s32 %s280, %s285
          %s287 = smul.addr %s29, 192
          %s288 = sadd.s32 %s286, %s287
          %s289 = smul.addr %s288, 64
          %s290 = scalar_lea.hbm %s2, %s289
          %s291 = sshll.u32 %s279, 4
          %s292 = int_to_ptr.vmem [resolvable:$true] %s291
          %297 = dma.hbm_to_vmem [thread:$0]  %s290, 2048, %s292, %s276, 384, 64, 4
        $region28: #{llama_attention.4} parent=15 // pred_fallthru
          _
        // Predicated region
        $region29: #{llama_attention.4} parent=15 // pred_check
          %p298 = pneg %p166
        $region30: #{llama_attention.4} parent=15 // pred_check_branch
          %300 = sbr.rel (%p298) target = $region32
        $region31: #{llama_attention.4} parent=15 // pred_region
          %s301 = sand.u32 %s156, 1
          %s302 = scalar_lea.sflag [#allocation12], %s301
          %s303 = sand.u32 %s156, 1
          %s304 = smul.addr %s303, 512
          %s305 = scalar_lea.vmem [#allocation11], %s304
          %s306 = smul.u32 32, %s31
          %s307 = smul.u32 2, %s32
          %s309 = ssub.s32 8192, 8192
          %310 = vsyncadd %s302, %s309
          %s311 = smul.addr %s306, 2
          %s312 = sadd.s32 %s307, %s311
          %s313 = smul.addr %s29, 64
          %s314 = sadd.s32 %s312, %s313
          %s315 = smul.addr %s314, 128
          %s316 = scalar_lea.hbm %s3, %s315
          %s317 = sshll.u32 %s305, 4
          %s318 = int_to_ptr.vmem [resolvable:$true] %s317
          %323 = dma.hbm_to_vmem [thread:$0]  %s316, 8192, %s318, %s302, 256, 256, 16
        $region32: #{llama_attention.4} parent=15 // pred_fallthru
          _
      $region16: #{llama_attention.4} parent=5 // pred_fallthru
        _
      %p324 = scmp.le.s32.totalorder 1, %s22
      %p325 = scmp.lt.s32.totalorder %s22, 5
      %p326 = pnand %p324, %p325
      %p327 = pneg %p326
      // Predicated region
      $region33: #{llama_attention.4} parent=5 // pred_check
        _
      $region34: #{llama_attention.4} parent=5 // pred_check_branch
        %329 = sbr.rel (%p326) target = $region36
      $region35: #{llama_attention.4} parent=5 // pred_region
        %s330 = ssub.s32 %s22, 1
        %s331 = sand.u32 %s65, 1
        %s332 = scalar_lea.sflag [#allocation6], %s331
        %s333 = sand.u32 %s65, 1
        %s334 = smul.addr %s333, 128
        %s335 = scalar_lea.vmem [#allocation5], %s334
        // Predicated region
        $region37: #{llama_attention.4} parent=35 // pred_check
          %p336 = pneg %p78
        $region38: #{llama_attention.4} parent=35 // pred_check_branch
          %338 = sbr.rel (%p336) target = $region40
        $region39: #{llama_attention.4} parent=35 // pred_region
          %339 = dma.done %s332, 2048
        $region40: #{llama_attention.4} parent=35 // pred_fallthru
          _
        %s340 = sand.u32 %s27, 1
        %s341 = scalar_lea.sflag [#allocation9], %s340
        %s342 = sand.u32 %s97, 1
        %s343 = smul.addr %s342, 128
        %s344 = scalar_lea.vmem [#allocation8], %s343
        // Predicated region
        $region41: #{llama_attention.4} parent=35 // pred_check
          %p345 = pneg %p110
        $region42: #{llama_attention.4} parent=35 // pred_check_branch
          %347 = sbr.rel (%p345) target = $region44
        $region43: #{llama_attention.4} parent=35 // pred_region
          %348 = dma.done %s341, 2048
        $region44: #{llama_attention.4} parent=35 // pred_fallthru
          _
        %s349 = sand.u32 %s27, 1
        %s350 = scalar_lea.sflag [#allocation9], %s349
        %s351 = sand.u32 %s129, 1
        %s352 = smul.addr %s351, 128
        %s353 = scalar_lea.vmem [#allocation10], %s352
        // Predicated region
        $region45: #{llama_attention.4} parent=35 // pred_check
          %p354 = pneg %p142
        $region46: #{llama_attention.4} parent=35 // pred_check_branch
          %356 = sbr.rel (%p354) target = $region48
        $region47: #{llama_attention.4} parent=35 // pred_region
          %357 = dma.done %s350, 2048
        $region48: #{llama_attention.4} parent=35 // pred_fallthru
          _
        %s358 = sand.u32 %s159, 1
        %s359 = scalar_lea.sflag [#allocation12], %s358
        %s360 = sand.u32 %s159, 1
        %s361 = smul.addr %s360, 512
        %s362 = scalar_lea.vmem [#allocation11], %s361
        // Predicated region
        $region49: #{llama_attention.4} parent=35 // pred_check
          %p363 = pneg %p172
        $region50: #{llama_attention.4} parent=35 // pred_check_branch
          %365 = sbr.rel (%p363) target = $region52
        $region51: #{llama_attention.4} parent=35 // pred_region
          %366 = dma.done %s359, 8192
        $region52: #{llama_attention.4} parent=35 // pred_fallthru
          _
        %s367 = sand.u32 %s65, 1
        %s368 = scalar_lea.sflag [#allocation6], %s367
        %s369 = sand.u32 %s65, 1
        %s370 = smul.addr %s369, 128
        %s371 = scalar_lea.vmem [#allocation5], %s370
        %p372 = pneg %p78
        %p373 = pneg %p75
        %s374 = sand.u32 %s27, 1
        %s375 = scalar_lea.sflag [#allocation9], %s374
        %s376 = sand.u32 %s97, 1
        %s377 = smul.addr %s376, 128
        %s378 = scalar_lea.vmem [#allocation8], %s377
        %p379 = pneg %p110
        %p380 = pneg %p107
        %s381 = sand.u32 %s27, 1
        %s382 = scalar_lea.sflag [#allocation9], %s381
        %s383 = sand.u32 %s129, 1
        %s384 = smul.addr %s383, 128
        %s385 = scalar_lea.vmem [#allocation10], %s384
        %p386 = pneg %p142
        %p387 = pneg %p139
        %s388 = sand.u32 %s159, 1
        %s389 = scalar_lea.sflag [#allocation12], %s388
        %s390 = sand.u32 %s159, 1
        %s391 = smul.addr %s390, 512
        %s392 = scalar_lea.vmem [#allocation11], %s391
        %p393 = pneg %p172
        %p394 = pneg %p169
        %p395 = pneg %p202
        %p396 = pneg %p199
        %s397 = sand.u32 %s189, 1
        %s398 = scalar_lea.sflag [#allocation7], %s397
        %s399 = sand.u32 %s189, 1
        %s400 = smul.addr %s399, 128
        %s401 = scalar_lea.vmem [#allocation13], %s400
        %s402 = smul.u32 32, %s35
        %s403 = sadd.s32 %s34, 2
        %s404 = smul.u32 32, %s36
        %s405 = sadd.s32 %s34, 4
        %s406 = smul.u32 32, %s36
        %s407 = smul.u32 32, %s35
        %s408 = smul.u32 2, %s36
        %s409 = smul.u32 32, %s35
        %p411 = scmp.eq.s32.totalorder %s36, 0
        // Predicated region
        $region53: #{llama_attention.4} parent=35 // pred_check
          %p412 = pneg %p411
        $region54: #{llama_attention.4} parent=35 // pred_check_branch
          %414 = sbr.rel (%p412) target = $region56
        $region55: #{llama_attention.4} parent=35 // pred_region
          %vm415 = vcmask 7168
          %416 = vst.msk [vmem:[#allocation2] sm:$0xff] %vm415, -inf
          %417 = vst.msk [vmem:[#allocation2 + $0x8] sm:$0xff] %vm415, -inf
          %418 = vst.msk [vmem:[#allocation2 + $0x10] sm:$0xff] %vm415, -inf
          %419 = vst.msk [vmem:[#allocation2 + $0x18] sm:$0xff] %vm415, -inf
          %420 = vst.msk [vmem:[#allocation2 + $0x20] sm:$0xff] %vm415, -inf
          %421 = vst.msk [vmem:[#allocation2 + $0x28] sm:$0xff] %vm415, -inf
          %422 = vst.msk [vmem:[#allocation2 + $0x30] sm:$0xff] %vm415, -inf
          %423 = vst.msk [vmem:[#allocation2 + $0x38] sm:$0xff] %vm415, -inf
          %424 = vst.msk [vmem:[#allocation2 + $0x40] sm:$0xff] %vm415, -inf
          %425 = vst.msk [vmem:[#allocation2 + $0x48] sm:$0xff] %vm415, -inf
          %426 = vst.msk [vmem:[#allocation2 + $0x50] sm:$0xff] %vm415, -inf
          %427 = vst.msk [vmem:[#allocation2 + $0x58] sm:$0xff] %vm415, -inf
          %428 = vst.msk [vmem:[#allocation2 + $0x60] sm:$0xff] %vm415, -inf
          %429 = vst.msk [vmem:[#allocation2 + $0x68] sm:$0xff] %vm415, -inf
          %430 = vst.msk [vmem:[#allocation2 + $0x70] sm:$0xff] %vm415, -inf
          %431 = vst.msk [vmem:[#allocation2 + $0x78] sm:$0xff] %vm415, -inf
          %432 = vst.msk [vmem:[#allocation2 + $0x80] sm:$0xff] %vm415, -inf
          %433 = vst.msk [vmem:[#allocation2 + $0x88] sm:$0xff] %vm415, -inf
          %434 = vst.msk [vmem:[#allocation2 + $0x90] sm:$0xff] %vm415, -inf
          %435 = vst.msk [vmem:[#allocation2 + $0x98] sm:$0xff] %vm415, -inf
          %436 = vst.msk [vmem:[#allocation2 + $0xa0] sm:$0xff] %vm415, -inf
          %437 = vst.msk [vmem:[#allocation2 + $0xa8] sm:$0xff] %vm415, -inf
          %438 = vst.msk [vmem:[#allocation2 + $0xb0] sm:$0xff] %vm415, -inf
          %439 = vst.msk [vmem:[#allocation2 + $0xb8] sm:$0xff] %vm415, -inf
          %440 = vst.msk [vmem:[#allocation2 + $0xc0] sm:$0xff] %vm415, -inf
          %441 = vst.msk [vmem:[#allocation2 + $0xc8] sm:$0xff] %vm415, -inf
          %442 = vst.msk [vmem:[#allocation2 + $0xd0] sm:$0xff] %vm415, -inf
          %443 = vst.msk [vmem:[#allocation2 + $0xd8] sm:$0xff] %vm415, -inf
          %444 = vst.msk [vmem:[#allocation2 + $0xe0] sm:$0xff] %vm415, -inf
          %445 = vst.msk [vmem:[#allocation2 + $0xe8] sm:$0xff] %vm415, -inf
          %446 = vst.msk [vmem:[#allocation2 + $0xf0] sm:$0xff] %vm415, -inf
          %447 = vst.msk [vmem:[#allocation2 + $0xf8] sm:$0xff] %vm415, -inf
          %448 = vst.msk [vmem:[#allocation3] sm:$0xff] %vm415, 0.0
          %449 = vst.msk [vmem:[#allocation3 + $0x8] sm:$0xff] %vm415, 0.0
          %450 = vst.msk [vmem:[#allocation3 + $0x10] sm:$0xff] %vm415, 0.0
          %451 = vst.msk [vmem:[#allocation3 + $0x18] sm:$0xff] %vm415, 0.0
          %452 = vst.msk [vmem:[#allocation3 + $0x20] sm:$0xff] %vm415, 0.0
          %453 = vst.msk [vmem:[#allocation3 + $0x28] sm:$0xff] %vm415, 0.0
          %454 = vst.msk [vmem:[#allocation3 + $0x30] sm:$0xff] %vm415, 0.0
          %455 = vst.msk [vmem:[#allocation3 + $0x38] sm:$0xff] %vm415, 0.0
          %456 = vst.msk [vmem:[#allocation3 + $0x40] sm:$0xff] %vm415, 0.0
          %457 = vst.msk [vmem:[#allocation3 + $0x48] sm:$0xff] %vm415, 0.0
          %458 = vst.msk [vmem:[#allocation3 + $0x50] sm:$0xff] %vm415, 0.0
          %459 = vst.msk [vmem:[#allocation3 + $0x58] sm:$0xff] %vm415, 0.0
          %460 = vst.msk [vmem:[#allocation3 + $0x60] sm:$0xff] %vm415, 0.0
          %461 = vst.msk [vmem:[#allocation3 + $0x68] sm:$0xff] %vm415, 0.0
          %462 = vst.msk [vmem:[#allocation3 + $0x70] sm:$0xff] %vm415, 0.0
          %463 = vst.msk [vmem:[#allocation3 + $0x78] sm:$0xff] %vm415, 0.0
          %464 = vst.msk [vmem:[#allocation3 + $0x80] sm:$0xff] %vm415, 0.0
          %465 = vst.msk [vmem:[#allocation3 + $0x88] sm:$0xff] %vm415, 0.0
          %466 = vst.msk [vmem:[#allocation3 + $0x90] sm:$0xff] %vm415, 0.0
          %467 = vst.msk [vmem:[#allocation3 + $0x98] sm:$0xff] %vm415, 0.0
          %468 = vst.msk [vmem:[#allocation3 + $0xa0] sm:$0xff] %vm415, 0.0
          %469 = vst.msk [vmem:[#allocation3 + $0xa8] sm:$0xff] %vm415, 0.0
          %470 = vst.msk [vmem:[#allocation3 + $0xb0] sm:$0xff] %vm415, 0.0
          %471 = vst.msk [vmem:[#allocation3 + $0xb8] sm:$0xff] %vm415, 0.0
          %472 = vst.msk [vmem:[#allocation3 + $0xc0] sm:$0xff] %vm415, 0.0
          %473 = vst.msk [vmem:[#allocation3 + $0xc8] sm:$0xff] %vm415, 0.0
          %474 = vst.msk [vmem:[#allocation3 + $0xd0] sm:$0xff] %vm415, 0.0
          %475 = vst.msk [vmem:[#allocation3 + $0xd8] sm:$0xff] %vm415, 0.0
          %476 = vst.msk [vmem:[#allocation3 + $0xe0] sm:$0xff] %vm415, 0.0
          %477 = vst.msk [vmem:[#allocation3 + $0xe8] sm:$0xff] %vm415, 0.0
          %478 = vst.msk [vmem:[#allocation3 + $0xf0] sm:$0xff] %vm415, 0.0
          %479 = vst.msk [vmem:[#allocation3 + $0xf8] sm:$0xff] %vm415, 0.0
          %480 = vst [vmem:[#allocation4] sm:$0xff] 0.0
          %481 = vst [vmem:[#allocation4 + $0x8] sm:$0xff] 0.0
          %482 = vst [vmem:[#allocation4 + $0x10] sm:$0xff] 0.0
          %483 = vst [vmem:[#allocation4 + $0x18] sm:$0xff] 0.0
          %484 = vst [vmem:[#allocation4 + $0x20] sm:$0xff] 0.0
          %485 = vst [vmem:[#allocation4 + $0x28] sm:$0xff] 0.0
          %486 = vst [vmem:[#allocation4 + $0x30] sm:$0xff] 0.0
          %487 = vst [vmem:[#allocation4 + $0x38] sm:$0xff] 0.0
          %488 = vst [vmem:[#allocation4 + $0x40] sm:$0xff] 0.0
          %489 = vst [vmem:[#allocation4 + $0x48] sm:$0xff] 0.0
          %490 = vst [vmem:[#allocation4 + $0x50] sm:$0xff] 0.0
          %491 = vst [vmem:[#allocation4 + $0x58] sm:$0xff] 0.0
          %492 = vst [vmem:[#allocation4 + $0x60] sm:$0xff] 0.0
          %493 = vst [vmem:[#allocation4 + $0x68] sm:$0xff] 0.0
          %494 = vst [vmem:[#allocation4 + $0x70] sm:$0xff] 0.0
          %495 = vst [vmem:[#allocation4 + $0x78] sm:$0xff] 0.0
          %496 = vst [vmem:[#allocation4 + $0x80] sm:$0xff] 0.0
          %497 = vst [vmem:[#allocation4 + $0x88] sm:$0xff] 0.0
          %498 = vst [vmem:[#allocation4 + $0x90] sm:$0xff] 0.0
          %499 = vst [vmem:[#allocation4 + $0x98] sm:$0xff] 0.0
          %500 = vst [vmem:[#allocation4 + $0xa0] sm:$0xff] 0.0
          %501 = vst [vmem:[#allocation4 + $0xa8] sm:$0xff] 0.0
          %502 = vst [vmem:[#allocation4 + $0xb0] sm:$0xff] 0.0
          %503 = vst [vmem:[#allocation4 + $0xb8] sm:$0xff] 0.0
          %504 = vst [vmem:[#allocation4 + $0xc0] sm:$0xff] 0.0
          %505 = vst [vmem:[#allocation4 + $0xc8] sm:$0xff] 0.0
          %506 = vst [vmem:[#allocation4 + $0xd0] sm:$0xff] 0.0
          %507 = vst [vmem:[#allocation4 + $0xd8] sm:$0xff] 0.0
          %508 = vst [vmem:[#allocation4 + $0xe0] sm:$0xff] 0.0
          %509 = vst [vmem:[#allocation4 + $0xe8] sm:$0xff] 0.0
          %510 = vst [vmem:[#allocation4 + $0xf0] sm:$0xff] 0.0
          %511 = vst [vmem:[#allocation4 + $0xf8] sm:$0xff] 0.0
        $region56: #{llama_attention.4} parent=35 // pred_fallthru
          _
        %v512 = vld [vmem:[%s335] sm:$0xf]
        %v513 = vld [vmem:[%s335 + $0x4] sm:$0xf]
        %v514 = vld [vmem:[%s335 + $0x8] sm:$0xf]
        %v515 = vld [vmem:[%s335 + $0xc] sm:$0xf]
        %v516 = vld [vmem:[%s335 + $0x10] sm:$0xf]
        %v517 = vld [vmem:[%s335 + $0x14] sm:$0xf]
        %v518 = vld [vmem:[%s335 + $0x18] sm:$0xf]
        %v519 = vld [vmem:[%s335 + $0x1c] sm:$0xf]
        %v520 = vld [vmem:[%s335 + $0x20] sm:$0xf]
        %v521 = vld [vmem:[%s335 + $0x24] sm:$0xf]
        %v522 = vld [vmem:[%s335 + $0x28] sm:$0xf]
        %v523 = vld [vmem:[%s335 + $0x2c] sm:$0xf]
        %v524 = vld [vmem:[%s335 + $0x30] sm:$0xf]
        %v525 = vld [vmem:[%s335 + $0x34] sm:$0xf]
        %v526 = vld [vmem:[%s335 + $0x38] sm:$0xf]
        %v527 = vld [vmem:[%s335 + $0x3c] sm:$0xf]
        %v528 = vld [vmem:[%s335 + $0x40] sm:$0xf]
        %v529 = vld [vmem:[%s335 + $0x44] sm:$0xf]
        %v530 = vld [vmem:[%s335 + $0x48] sm:$0xf]
        %v531 = vld [vmem:[%s335 + $0x4c] sm:$0xf]
        %v532 = vld [vmem:[%s335 + $0x50] sm:$0xf]
        %v533 = vld [vmem:[%s335 + $0x54] sm:$0xf]
        %v534 = vld [vmem:[%s335 + $0x58] sm:$0xf]
        %v535 = vld [vmem:[%s335 + $0x5c] sm:$0xf]
        %v536 = vld [vmem:[%s335 + $0x60] sm:$0xf]
        %v537 = vld [vmem:[%s335 + $0x64] sm:$0xf]
        %v538 = vld [vmem:[%s335 + $0x68] sm:$0xf]
        %v539 = vld [vmem:[%s335 + $0x6c] sm:$0xf]
        %v540 = vld [vmem:[%s335 + $0x70] sm:$0xf]
        %v541 = vld [vmem:[%s335 + $0x74] sm:$0xf]
        %v542 = vld [vmem:[%s335 + $0x78] sm:$0xf]
        %v543 = vld [vmem:[%s335 + $0x7c] sm:$0xf]
        %v544 = vld [vmem:[%s344] sm:$0xf]
        %v545 = vld [vmem:[%s344 + $0x4] sm:$0xf]
        %v546 = vld [vmem:[%s344 + $0x8] sm:$0xf]
        %v547 = vld [vmem:[%s344 + $0xc] sm:$0xf]
        %v548 = vld [vmem:[%s344 + $0x10] sm:$0xf]
        %v549 = vld [vmem:[%s344 + $0x14] sm:$0xf]
        %v550 = vld [vmem:[%s344 + $0x18] sm:$0xf]
        %v551 = vld [vmem:[%s344 + $0x1c] sm:$0xf]
        %v552 = vld [vmem:[%s344 + $0x20] sm:$0xf]
        %v553 = vld [vmem:[%s344 + $0x24] sm:$0xf]
        %v554 = vld [vmem:[%s344 + $0x28] sm:$0xf]
        %v555 = vld [vmem:[%s344 + $0x2c] sm:$0xf]
        %v556 = vld [vmem:[%s344 + $0x30] sm:$0xf]
        %v557 = vld [vmem:[%s344 + $0x34] sm:$0xf]
        %v558 = vld [vmem:[%s344 + $0x38] sm:$0xf]
        %v559 = vld [vmem:[%s344 + $0x3c] sm:$0xf]
        %v560 = vld [vmem:[%s344 + $0x40] sm:$0xf]
        %v561 = vld [vmem:[%s344 + $0x44] sm:$0xf]
        %v562 = vld [vmem:[%s344 + $0x48] sm:$0xf]
        %v563 = vld [vmem:[%s344 + $0x4c] sm:$0xf]
        %v564 = vld [vmem:[%s344 + $0x50] sm:$0xf]
        %v565 = vld [vmem:[%s344 + $0x54] sm:$0xf]
        %v566 = vld [vmem:[%s344 + $0x58] sm:$0xf]
        %v567 = vld [vmem:[%s344 + $0x5c] sm:$0xf]
        %v568 = vld [vmem:[%s344 + $0x60] sm:$0xf]
        %v569 = vld [vmem:[%s344 + $0x64] sm:$0xf]
        %v570 = vld [vmem:[%s344 + $0x68] sm:$0xf]
        %v571 = vld [vmem:[%s344 + $0x6c] sm:$0xf]
        %v572 = vld [vmem:[%s344 + $0x70] sm:$0xf]
        %v573 = vld [vmem:[%s344 + $0x74] sm:$0xf]
        %v574 = vld [vmem:[%s344 + $0x78] sm:$0xf]
        %v575 = vld [vmem:[%s344 + $0x7c] sm:$0xf]
        %v608 = vunpack.c.l.b16 %v512
        %v609 = vunpack.c.l.b16 %v513
        %v610 = vunpack.c.l.b16 %v514
        %v611 = vunpack.c.l.b16 %v515
        %v612 = vunpack.c.l.b16 %v516
        %v613 = vunpack.c.l.b16 %v517
        %v614 = vunpack.c.l.b16 %v518
        %v615 = vunpack.c.l.b16 %v519
        %v616 = vunpack.c.l.b16 %v520
        %v617 = vunpack.c.l.b16 %v521
        %v618 = vunpack.c.l.b16 %v522
        %v619 = vunpack.c.l.b16 %v523
        %v620 = vunpack.c.l.b16 %v524
        %v621 = vunpack.c.l.b16 %v525
        %v622 = vunpack.c.l.b16 %v526
        %v623 = vunpack.c.l.b16 %v527
        %v624 = vunpack.c.l.b16 %v528
        %v625 = vunpack.c.l.b16 %v529
        %v626 = vunpack.c.l.b16 %v530
        %v627 = vunpack.c.l.b16 %v531
        %v628 = vunpack.c.l.b16 %v532
        %v629 = vunpack.c.l.b16 %v533
        %v630 = vunpack.c.l.b16 %v534
        %v631 = vunpack.c.l.b16 %v535
        %v632 = vunpack.c.l.b16 %v536
        %v633 = vunpack.c.l.b16 %v537
        %v634 = vunpack.c.l.b16 %v538
        %v635 = vunpack.c.l.b16 %v539
        %v636 = vunpack.c.l.b16 %v540
        %v637 = vunpack.c.l.b16 %v541
        %v638 = vunpack.c.l.b16 %v542
        %v639 = vunpack.c.l.b16 %v543
        %v640 = vpack.c.b16 %v609, %v608
        %v641 = vpack.c.b16 %v611, %v610
        %v642 = vpack.c.b16 %v613, %v612
        %v643 = vpack.c.b16 %v615, %v614
        %v644 = vpack.c.b16 %v617, %v616
        %v645 = vpack.c.b16 %v619, %v618
        %v646 = vpack.c.b16 %v621, %v620
        %v647 = vpack.c.b16 %v623, %v622
        %v648 = vpack.c.b16 %v625, %v624
        %v649 = vpack.c.b16 %v627, %v626
        %v650 = vpack.c.b16 %v629, %v628
        %v651 = vpack.c.b16 %v631, %v630
        %v652 = vpack.c.b16 %v633, %v632
        %v653 = vpack.c.b16 %v635, %v634
        %v654 = vpack.c.b16 %v637, %v636
        %v655 = vpack.c.b16 %v639, %v638
        %v704 = vunpack.c.l.b16 %v544
        %v705 = vunpack.c.l.b16 %v545
        %v706 = vunpack.c.l.b16 %v546
        %v707 = vunpack.c.l.b16 %v547
        %v708 = vunpack.c.l.b16 %v548
        %v709 = vunpack.c.l.b16 %v549
        %v710 = vunpack.c.l.b16 %v550
        %v711 = vunpack.c.l.b16 %v551
        %v712 = vunpack.c.l.b16 %v552
        %v713 = vunpack.c.l.b16 %v553
        %v714 = vunpack.c.l.b16 %v554
        %v715 = vunpack.c.l.b16 %v555
        %v716 = vunpack.c.l.b16 %v556
        %v717 = vunpack.c.l.b16 %v557
        %v718 = vunpack.c.l.b16 %v558
        %v719 = vunpack.c.l.b16 %v559
        %v720 = vunpack.c.l.b16 %v560
        %v721 = vunpack.c.l.b16 %v561
        %v722 = vunpack.c.l.b16 %v562
        %v723 = vunpack.c.l.b16 %v563
        %v724 = vunpack.c.l.b16 %v564
        %v725 = vunpack.c.l.b16 %v565
        %v726 = vunpack.c.l.b16 %v566
        %v727 = vunpack.c.l.b16 %v567
        %v728 = vunpack.c.l.b16 %v568
        %v729 = vunpack.c.l.b16 %v569
        %v730 = vunpack.c.l.b16 %v570
        %v731 = vunpack.c.l.b16 %v571
        %v732 = vunpack.c.l.b16 %v572
        %v733 = vunpack.c.l.b16 %v573
        %v734 = vunpack.c.l.b16 %v574
        %v735 = vunpack.c.l.b16 %v575
        %v736 = vpack.c.b16 %v705, %v704
        %v737 = vpack.c.b16 %v707, %v706
        %v738 = vpack.c.b16 %v709, %v708
        %v739 = vpack.c.b16 %v711, %v710
        %v740 = vpack.c.b16 %v713, %v712
        %v741 = vpack.c.b16 %v715, %v714
        %v742 = vpack.c.b16 %v717, %v716
        %v743 = vpack.c.b16 %v719, %v718
        %v744 = vpack.c.b16 %v721, %v720
        %v745 = vpack.c.b16 %v723, %v722
        %v746 = vpack.c.b16 %v725, %v724
        %v747 = vpack.c.b16 %v727, %v726
        %v748 = vpack.c.b16 %v729, %v728
        %v749 = vpack.c.b16 %v731, %v730
        %v750 = vpack.c.b16 %v733, %v732
        %v751 = vpack.c.b16 %v735, %v734
        %768 = vmatprep.subr.bf16.mxu0 0
        %769 = vmatpush1.bf16.xpose.msra.mxu0 %v736
        %770 = vmatprep.subr.bf16.mxu0 0
        %771 = vmatpush1.bf16.xpose.msra.mxu0 %v737
        %772 = vmatprep.subr.bf16.mxu0 0
        %773 = vmatpush1.bf16.xpose.msra.mxu0 %v738
        %774 = vmatprep.subr.bf16.mxu0 0
        %775 = vmatpush1.bf16.xpose.msra.mxu0 %v739
        %776 = vmatprep.subr.bf16.mxu0 0
        %777 = vmatpush1.bf16.xpose.msra.mxu0 %v740
        %778 = vmatprep.subr.bf16.mxu0 0
        %779 = vmatpush1.bf16.xpose.msra.mxu0 %v741
        %780 = vmatprep.subr.bf16.mxu0 0
        %781 = vmatpush1.bf16.xpose.msra.mxu0 %v742
        %782 = vmatprep.subr.bf16.mxu0 0
        %783 = vmatpush1.bf16.xpose.msra.mxu0 %v743
        %784 = vmatprep.subr.bf16.mxu0 0
        %785 = vmatpush1.bf16.xpose.msra.mxu0 %v744
        %786 = vmatprep.subr.bf16.mxu0 0
        %787 = vmatpush1.bf16.xpose.msra.mxu0 %v745
        %788 = vmatprep.subr.bf16.mxu0 0
        %789 = vmatpush1.bf16.xpose.msra.mxu0 %v746
        %790 = vmatprep.subr.bf16.mxu0 0
        %791 = vmatpush1.bf16.xpose.msra.mxu0 %v747
        %792 = vmatprep.subr.bf16.mxu0 0
        %793 = vmatpush1.bf16.xpose.msra.mxu0 %v748
        %794 = vmatprep.subr.bf16.mxu0 0
        %795 = vmatpush1.bf16.xpose.msra.mxu0 %v749
        %796 = vmatprep.subr.bf16.mxu0 0
        %797 = vmatpush1.bf16.xpose.msra.mxu0 %v750
        %798 = vmatprep.subr.bf16.mxu0 0
        %799 = vmatpush1.bf16.xpose.msra.mxu0 %v751
        %800 = vmatprep.mubr.bf16.mxu0 0
        %801 = vmatmul.mubr.bf16.gmra.mrb[0].mxu0 %v640
        %v802 = vpop.f32.mrb[0].mxu0
        %v803 = vadd.f32 0.0, %v802
        %v804 = vpop.f32.mrb[0].mxu0
        %v805 = vadd.f32 0.0, %v804
        %v806 = vpop.f32.mrb[0].mxu0
        %v807 = vadd.f32 0.0, %v806
        %v808 = vpop.f32.mrb[0].mxu0
        %v809 = vadd.f32 0.0, %v808
        %810 = vmatprep.mubr.bf16.mxu0 0
        %811 = vmatmul.mubr.bf16.gmra.mrb[0].mxu0 %v641
        %v812 = vpop.f32.mrb[0].mxu0
        %v813 = vadd.f32 0.0, %v812
        %v814 = vpop.f32.mrb[0].mxu0
        %v815 = vadd.f32 0.0, %v814
        %v816 = vpop.f32.mrb[0].mxu0
        %v817 = vadd.f32 0.0, %v816
        %v818 = vpop.f32.mrb[0].mxu0
        %v819 = vadd.f32 0.0, %v818
        %820 = vmatprep.mubr.bf16.mxu0 0
        %821 = vmatmul.mubr.bf16.gmra.mrb[0].mxu0 %v642
        %v822 = vpop.f32.mrb[0].mxu0
        %v823 = vadd.f32 0.0, %v822
        %v824 = vpop.f32.mrb[0].mxu0
        %v825 = vadd.f32 0.0, %v824
        %v826 = vpop.f32.mrb[0].mxu0
        %v827 = vadd.f32 0.0, %v826
        %v828 = vpop.f32.mrb[0].mxu0
        %v829 = vadd.f32 0.0, %v828
        %830 = vmatprep.mubr.bf16.mxu0 0
        %831 = vmatmul.mubr.bf16.gmra.mrb[0].mxu0 %v643
        %v832 = vpop.f32.mrb[0].mxu0
        %v833 = vadd.f32 0.0, %v832
        %v834 = vpop.f32.mrb[0].mxu0
        %v835 = vadd.f32 0.0, %v834
        %v836 = vpop.f32.mrb[0].mxu0
        %v837 = vadd.f32 0.0, %v836
        %v838 = vpop.f32.mrb[0].mxu0
        %v839 = vadd.f32 0.0, %v838
        %840 = vmatprep.mubr.bf16.mxu0 0
        %841 = vmatmul.mubr.bf16.gmra.mrb[0].mxu0 %v644
        %v842 = vpop.f32.mrb[0].mxu0
        %v843 = vadd.f32 0.0, %v842
        %v844 = vpop.f32.mrb[0].mxu0
        %v845 = vadd.f32 0.0, %v844
        %v846 = vpop.f32.mrb[0].mxu0
        %v847 = vadd.f32 0.0, %v846
        %v848 = vpop.f32.mrb[0].mxu0
        %v849 = vadd.f32 0.0, %v848
        %850 = vmatprep.mubr.bf16.mxu0 0
        %851 = vmatmul.mubr.bf16.gmra.mrb[0].mxu0 %v645
        %v852 = vpop.f32.mrb[0].mxu0
        %v853 = vadd.f32 0.0, %v852
        %v854 = vpop.f32.mrb[0].mxu0
        %v855 = vadd.f32 0.0, %v854
        %v856 = vpop.f32.mrb[0].mxu0
        %v857 = vadd.f32 0.0, %v856
        %v858 = vpop.f32.mrb[0].mxu0
        %v859 = vadd.f32 0.0, %v858
        %860 = vmatprep.mubr.bf16.mxu0 0
        %861 = vmatmul.mubr.bf16.gmra.mrb[0].mxu0 %v646
        %v862 = vpop.f32.mrb[0].mxu0
        %v863 = vadd.f32 0.0, %v862
        %v864 = vpop.f32.mrb[0].mxu0
        %v865 = vadd.f32 0.0, %v864
        %v866 = vpop.f32.mrb[0].mxu0
        %v867 = vadd.f32 0.0, %v866
        %v868 = vpop.f32.mrb[0].mxu0
        %v869 = vadd.f32 0.0, %v868
        %870 = vmatprep.mubr.bf16.mxu0 0
        %871 = vmatmul.mubr.bf16.gmra.mrb[0].mxu0 %v647
        %v872 = vpop.f32.mrb[0].mxu0
        %v873 = vadd.f32 0.0, %v872
        %v874 = vpop.f32.mrb[0].mxu0
        %v875 = vadd.f32 0.0, %v874
        %v876 = vpop.f32.mrb[0].mxu0
        %v877 = vadd.f32 0.0, %v876
        %v878 = vpop.f32.mrb[0].mxu0
        %v879 = vadd.f32 0.0, %v878
        %880 = vmatprep.mubr.bf16.mxu0 0
        %881 = vmatmul.mubr.bf16.gmra.mrb[0].mxu0 %v648
        %v882 = vpop.f32.mrb[0].mxu0
        %v883 = vadd.f32 0.0, %v882
        %v884 = vpop.f32.mrb[0].mxu0
        %v885 = vadd.f32 0.0, %v884
        %v886 = vpop.f32.mrb[0].mxu0
        %v887 = vadd.f32 0.0, %v886
        %v888 = vpop.f32.mrb[0].mxu0
        %v889 = vadd.f32 0.0, %v888
        %890 = vmatprep.mubr.bf16.mxu0 0
        %891 = vmatmul.mubr.bf16.gmra.mrb[0].mxu0 %v649
        %v892 = vpop.f32.mrb[0].mxu0
        %v893 = vadd.f32 0.0, %v892
        %v894 = vpop.f32.mrb[0].mxu0
        %v895 = vadd.f32 0.0, %v894
        %v896 = vpop.f32.mrb[0].mxu0
        %v897 = vadd.f32 0.0, %v896
        %v898 = vpop.f32.mrb[0].mxu0
        %v899 = vadd.f32 0.0, %v898
        %900 = vmatprep.mubr.bf16.mxu0 0
        %901 = vmatmul.mubr.bf16.gmra.mrb[0].mxu0 %v650
        %v902 = vpop.f32.mrb[0].mxu0
        %v903 = vadd.f32 0.0, %v902
        %v904 = vpop.f32.mrb[0].mxu0
        %v905 = vadd.f32 0.0, %v904
        %v906 = vpop.f32.mrb[0].mxu0
        %v907 = vadd.f32 0.0, %v906
        %v908 = vpop.f32.mrb[0].mxu0
        %v909 = vadd.f32 0.0, %v908
        %910 = vmatprep.mubr.bf16.mxu0 0
        %911 = vmatmul.mubr.bf16.gmra.mrb[0].mxu0 %v651
        %v912 = vpop.f32.mrb[0].mxu0
        %v913 = vadd.f32 0.0, %v912
        %v914 = vpop.f32.mrb[0].mxu0
        %v915 = vadd.f32 0.0, %v914
        %v916 = vpop.f32.mrb[0].mxu0
        %v917 = vadd.f32 0.0, %v916
        %v918 = vpop.f32.mrb[0].mxu0
        %v919 = vadd.f32 0.0, %v918
        %920 = vmatprep.mubr.bf16.mxu0 0
        %921 = vmatmul.mubr.bf16.gmra.mrb[0].mxu0 %v652
        %v922 = vpop.f32.mrb[0].mxu0
        %v923 = vadd.f32 0.0, %v922
        %v924 = vpop.f32.mrb[0].mxu0
        %v925 = vadd.f32 0.0, %v924
        %v926 = vpop.f32.mrb[0].mxu0
        %v927 = vadd.f32 0.0, %v926
        %v928 = vpop.f32.mrb[0].mxu0
        %v929 = vadd.f32 0.0, %v928
        %930 = vmatprep.mubr.bf16.mxu0 0
        %931 = vmatmul.mubr.bf16.gmra.mrb[0].mxu0 %v653
        %v932 = vpop.f32.mrb[0].mxu0
        %v933 = vadd.f32 0.0, %v932
        %v934 = vpop.f32.mrb[0].mxu0
        %v935 = vadd.f32 0.0, %v934
        %v936 = vpop.f32.mrb[0].mxu0
        %v937 = vadd.f32 0.0, %v936
        %v938 = vpop.f32.mrb[0].mxu0
        %v939 = vadd.f32 0.0, %v938
        %940 = vmatprep.mubr.bf16.mxu0 0
        %941 = vmatmul.mubr.bf16.gmra.mrb[0].mxu0 %v654
        %v942 = vpop.f32.mrb[0].mxu0
        %v943 = vadd.f32 0.0, %v942
        %v944 = vpop.f32.mrb[0].mxu0
        %v945 = vadd.f32 0.0, %v944
        %v946 = vpop.f32.mrb[0].mxu0
        %v947 = vadd.f32 0.0, %v946
        %v948 = vpop.f32.mrb[0].mxu0
        %v949 = vadd.f32 0.0, %v948
        %950 = vmatprep.mubr.bf16.mxu0 0
        %951 = vmatmul.mubr.bf16.gmra.mrb[0].mxu0 %v655
        %v952 = vpop.f32.mrb[0].mxu0
        %v953 = vadd.f32 0.0, %v952
        %v954 = vpop.f32.mrb[0].mxu0
        %v955 = vadd.f32 0.0, %v954
        %v956 = vpop.f32.mrb[0].mxu0
        %v957 = vadd.f32 0.0, %v956
        %v958 = vpop.f32.mrb[0].mxu0
        %v959 = vadd.f32 0.0, %v958
        %960 = vdwg.mxu0
        %v961 = vmul.f32 %v803, 0.088388346
        %v962 = vmul.f32 %v805, 0.088388346
        %v963 = vmul.f32 %v807, 0.088388346
        %v964 = vmul.f32 %v809, 0.088388346
        %v965 = vmul.f32 %v813, 0.088388346
        %v966 = vmul.f32 %v815, 0.088388346
        %v967 = vmul.f32 %v817, 0.088388346
        %v968 = vmul.f32 %v819, 0.088388346
        %v969 = vmul.f32 %v823, 0.088388346
        %v970 = vmul.f32 %v825, 0.088388346
        %v971 = vmul.f32 %v827, 0.088388346
        %v972 = vmul.f32 %v829, 0.088388346
        %v973 = vmul.f32 %v833, 0.088388346
        %v974 = vmul.f32 %v835, 0.088388346
        %v975 = vmul.f32 %v837, 0.088388346
        %v976 = vmul.f32 %v839, 0.088388346
        %v977 = vmul.f32 %v843, 0.088388346
        %v978 = vmul.f32 %v845, 0.088388346
        %v979 = vmul.f32 %v847, 0.088388346
        %v980 = vmul.f32 %v849, 0.088388346
        %v981 = vmul.f32 %v853, 0.088388346
        %v982 = vmul.f32 %v855, 0.088388346
        %v983 = vmul.f32 %v857, 0.088388346
        %v984 = vmul.f32 %v859, 0.088388346
        %v985 = vmul.f32 %v863, 0.088388346
        %v986 = vmul.f32 %v865, 0.088388346
        %v987 = vmul.f32 %v867, 0.088388346
        %v988 = vmul.f32 %v869, 0.088388346
        %v989 = vmul.f32 %v873, 0.088388346
        %v990 = vmul.f32 %v875, 0.088388346
        %v991 = vmul.f32 %v877, 0.088388346
        %v992 = vmul.f32 %v879, 0.088388346
        %v993 = vmul.f32 %v883, 0.088388346
        %v994 = vmul.f32 %v885, 0.088388346
        %v995 = vmul.f32 %v887, 0.088388346
        %v996 = vmul.f32 %v889, 0.088388346
        %v997 = vmul.f32 %v893, 0.088388346
        %v998 = vmul.f32 %v895, 0.088388346
        %v999 = vmul.f32 %v897, 0.088388346
        %v1000 = vmul.f32 %v899, 0.088388346
        %v1001 = vmul.f32 %v903, 0.088388346
        %v1002 = vmul.f32 %v905, 0.088388346
        %v1003 = vmul.f32 %v907, 0.088388346
        %v1004 = vmul.f32 %v909, 0.088388346
        %v1005 = vmul.f32 %v913, 0.088388346
        %v1006 = vmul.f32 %v915, 0.088388346
        %v1007 = vmul.f32 %v917, 0.088388346
        %v1008 = vmul.f32 %v919, 0.088388346
        %v1009 = vmul.f32 %v923, 0.088388346
        %v1010 = vmul.f32 %v925, 0.088388346
        %v1011 = vmul.f32 %v927, 0.088388346
        %v1012 = vmul.f32 %v929, 0.088388346
        %v1013 = vmul.f32 %v933, 0.088388346
        %v1014 = vmul.f32 %v935, 0.088388346
        %v1015 = vmul.f32 %v937, 0.088388346
        %v1016 = vmul.f32 %v939, 0.088388346
        %v1017 = vmul.f32 %v943, 0.088388346
        %v1018 = vmul.f32 %v945, 0.088388346
        %v1019 = vmul.f32 %v947, 0.088388346
        %v1020 = vmul.f32 %v949, 0.088388346
        %v1021 = vmul.f32 %v953, 0.088388346
        %v1022 = vmul.f32 %v955, 0.088388346
        %v1023 = vmul.f32 %v957, 0.088388346
        %v1024 = vmul.f32 %v959, 0.088388346
        %v1025 = vld [vmem:[%s362] sm:$0xff]
        %v1026 = vld [vmem:[%s362 + $0x8] sm:$0xff]
        %v1027 = vld [vmem:[%s362 + $0x10] sm:$0xff]
        %v1028 = vld [vmem:[%s362 + $0x18] sm:$0xff]
        %v1029 = vld [vmem:[%s362 + $0x20] sm:$0xff]
        %v1030 = vld [vmem:[%s362 + $0x28] sm:$0xff]
        %v1031 = vld [vmem:[%s362 + $0x30] sm:$0xff]
        %v1032 = vld [vmem:[%s362 + $0x38] sm:$0xff]
        %v1033 = vld [vmem:[%s362 + $0x40] sm:$0xff]
        %v1034 = vld [vmem:[%s362 + $0x48] sm:$0xff]
        %v1035 = vld [vmem:[%s362 + $0x50] sm:$0xff]
        %v1036 = vld [vmem:[%s362 + $0x58] sm:$0xff]
        %v1037 = vld [vmem:[%s362 + $0x60] sm:$0xff]
        %v1038 = vld [vmem:[%s362 + $0x68] sm:$0xff]
        %v1039 = vld [vmem:[%s362 + $0x70] sm:$0xff]
        %v1040 = vld [vmem:[%s362 + $0x78] sm:$0xff]
        %v1041 = vld [vmem:[%s362 + $0x80] sm:$0xff]
        %v1042 = vld [vmem:[%s362 + $0x88] sm:$0xff]
        %v1043 = vld [vmem:[%s362 + $0x90] sm:$0xff]
        %v1044 = vld [vmem:[%s362 + $0x98] sm:$0xff]
        %v1045 = vld [vmem:[%s362 + $0xa0] sm:$0xff]
        %v1046 = vld [vmem:[%s362 + $0xa8] sm:$0xff]
        %v1047 = vld [vmem:[%s362 + $0xb0] sm:$0xff]
        %v1048 = vld [vmem:[%s362 + $0xb8] sm:$0xff]
        %v1049 = vld [vmem:[%s362 + $0xc0] sm:$0xff]
        %v1050 = vld [vmem:[%s362 + $0xc8] sm:$0xff]
        %v1051 = vld [vmem:[%s362 + $0xd0] sm:$0xff]
        %v1052 = vld [vmem:[%s362 + $0xd8] sm:$0xff]
        %v1053 = vld [vmem:[%s362 + $0xe0] sm:$0xff]
        %v1054 = vld [vmem:[%s362 + $0xe8] sm:$0xff]
        %v1055 = vld [vmem:[%s362 + $0xf0] sm:$0xff]
        %v1056 = vld [vmem:[%s362 + $0xf8] sm:$0xff]
        %v1057 = vld [vmem:[%s362 + $0x100] sm:$0xff]
        %v1058 = vld [vmem:[%s362 + $0x108] sm:$0xff]
        %v1059 = vld [vmem:[%s362 + $0x110] sm:$0xff]
        %v1060 = vld [vmem:[%s362 + $0x118] sm:$0xff]
        %v1061 = vld [vmem:[%s362 + $0x120] sm:$0xff]
        %v1062 = vld [vmem:[%s362 + $0x128] sm:$0xff]
        %v1063 = vld [vmem:[%s362 + $0x130] sm:$0xff]
        %v1064 = vld [vmem:[%s362 + $0x138] sm:$0xff]
        %v1065 = vld [vmem:[%s362 + $0x140] sm:$0xff]
        %v1066 = vld [vmem:[%s362 + $0x148] sm:$0xff]
        %v1067 = vld [vmem:[%s362 + $0x150] sm:$0xff]
        %v1068 = vld [vmem:[%s362 + $0x158] sm:$0xff]
        %v1069 = vld [vmem:[%s362 + $0x160] sm:$0xff]
        %v1070 = vld [vmem:[%s362 + $0x168] sm:$0xff]
        %v1071 = vld [vmem:[%s362 + $0x170] sm:$0xff]
        %v1072 = vld [vmem:[%s362 + $0x178] sm:$0xff]
        %v1073 = vld [vmem:[%s362 + $0x180] sm:$0xff]
        %v1074 = vld [vmem:[%s362 + $0x188] sm:$0xff]
        %v1075 = vld [vmem:[%s362 + $0x190] sm:$0xff]
        %v1076 = vld [vmem:[%s362 + $0x198] sm:$0xff]
        %v1077 = vld [vmem:[%s362 + $0x1a0] sm:$0xff]
        %v1078 = vld [vmem:[%s362 + $0x1a8] sm:$0xff]
        %v1079 = vld [vmem:[%s362 + $0x1b0] sm:$0xff]
        %v1080 = vld [vmem:[%s362 + $0x1b8] sm:$0xff]
        %v1081 = vld [vmem:[%s362 + $0x1c0] sm:$0xff]
        %v1082 = vld [vmem:[%s362 + $0x1c8] sm:$0xff]
        %v1083 = vld [vmem:[%s362 + $0x1d0] sm:$0xff]
        %v1084 = vld [vmem:[%s362 + $0x1d8] sm:$0xff]
        %v1085 = vld [vmem:[%s362 + $0x1e0] sm:$0xff]
        %v1086 = vld [vmem:[%s362 + $0x1e8] sm:$0xff]
        %v1087 = vld [vmem:[%s362 + $0x1f0] sm:$0xff]
        %v1088 = vld [vmem:[%s362 + $0x1f8] sm:$0xff]
        %v1089 = vadd.f32 %v961, %v1025
        %v1090 = vadd.f32 %v962, %v1026
        %v1091 = vadd.f32 %v963, %v1027
        %v1092 = vadd.f32 %v964, %v1028
        %v1093 = vadd.f32 %v965, %v1029
        %v1094 = vadd.f32 %v966, %v1030
        %v1095 = vadd.f32 %v967, %v1031
        %v1096 = vadd.f32 %v968, %v1032
        %v1097 = vadd.f32 %v969, %v1033
        %v1098 = vadd.f32 %v970, %v1034
        %v1099 = vadd.f32 %v971, %v1035
        %v1100 = vadd.f32 %v972, %v1036
        %v1101 = vadd.f32 %v973, %v1037
        %v1102 = vadd.f32 %v974, %v1038
        %v1103 = vadd.f32 %v975, %v1039
        %v1104 = vadd.f32 %v976, %v1040
        %v1105 = vadd.f32 %v977, %v1041
        %v1106 = vadd.f32 %v978, %v1042
        %v1107 = vadd.f32 %v979, %v1043
        %v1108 = vadd.f32 %v980, %v1044
        %v1109 = vadd.f32 %v981, %v1045
        %v1110 = vadd.f32 %v982, %v1046
        %v1111 = vadd.f32 %v983, %v1047
        %v1112 = vadd.f32 %v984, %v1048
        %v1113 = vadd.f32 %v985, %v1049
        %v1114 = vadd.f32 %v986, %v1050
        %v1115 = vadd.f32 %v987, %v1051
        %v1116 = vadd.f32 %v988, %v1052
        %v1117 = vadd.f32 %v989, %v1053
        %v1118 = vadd.f32 %v990, %v1054
        %v1119 = vadd.f32 %v991, %v1055
        %v1120 = vadd.f32 %v992, %v1056
        %v1121 = vadd.f32 %v993, %v1057
        %v1122 = vadd.f32 %v994, %v1058
        %v1123 = vadd.f32 %v995, %v1059
        %v1124 = vadd.f32 %v996, %v1060
        %v1125 = vadd.f32 %v997, %v1061
        %v1126 = vadd.f32 %v998, %v1062
        %v1127 = vadd.f32 %v999, %v1063
        %v1128 = vadd.f32 %v1000, %v1064
        %v1129 = vadd.f32 %v1001, %v1065
        %v1130 = vadd.f32 %v1002, %v1066
        %v1131 = vadd.f32 %v1003, %v1067
        %v1132 = vadd.f32 %v1004, %v1068
        %v1133 = vadd.f32 %v1005, %v1069
        %v1134 = vadd.f32 %v1006, %v1070
        %v1135 = vadd.f32 %v1007, %v1071
        %v1136 = vadd.f32 %v1008, %v1072
        %v1137 = vadd.f32 %v1009, %v1073
        %v1138 = vadd.f32 %v1010, %v1074
        %v1139 = vadd.f32 %v1011, %v1075
        %v1140 = vadd.f32 %v1012, %v1076
        %v1141 = vadd.f32 %v1013, %v1077
        %v1142 = vadd.f32 %v1014, %v1078
        %v1143 = vadd.f32 %v1015, %v1079
        %v1144 = vadd.f32 %v1016, %v1080
        %v1145 = vadd.f32 %v1017, %v1081
        %v1146 = vadd.f32 %v1018, %v1082
        %v1147 = vadd.f32 %v1019, %v1083
        %v1148 = vadd.f32 %v1020, %v1084
        %v1149 = vadd.f32 %v1021, %v1085
        %v1150 = vadd.f32 %v1022, %v1086
        %v1151 = vadd.f32 %v1023, %v1087
        %v1152 = vadd.f32 %v1024, %v1088
        %v1153 = vld [vmem:[#allocation2] sm:$0xff]
        %v1154 = vld [vmem:[#allocation2 + $0x8] sm:$0xff]
        %v1155 = vld [vmem:[#allocation2 + $0x10] sm:$0xff]
        %v1156 = vld [vmem:[#allocation2 + $0x18] sm:$0xff]
        %v1157 = vld [vmem:[#allocation2 + $0x20] sm:$0xff]
        %v1158 = vld [vmem:[#allocation2 + $0x28] sm:$0xff]
        %v1159 = vld [vmem:[#allocation2 + $0x30] sm:$0xff]
        %v1160 = vld [vmem:[#allocation2 + $0x38] sm:$0xff]
        %v1161 = vld [vmem:[#allocation2 + $0x40] sm:$0xff]
        %v1162 = vld [vmem:[#allocation2 + $0x48] sm:$0xff]
        %v1163 = vld [vmem:[#allocation2 + $0x50] sm:$0xff]
        %v1164 = vld [vmem:[#allocation2 + $0x58] sm:$0xff]
        %v1165 = vld [vmem:[#allocation2 + $0x60] sm:$0xff]
        %v1166 = vld [vmem:[#allocation2 + $0x68] sm:$0xff]
        %v1167 = vld [vmem:[#allocation2 + $0x70] sm:$0xff]
        %v1168 = vld [vmem:[#allocation2 + $0x78] sm:$0xff]
        %v1169 = vld [vmem:[#allocation2 + $0x80] sm:$0xff]
        %v1170 = vld [vmem:[#allocation2 + $0x88] sm:$0xff]
        %v1171 = vld [vmem:[#allocation2 + $0x90] sm:$0xff]
        %v1172 = vld [vmem:[#allocation2 + $0x98] sm:$0xff]
        %v1173 = vld [vmem:[#allocation2 + $0xa0] sm:$0xff]
        %v1174 = vld [vmem:[#allocation2 + $0xa8] sm:$0xff]
        %v1175 = vld [vmem:[#allocation2 + $0xb0] sm:$0xff]
        %v1176 = vld [vmem:[#allocation2 + $0xb8] sm:$0xff]
        %v1177 = vld [vmem:[#allocation2 + $0xc0] sm:$0xff]
        %v1178 = vld [vmem:[#allocation2 + $0xc8] sm:$0xff]
        %v1179 = vld [vmem:[#allocation2 + $0xd0] sm:$0xff]
        %v1180 = vld [vmem:[#allocation2 + $0xd8] sm:$0xff]
        %v1181 = vld [vmem:[#allocation2 + $0xe0] sm:$0xff]
        %v1182 = vld [vmem:[#allocation2 + $0xe8] sm:$0xff]
        %v1183 = vld [vmem:[#allocation2 + $0xf0] sm:$0xff]
        %v1184 = vld [vmem:[#allocation2 + $0xf8] sm:$0xff]
        %v1185 = vmax.f32 %v1089, %v1090
        %1186 = vmax.xlane.f32.xlu0 %v1185
        %v1187 = vpop.xlane.xlu0 %1186
        %v1188 = vmax.f32 %v1091, %v1092
        %1189 = vmax.xlane.f32.xlu0 %v1188
        %v1190 = vpop.xlane.xlu0 %1189
        %v1191 = vmax.f32 %v1093, %v1094
        %1192 = vmax.xlane.f32.xlu0 %v1191
        %v1193 = vpop.xlane.xlu0 %1192
        %v1194 = vmax.f32 %v1095, %v1096
        %1195 = vmax.xlane.f32.xlu0 %v1194
        %v1196 = vpop.xlane.xlu0 %1195
        %v1197 = vmax.f32 %v1097, %v1098
        %1198 = vmax.xlane.f32.xlu0 %v1197
        %v1199 = vpop.xlane.xlu0 %1198
        %v1200 = vmax.f32 %v1099, %v1100
        %1201 = vmax.xlane.f32.xlu0 %v1200
        %v1202 = vpop.xlane.xlu0 %1201
        %v1203 = vmax.f32 %v1101, %v1102
        %1204 = vmax.xlane.f32.xlu0 %v1203
        %v1205 = vpop.xlane.xlu0 %1204
        %v1206 = vmax.f32 %v1103, %v1104
        %1207 = vmax.xlane.f32.xlu0 %v1206
        %v1208 = vpop.xlane.xlu0 %1207
        %v1209 = vmax.f32 %v1105, %v1106
        %1210 = vmax.xlane.f32.xlu0 %v1209
        %v1211 = vpop.xlane.xlu0 %1210
        %v1212 = vmax.f32 %v1107, %v1108
        %1213 = vmax.xlane.f32.xlu0 %v1212
        %v1214 = vpop.xlane.xlu0 %1213
        %v1215 = vmax.f32 %v1109, %v1110
        %1216 = vmax.xlane.f32.xlu0 %v1215
        %v1217 = vpop.xlane.xlu0 %1216
        %v1218 = vmax.f32 %v1111, %v1112
        %1219 = vmax.xlane.f32.xlu0 %v1218
        %v1220 = vpop.xlane.xlu0 %1219
        %v1221 = vmax.f32 %v1113, %v1114
        %1222 = vmax.xlane.f32.xlu0 %v1221
        %v1223 = vpop.xlane.xlu0 %1222
        %v1224 = vmax.f32 %v1115, %v1116
        %1225 = vmax.xlane.f32.xlu0 %v1224
        %v1226 = vpop.xlane.xlu0 %1225
        %v1227 = vmax.f32 %v1117, %v1118
        %1228 = vmax.xlane.f32.xlu0 %v1227
        %v1229 = vpop.xlane.xlu0 %1228
        %v1230 = vmax.f32 %v1119, %v1120
        %1231 = vmax.xlane.f32.xlu0 %v1230
        %v1232 = vpop.xlane.xlu0 %1231
        %v1233 = vmax.f32 %v1121, %v1122
        %1234 = vmax.xlane.f32.xlu0 %v1233
        %v1235 = vpop.xlane.xlu0 %1234
        %v1236 = vmax.f32 %v1123, %v1124
        %1237 = vmax.xlane.f32.xlu0 %v1236
        %v1238 = vpop.xlane.xlu0 %1237
        %v1239 = vmax.f32 %v1125, %v1126
        %1240 = vmax.xlane.f32.xlu0 %v1239
        %v1241 = vpop.xlane.xlu0 %1240
        %v1242 = vmax.f32 %v1127, %v1128
        %1243 = vmax.xlane.f32.xlu0 %v1242
        %v1244 = vpop.xlane.xlu0 %1243
        %v1245 = vmax.f32 %v1129, %v1130
        %1246 = vmax.xlane.f32.xlu0 %v1245
        %v1247 = vpop.xlane.xlu0 %1246
        %v1248 = vmax.f32 %v1131, %v1132
        %1249 = vmax.xlane.f32.xlu0 %v1248
        %v1250 = vpop.xlane.xlu0 %1249
        %v1251 = vmax.f32 %v1133, %v1134
        %1252 = vmax.xlane.f32.xlu0 %v1251
        %v1253 = vpop.xlane.xlu0 %1252
        %v1254 = vmax.f32 %v1135, %v1136
        %1255 = vmax.xlane.f32.xlu0 %v1254
        %v1256 = vpop.xlane.xlu0 %1255
        %v1257 = vmax.f32 %v1137, %v1138
        %1258 = vmax.xlane.f32.xlu0 %v1257
        %v1259 = vpop.xlane.xlu0 %1258
        %v1260 = vmax.f32 %v1139, %v1140
        %1261 = vmax.xlane.f32.xlu0 %v1260
        %v1262 = vpop.xlane.xlu0 %1261
        %v1263 = vmax.f32 %v1141, %v1142
        %1264 = vmax.xlane.f32.xlu0 %v1263
        %v1265 = vpop.xlane.xlu0 %1264
        %v1266 = vmax.f32 %v1143, %v1144
        %1267 = vmax.xlane.f32.xlu0 %v1266
        %v1268 = vpop.xlane.xlu0 %1267
        %v1269 = vmax.f32 %v1145, %v1146
        %1270 = vmax.xlane.f32.xlu0 %v1269
        %v1271 = vpop.xlane.xlu0 %1270
        %v1272 = vmax.f32 %v1147, %v1148
        %1273 = vmax.xlane.f32.xlu0 %v1272
        %v1274 = vpop.xlane.xlu0 %1273
        %v1275 = vmax.f32 %v1149, %v1150
        %1276 = vmax.xlane.f32.xlu0 %v1275
        %v1277 = vpop.xlane.xlu0 %1276
        %v1278 = vmax.f32 %v1151, %v1152
        %1279 = vmax.xlane.f32.xlu0 %v1278
        %v1280 = vpop.xlane.xlu0 %1279
        %v1281 = vmax.f32 %v1153, %v1187
        %v1282 = vmax.f32 %v1154, %v1190
        %v1283 = vmax.f32 %v1155, %v1193
        %v1284 = vmax.f32 %v1156, %v1196
        %v1285 = vmax.f32 %v1157, %v1199
        %v1286 = vmax.f32 %v1158, %v1202
        %v1287 = vmax.f32 %v1159, %v1205
        %v1288 = vmax.f32 %v1160, %v1208
        %v1289 = vmax.f32 %v1161, %v1211
        %v1290 = vmax.f32 %v1162, %v1214
        %v1291 = vmax.f32 %v1163, %v1217
        %v1292 = vmax.f32 %v1164, %v1220
        %v1293 = vmax.f32 %v1165, %v1223
        %v1294 = vmax.f32 %v1166, %v1226
        %v1295 = vmax.f32 %v1167, %v1229
        %v1296 = vmax.f32 %v1168, %v1232
        %v1297 = vmax.f32 %v1169, %v1235
        %v1298 = vmax.f32 %v1170, %v1238
        %v1299 = vmax.f32 %v1171, %v1241
        %v1300 = vmax.f32 %v1172, %v1244
        %v1301 = vmax.f32 %v1173, %v1247
        %v1302 = vmax.f32 %v1174, %v1250
        %v1303 = vmax.f32 %v1175, %v1253
        %v1304 = vmax.f32 %v1176, %v1256
        %v1305 = vmax.f32 %v1177, %v1259
        %v1306 = vmax.f32 %v1178, %v1262
        %v1307 = vmax.f32 %v1179, %v1265
        %v1308 = vmax.f32 %v1180, %v1268
        %v1309 = vmax.f32 %v1181, %v1271
        %v1310 = vmax.f32 %v1182, %v1274
        %v1311 = vmax.f32 %v1183, %v1277
        %v1312 = vmax.f32 %v1184, %v1280
        %v1313 = vsub.f32 %v1153, %v1281
        %v1314 = vsub.f32 %v1154, %v1282
        %v1315 = vsub.f32 %v1155, %v1283
        %v1316 = vsub.f32 %v1156, %v1284
        %v1317 = vsub.f32 %v1157, %v1285
        %v1318 = vsub.f32 %v1158, %v1286
        %v1319 = vsub.f32 %v1159, %v1287
        %v1320 = vsub.f32 %v1160, %v1288
        %v1321 = vsub.f32 %v1161, %v1289
        %v1322 = vsub.f32 %v1162, %v1290
        %v1323 = vsub.f32 %v1163, %v1291
        %v1324 = vsub.f32 %v1164, %v1292
        %v1325 = vsub.f32 %v1165, %v1293
        %v1326 = vsub.f32 %v1166, %v1294
        %v1327 = vsub.f32 %v1167, %v1295
        %v1328 = vsub.f32 %v1168, %v1296
        %v1329 = vsub.f32 %v1169, %v1297
        %v1330 = vsub.f32 %v1170, %v1298
        %v1331 = vsub.f32 %v1171, %v1299
        %v1332 = vsub.f32 %v1172, %v1300
        %v1333 = vsub.f32 %v1173, %v1301
        %v1334 = vsub.f32 %v1174, %v1302
        %v1335 = vsub.f32 %v1175, %v1303
        %v1336 = vsub.f32 %v1176, %v1304
        %v1337 = vsub.f32 %v1177, %v1305
        %v1338 = vsub.f32 %v1178, %v1306
        %v1339 = vsub.f32 %v1179, %v1307
        %v1340 = vsub.f32 %v1180, %v1308
        %v1341 = vsub.f32 %v1181, %v1309
        %v1342 = vsub.f32 %v1182, %v1310
        %v1343 = vsub.f32 %v1183, %v1311
        %v1344 = vsub.f32 %v1184, %v1312
        %v1345 = vmul.f32 %v1313, 1.442695
        %v1346 = vpow.pop %v1345
        %v1347 = vmul.f32 %v1314, 1.442695
        %v1348 = vpow.pop %v1347
        %v1349 = vmul.f32 %v1315, 1.442695
        %v1350 = vpow.pop %v1349
        %v1351 = vmul.f32 %v1316, 1.442695
        %v1352 = vpow.pop %v1351
        %v1353 = vmul.f32 %v1317, 1.442695
        %v1354 = vpow.pop %v1353
        %v1355 = vmul.f32 %v1318, 1.442695
        %v1356 = vpow.pop %v1355
        %v1357 = vmul.f32 %v1319, 1.442695
        %v1358 = vpow.pop %v1357
        %v1359 = vmul.f32 %v1320, 1.442695
        %v1360 = vpow.pop %v1359
        %v1361 = vmul.f32 %v1321, 1.442695
        %v1362 = vpow.pop %v1361
        %v1363 = vmul.f32 %v1322, 1.442695
        %v1364 = vpow.pop %v1363
        %v1365 = vmul.f32 %v1323, 1.442695
        %v1366 = vpow.pop %v1365
        %v1367 = vmul.f32 %v1324, 1.442695
        %v1368 = vpow.pop %v1367
        %v1369 = vmul.f32 %v1325, 1.442695
        %v1370 = vpow.pop %v1369
        %v1371 = vmul.f32 %v1326, 1.442695
        %v1372 = vpow.pop %v1371
        %v1373 = vmul.f32 %v1327, 1.442695
        %v1374 = vpow.pop %v1373
        %v1375 = vmul.f32 %v1328, 1.442695
        %v1376 = vpow.pop %v1375
        %v1377 = vmul.f32 %v1329, 1.442695
        %v1378 = vpow.pop %v1377
        %v1379 = vmul.f32 %v1330, 1.442695
        %v1380 = vpow.pop %v1379
        %v1381 = vmul.f32 %v1331, 1.442695
        %v1382 = vpow.pop %v1381
        %v1383 = vmul.f32 %v1332, 1.442695
        %v1384 = vpow.pop %v1383
        %v1385 = vmul.f32 %v1333, 1.442695
        %v1386 = vpow.pop %v1385
        %v1387 = vmul.f32 %v1334, 1.442695
        %v1388 = vpow.pop %v1387
        %v1389 = vmul.f32 %v1335, 1.442695
        %v1390 = vpow.pop %v1389
        %v1391 = vmul.f32 %v1336, 1.442695
        %v1392 = vpow.pop %v1391
        %v1393 = vmul.f32 %v1337, 1.442695
        %v1394 = vpow.pop %v1393
        %v1395 = vmul.f32 %v1338, 1.442695
        %v1396 = vpow.pop %v1395
        %v1397 = vmul.f32 %v1339, 1.442695
        %v1398 = vpow.pop %v1397
        %v1399 = vmul.f32 %v1340, 1.442695
        %v1400 = vpow.pop %v1399
        %v1401 = vmul.f32 %v1341, 1.442695
        %v1402 = vpow.pop %v1401
        %v1403 = vmul.f32 %v1342, 1.442695
        %v1404 = vpow.pop %v1403
        %v1405 = vmul.f32 %v1343, 1.442695
        %v1406 = vpow.pop %v1405
        %v1407 = vmul.f32 %v1344, 1.442695
        %v1408 = vpow.pop %v1407
        %1410 = vset.pattern.permute.xlu0 0
        %1411 = vperm.xlu0 %1410, %v1281
        %v1412 = vpop.permute.xlu0 %1411
        %1415 = vset.pattern.permute.xlu0 0
        %1416 = vperm.xlu0 %1415, %v1282
        %v1417 = vpop.permute.xlu0 %1416
        %1420 = vset.pattern.permute.xlu0 0
        %1421 = vperm.xlu0 %1420, %v1283
        %v1422 = vpop.permute.xlu0 %1421
        %1425 = vset.pattern.permute.xlu0 0
        %1426 = vperm.xlu0 %1425, %v1284
        %v1427 = vpop.permute.xlu0 %1426
        %1430 = vset.pattern.permute.xlu0 0
        %1431 = vperm.xlu0 %1430, %v1285
        %v1432 = vpop.permute.xlu0 %1431
        %1435 = vset.pattern.permute.xlu0 0
        %1436 = vperm.xlu0 %1435, %v1286
        %v1437 = vpop.permute.xlu0 %1436
        %1440 = vset.pattern.permute.xlu0 0
        %1441 = vperm.xlu0 %1440, %v1287
        %v1442 = vpop.permute.xlu0 %1441
        %1445 = vset.pattern.permute.xlu0 0
        %1446 = vperm.xlu0 %1445, %v1288
        %v1447 = vpop.permute.xlu0 %1446
        %1450 = vset.pattern.permute.xlu0 0
        %1451 = vperm.xlu0 %1450, %v1289
        %v1452 = vpop.permute.xlu0 %1451
        %1455 = vset.pattern.permute.xlu0 0
        %1456 = vperm.xlu0 %1455, %v1290
        %v1457 = vpop.permute.xlu0 %1456
        %1460 = vset.pattern.permute.xlu0 0
        %1461 = vperm.xlu0 %1460, %v1291
        %v1462 = vpop.permute.xlu0 %1461
        %1465 = vset.pattern.permute.xlu0 0
        %1466 = vperm.xlu0 %1465, %v1292
        %v1467 = vpop.permute.xlu0 %1466
        %1470 = vset.pattern.permute.xlu0 0
        %1471 = vperm.xlu0 %1470, %v1293
        %v1472 = vpop.permute.xlu0 %1471
        %1475 = vset.pattern.permute.xlu0 0
        %1476 = vperm.xlu0 %1475, %v1294
        %v1477 = vpop.permute.xlu0 %1476
        %1480 = vset.pattern.permute.xlu0 0
        %1481 = vperm.xlu0 %1480, %v1295
        %v1482 = vpop.permute.xlu0 %1481
        %1485 = vset.pattern.permute.xlu0 0
        %1486 = vperm.xlu0 %1485, %v1296
        %v1487 = vpop.permute.xlu0 %1486
        %1490 = vset.pattern.permute.xlu0 0
        %1491 = vperm.xlu0 %1490, %v1297
        %v1492 = vpop.permute.xlu0 %1491
        %1495 = vset.pattern.permute.xlu0 0
        %1496 = vperm.xlu0 %1495, %v1298
        %v1497 = vpop.permute.xlu0 %1496
        %1500 = vset.pattern.permute.xlu0 0
        %1501 = vperm.xlu0 %1500, %v1299
        %v1502 = vpop.permute.xlu0 %1501
        %1505 = vset.pattern.permute.xlu0 0
        %1506 = vperm.xlu0 %1505, %v1300
        %v1507 = vpop.permute.xlu0 %1506
        %1510 = vset.pattern.permute.xlu0 0
        %1511 = vperm.xlu0 %1510, %v1301
        %v1512 = vpop.permute.xlu0 %1511
        %1515 = vset.pattern.permute.xlu0 0
        %1516 = vperm.xlu0 %1515, %v1302
        %v1517 = vpop.permute.xlu0 %1516
        %1520 = vset.pattern.permute.xlu0 0
        %1521 = vperm.xlu0 %1520, %v1303
        %v1522 = vpop.permute.xlu0 %1521
        %1525 = vset.pattern.permute.xlu0 0
        %1526 = vperm.xlu0 %1525, %v1304
        %v1527 = vpop.permute.xlu0 %1526
        %1530 = vset.pattern.permute.xlu0 0
        %1531 = vperm.xlu0 %1530, %v1305
        %v1532 = vpop.permute.xlu0 %1531
        %1535 = vset.pattern.permute.xlu0 0
        %1536 = vperm.xlu0 %1535, %v1306
        %v1537 = vpop.permute.xlu0 %1536
        %1540 = vset.pattern.permute.xlu0 0
        %1541 = vperm.xlu0 %1540, %v1307
        %v1542 = vpop.permute.xlu0 %1541
        %1545 = vset.pattern.permute.xlu0 0
        %1546 = vperm.xlu0 %1545, %v1308
        %v1547 = vpop.permute.xlu0 %1546
        %1550 = vset.pattern.permute.xlu0 0
        %1551 = vperm.xlu0 %1550, %v1309
        %v1552 = vpop.permute.xlu0 %1551
        %1555 = vset.pattern.permute.xlu0 0
        %1556 = vperm.xlu0 %1555, %v1310
        %v1557 = vpop.permute.xlu0 %1556
        %1560 = vset.pattern.permute.xlu0 0
        %1561 = vperm.xlu0 %1560, %v1311
        %v1562 = vpop.permute.xlu0 %1561
        %1565 = vset.pattern.permute.xlu0 0
        %1566 = vperm.xlu0 %1565, %v1312
        %v1567 = vpop.permute.xlu0 %1566
        %v1569 = vsub.f32 %v1089, %v1412
        %v1570 = vsub.f32 %v1090, %v1412
        %v1571 = vsub.f32 %v1091, %v1417
        %v1572 = vsub.f32 %v1092, %v1417
        %v1573 = vsub.f32 %v1093, %v1422
        %v1574 = vsub.f32 %v1094, %v1422
        %v1575 = vsub.f32 %v1095, %v1427
        %v1576 = vsub.f32 %v1096, %v1427
        %v1577 = vsub.f32 %v1097, %v1432
        %v1578 = vsub.f32 %v1098, %v1432
        %v1579 = vsub.f32 %v1099, %v1437
        %v1580 = vsub.f32 %v1100, %v1437
        %v1581 = vsub.f32 %v1101, %v1442
        %v1582 = vsub.f32 %v1102, %v1442
        %v1583 = vsub.f32 %v1103, %v1447
        %v1584 = vsub.f32 %v1104, %v1447
        %v1585 = vsub.f32 %v1105, %v1452
        %v1586 = vsub.f32 %v1106, %v1452
        %v1587 = vsub.f32 %v1107, %v1457
        %v1588 = vsub.f32 %v1108, %v1457
        %v1589 = vsub.f32 %v1109, %v1462
        %v1590 = vsub.f32 %v1110, %v1462
        %v1591 = vsub.f32 %v1111, %v1467
        %v1592 = vsub.f32 %v1112, %v1467
        %v1593 = vsub.f32 %v1113, %v1472
        %v1594 = vsub.f32 %v1114, %v1472
        %v1595 = vsub.f32 %v1115, %v1477
        %v1596 = vsub.f32 %v1116, %v1477
        %v1597 = vsub.f32 %v1117, %v1482
        %v1598 = vsub.f32 %v1118, %v1482
        %v1599 = vsub.f32 %v1119, %v1487
        %v1600 = vsub.f32 %v1120, %v1487
        %v1601 = vsub.f32 %v1121, %v1492
        %v1602 = vsub.f32 %v1122, %v1492
        %v1603 = vsub.f32 %v1123, %v1497
        %v1604 = vsub.f32 %v1124, %v1497
        %v1605 = vsub.f32 %v1125, %v1502
        %v1606 = vsub.f32 %v1126, %v1502
        %v1607 = vsub.f32 %v1127, %v1507
        %v1608 = vsub.f32 %v1128, %v1507
        %v1609 = vsub.f32 %v1129, %v1512
        %v1610 = vsub.f32 %v1130, %v1512
        %v1611 = vsub.f32 %v1131, %v1517
        %v1612 = vsub.f32 %v1132, %v1517
        %v1613 = vsub.f32 %v1133, %v1522
        %v1614 = vsub.f32 %v1134, %v1522
        %v1615 = vsub.f32 %v1135, %v1527
        %v1616 = vsub.f32 %v1136, %v1527
        %v1617 = vsub.f32 %v1137, %v1532
        %v1618 = vsub.f32 %v1138, %v1532
        %v1619 = vsub.f32 %v1139, %v1537
        %v1620 = vsub.f32 %v1140, %v1537
        %v1621 = vsub.f32 %v1141, %v1542
        %v1622 = vsub.f32 %v1142, %v1542
        %v1623 = vsub.f32 %v1143, %v1547
        %v1624 = vsub.f32 %v1144, %v1547
        %v1625 = vsub.f32 %v1145, %v1552
        %v1626 = vsub.f32 %v1146, %v1552
        %v1627 = vsub.f32 %v1147, %v1557
        %v1628 = vsub.f32 %v1148, %v1557
        %v1629 = vsub.f32 %v1149, %v1562
        %v1630 = vsub.f32 %v1150, %v1562
        %v1631 = vsub.f32 %v1151, %v1567
        %v1632 = vsub.f32 %v1152, %v1567
        %v1633 = vmul.f32 %v1569, 1.442695
        %v1634 = vpow.pop %v1633
        %v1635 = vmul.f32 %v1570, 1.442695
        %v1636 = vpow.pop %v1635
        %v1637 = vmul.f32 %v1571, 1.442695
        %v1638 = vpow.pop %v1637
        %v1639 = vmul.f32 %v1572, 1.442695
        %v1640 = vpow.pop %v1639
        %v1641 = vmul.f32 %v1573, 1.442695
        %v1642 = vpow.pop %v1641
        %v1643 = vmul.f32 %v1574, 1.442695
        %v1644 = vpow.pop %v1643
        %v1645 = vmul.f32 %v1575, 1.442695
        %v1646 = vpow.pop %v1645
        %v1647 = vmul.f32 %v1576, 1.442695
        %v1648 = vpow.pop %v1647
        %v1649 = vmul.f32 %v1577, 1.442695
        %v1650 = vpow.pop %v1649
        %v1651 = vmul.f32 %v1578, 1.442695
        %v1652 = vpow.pop %v1651
        %v1653 = vmul.f32 %v1579, 1.442695
        %v1654 = vpow.pop %v1653
        %v1655 = vmul.f32 %v1580, 1.442695
        %v1656 = vpow.pop %v1655
        %v1657 = vmul.f32 %v1581, 1.442695
        %v1658 = vpow.pop %v1657
        %v1659 = vmul.f32 %v1582, 1.442695
        %v1660 = vpow.pop %v1659
        %v1661 = vmul.f32 %v1583, 1.442695
        %v1662 = vpow.pop %v1661
        %v1663 = vmul.f32 %v1584, 1.442695
        %v1664 = vpow.pop %v1663
        %v1665 = vmul.f32 %v1585, 1.442695
        %v1666 = vpow.pop %v1665
        %v1667 = vmul.f32 %v1586, 1.442695
        %v1668 = vpow.pop %v1667
        %v1669 = vmul.f32 %v1587, 1.442695
        %v1670 = vpow.pop %v1669
        %v1671 = vmul.f32 %v1588, 1.442695
        %v1672 = vpow.pop %v1671
        %v1673 = vmul.f32 %v1589, 1.442695
        %v1674 = vpow.pop %v1673
        %v1675 = vmul.f32 %v1590, 1.442695
        %v1676 = vpow.pop %v1675
        %v1677 = vmul.f32 %v1591, 1.442695
        %v1678 = vpow.pop %v1677
        %v1679 = vmul.f32 %v1592, 1.442695
        %v1680 = vpow.pop %v1679
        %v1681 = vmul.f32 %v1593, 1.442695
        %v1682 = vpow.pop %v1681
        %v1683 = vmul.f32 %v1594, 1.442695
        %v1684 = vpow.pop %v1683
        %v1685 = vmul.f32 %v1595, 1.442695
        %v1686 = vpow.pop %v1685
        %v1687 = vmul.f32 %v1596, 1.442695
        %v1688 = vpow.pop %v1687
        %v1689 = vmul.f32 %v1597, 1.442695
        %v1690 = vpow.pop %v1689
        %v1691 = vmul.f32 %v1598, 1.442695
        %v1692 = vpow.pop %v1691
        %v1693 = vmul.f32 %v1599, 1.442695
        %v1694 = vpow.pop %v1693
        %v1695 = vmul.f32 %v1600, 1.442695
        %v1696 = vpow.pop %v1695
        %v1697 = vmul.f32 %v1601, 1.442695
        %v1698 = vpow.pop %v1697
        %v1699 = vmul.f32 %v1602, 1.442695
        %v1700 = vpow.pop %v1699
        %v1701 = vmul.f32 %v1603, 1.442695
        %v1702 = vpow.pop %v1701
        %v1703 = vmul.f32 %v1604, 1.442695
        %v1704 = vpow.pop %v1703
        %v1705 = vmul.f32 %v1605, 1.442695
        %v1706 = vpow.pop %v1705
        %v1707 = vmul.f32 %v1606, 1.442695
        %v1708 = vpow.pop %v1707
        %v1709 = vmul.f32 %v1607, 1.442695
        %v1710 = vpow.pop %v1709
        %v1711 = vmul.f32 %v1608, 1.442695
        %v1712 = vpow.pop %v1711
        %v1713 = vmul.f32 %v1609, 1.442695
        %v1714 = vpow.pop %v1713
        %v1715 = vmul.f32 %v1610, 1.442695
        %v1716 = vpow.pop %v1715
        %v1717 = vmul.f32 %v1611, 1.442695
        %v1718 = vpow.pop %v1717
        %v1719 = vmul.f32 %v1612, 1.442695
        %v1720 = vpow.pop %v1719
        %v1721 = vmul.f32 %v1613, 1.442695
        %v1722 = vpow.pop %v1721
        %v1723 = vmul.f32 %v1614, 1.442695
        %v1724 = vpow.pop %v1723
        %v1725 = vmul.f32 %v1615, 1.442695
        %v1726 = vpow.pop %v1725
        %v1727 = vmul.f32 %v1616, 1.442695
        %v1728 = vpow.pop %v1727
        %v1729 = vmul.f32 %v1617, 1.442695
        %v1730 = vpow.pop %v1729
        %v1731 = vmul.f32 %v1618, 1.442695
        %v1732 = vpow.pop %v1731
        %v1733 = vmul.f32 %v1619, 1.442695
        %v1734 = vpow.pop %v1733
        %v1735 = vmul.f32 %v1620, 1.442695
        %v1736 = vpow.pop %v1735
        %v1737 = vmul.f32 %v1621, 1.442695
        %v1738 = vpow.pop %v1737
        %v1739 = vmul.f32 %v1622, 1.442695
        %v1740 = vpow.pop %v1739
        %v1741 = vmul.f32 %v1623, 1.442695
        %v1742 = vpow.pop %v1741
        %v1743 = vmul.f32 %v1624, 1.442695
        %v1744 = vpow.pop %v1743
        %v1745 = vmul.f32 %v1625, 1.442695
        %v1746 = vpow.pop %v1745
        %v1747 = vmul.f32 %v1626, 1.442695
        %v1748 = vpow.pop %v1747
        %v1749 = vmul.f32 %v1627, 1.442695
        %v1750 = vpow.pop %v1749
        %v1751 = vmul.f32 %v1628, 1.442695
        %v1752 = vpow.pop %v1751
        %v1753 = vmul.f32 %v1629, 1.442695
        %v1754 = vpow.pop %v1753
        %v1755 = vmul.f32 %v1630, 1.442695
        %v1756 = vpow.pop %v1755
        %v1757 = vmul.f32 %v1631, 1.442695
        %v1758 = vpow.pop %v1757
        %v1759 = vmul.f32 %v1632, 1.442695
        %v1760 = vpow.pop %v1759
        %v1761 = vld [vmem:[#allocation3] sm:$0xff]
        %v1762 = vld [vmem:[#allocation3 + $0x8] sm:$0xff]
        %v1763 = vld [vmem:[#allocation3 + $0x10] sm:$0xff]
        %v1764 = vld [vmem:[#allocation3 + $0x18] sm:$0xff]
        %v1765 = vld [vmem:[#allocation3 + $0x20] sm:$0xff]
        %v1766 = vld [vmem:[#allocation3 + $0x28] sm:$0xff]
        %v1767 = vld [vmem:[#allocation3 + $0x30] sm:$0xff]
        %v1768 = vld [vmem:[#allocation3 + $0x38] sm:$0xff]
        %v1769 = vld [vmem:[#allocation3 + $0x40] sm:$0xff]
        %v1770 = vld [vmem:[#allocation3 + $0x48] sm:$0xff]
        %v1771 = vld [vmem:[#allocation3 + $0x50] sm:$0xff]
        %v1772 = vld [vmem:[#allocation3 + $0x58] sm:$0xff]
        %v1773 = vld [vmem:[#allocation3 + $0x60] sm:$0xff]
        %v1774 = vld [vmem:[#allocation3 + $0x68] sm:$0xff]
        %v1775 = vld [vmem:[#allocation3 + $0x70] sm:$0xff]
        %v1776 = vld [vmem:[#allocation3 + $0x78] sm:$0xff]
        %v1777 = vld [vmem:[#allocation3 + $0x80] sm:$0xff]
        %v1778 = vld [vmem:[#allocation3 + $0x88] sm:$0xff]
        %v1779 = vld [vmem:[#allocation3 + $0x90] sm:$0xff]
        %v1780 = vld [vmem:[#allocation3 + $0x98] sm:$0xff]
        %v1781 = vld [vmem:[#allocation3 + $0xa0] sm:$0xff]
        %v1782 = vld [vmem:[#allocation3 + $0xa8] sm:$0xff]
        %v1783 = vld [vmem:[#allocation3 + $0xb0] sm:$0xff]
        %v1784 = vld [vmem:[#allocation3 + $0xb8] sm:$0xff]
        %v1785 = vld [vmem:[#allocation3 + $0xc0] sm:$0xff]
        %v1786 = vld [vmem:[#allocation3 + $0xc8] sm:$0xff]
        %v1787 = vld [vmem:[#allocation3 + $0xd0] sm:$0xff]
        %v1788 = vld [vmem:[#allocation3 + $0xd8] sm:$0xff]
        %v1789 = vld [vmem:[#allocation3 + $0xe0] sm:$0xff]
        %v1790 = vld [vmem:[#allocation3 + $0xe8] sm:$0xff]
        %v1791 = vld [vmem:[#allocation3 + $0xf0] sm:$0xff]
        %v1792 = vld [vmem:[#allocation3 + $0xf8] sm:$0xff]
        %v1793 = vmul.f32 %v1346, %v1761
        %v1794 = vmul.f32 %v1348, %v1762
        %v1795 = vmul.f32 %v1350, %v1763
        %v1796 = vmul.f32 %v1352, %v1764
        %v1797 = vmul.f32 %v1354, %v1765
        %v1798 = vmul.f32 %v1356, %v1766
        %v1799 = vmul.f32 %v1358, %v1767
        %v1800 = vmul.f32 %v1360, %v1768
        %v1801 = vmul.f32 %v1362, %v1769
        %v1802 = vmul.f32 %v1364, %v1770
        %v1803 = vmul.f32 %v1366, %v1771
        %v1804 = vmul.f32 %v1368, %v1772
        %v1805 = vmul.f32 %v1370, %v1773
        %v1806 = vmul.f32 %v1372, %v1774
        %v1807 = vmul.f32 %v1374, %v1775
        %v1808 = vmul.f32 %v1376, %v1776
        %v1809 = vmul.f32 %v1378, %v1777
        %v1810 = vmul.f32 %v1380, %v1778
        %v1811 = vmul.f32 %v1382, %v1779
        %v1812 = vmul.f32 %v1384, %v1780
        %v1813 = vmul.f32 %v1386, %v1781
        %v1814 = vmul.f32 %v1388, %v1782
        %v1815 = vmul.f32 %v1390, %v1783
        %v1816 = vmul.f32 %v1392, %v1784
        %v1817 = vmul.f32 %v1394, %v1785
        %v1818 = vmul.f32 %v1396, %v1786
        %v1819 = vmul.f32 %v1398, %v1787
        %v1820 = vmul.f32 %v1400, %v1788
        %v1821 = vmul.f32 %v1402, %v1789
        %v1822 = vmul.f32 %v1404, %v1790
        %v1823 = vmul.f32 %v1406, %v1791
        %v1824 = vmul.f32 %v1408, %v1792
        %v1825 = vadd.f32 %v1634, %v1636
        %1826 = vadd.xlane.f32.xlu0 %v1825
        %v1827 = vpop.xlane.xlu0 %1826
        %v1828 = vadd.f32 %v1638, %v1640
        %1829 = vadd.xlane.f32.xlu0 %v1828
        %v1830 = vpop.xlane.xlu0 %1829
        %v1831 = vadd.f32 %v1642, %v1644
        %1832 = vadd.xlane.f32.xlu0 %v1831
        %v1833 = vpop.xlane.xlu0 %1832
        %v1834 = vadd.f32 %v1646, %v1648
        %1835 = vadd.xlane.f32.xlu0 %v1834
        %v1836 = vpop.xlane.xlu0 %1835
        %v1837 = vadd.f32 %v1650, %v1652
        %1838 = vadd.xlane.f32.xlu0 %v1837
        %v1839 = vpop.xlane.xlu0 %1838
        %v1840 = vadd.f32 %v1654, %v1656
        %1841 = vadd.xlane.f32.xlu0 %v1840
        %v1842 = vpop.xlane.xlu0 %1841
        %v1843 = vadd.f32 %v1658, %v1660
        %1844 = vadd.xlane.f32.xlu0 %v1843
        %v1845 = vpop.xlane.xlu0 %1844
        %v1846 = vadd.f32 %v1662, %v1664
        %1847 = vadd.xlane.f32.xlu0 %v1846
        %v1848 = vpop.xlane.xlu0 %1847
        %v1849 = vadd.f32 %v1666, %v1668
        %1850 = vadd.xlane.f32.xlu0 %v1849
        %v1851 = vpop.xlane.xlu0 %1850
        %v1852 = vadd.f32 %v1670, %v1672
        %1853 = vadd.xlane.f32.xlu0 %v1852
        %v1854 = vpop.xlane.xlu0 %1853
        %v1855 = vadd.f32 %v1674, %v1676
        %1856 = vadd.xlane.f32.xlu0 %v1855
        %v1857 = vpop.xlane.xlu0 %1856
        %v1858 = vadd.f32 %v1678, %v1680
        %1859 = vadd.xlane.f32.xlu0 %v1858
        %v1860 = vpop.xlane.xlu0 %1859
        %v1861 = vadd.f32 %v1682, %v1684
        %1862 = vadd.xlane.f32.xlu0 %v1861
        %v1863 = vpop.xlane.xlu0 %1862
        %v1864 = vadd.f32 %v1686, %v1688
        %1865 = vadd.xlane.f32.xlu0 %v1864
        %v1866 = vpop.xlane.xlu0 %1865
        %v1867 = vadd.f32 %v1690, %v1692
        %1868 = vadd.xlane.f32.xlu0 %v1867
        %v1869 = vpop.xlane.xlu0 %1868
        %v1870 = vadd.f32 %v1694, %v1696
        %1871 = vadd.xlane.f32.xlu0 %v1870
        %v1872 = vpop.xlane.xlu0 %1871
        %v1873 = vadd.f32 %v1698, %v1700
        %1874 = vadd.xlane.f32.xlu0 %v1873
        %v1875 = vpop.xlane.xlu0 %1874
        %v1876 = vadd.f32 %v1702, %v1704
        %1877 = vadd.xlane.f32.xlu0 %v1876
        %v1878 = vpop.xlane.xlu0 %1877
        %v1879 = vadd.f32 %v1706, %v1708
        %1880 = vadd.xlane.f32.xlu0 %v1879
        %v1881 = vpop.xlane.xlu0 %1880
        %v1882 = vadd.f32 %v1710, %v1712
        %1883 = vadd.xlane.f32.xlu0 %v1882
        %v1884 = vpop.xlane.xlu0 %1883
        %v1885 = vadd.f32 %v1714, %v1716
        %1886 = vadd.xlane.f32.xlu0 %v1885
        %v1887 = vpop.xlane.xlu0 %1886
        %v1888 = vadd.f32 %v1718, %v1720
        %1889 = vadd.xlane.f32.xlu0 %v1888
        %v1890 = vpop.xlane.xlu0 %1889
        %v1891 = vadd.f32 %v1722, %v1724
        %1892 = vadd.xlane.f32.xlu0 %v1891
        %v1893 = vpop.xlane.xlu0 %1892
        %v1894 = vadd.f32 %v1726, %v1728
        %1895 = vadd.xlane.f32.xlu0 %v1894
        %v1896 = vpop.xlane.xlu0 %1895
        %v1897 = vadd.f32 %v1730, %v1732
        %1898 = vadd.xlane.f32.xlu0 %v1897
        %v1899 = vpop.xlane.xlu0 %1898
        %v1900 = vadd.f32 %v1734, %v1736
        %1901 = vadd.xlane.f32.xlu0 %v1900
        %v1902 = vpop.xlane.xlu0 %1901
        %v1903 = vadd.f32 %v1738, %v1740
        %1904 = vadd.xlane.f32.xlu0 %v1903
        %v1905 = vpop.xlane.xlu0 %1904
        %v1906 = vadd.f32 %v1742, %v1744
        %1907 = vadd.xlane.f32.xlu0 %v1906
        %v1908 = vpop.xlane.xlu0 %1907
        %v1909 = vadd.f32 %v1746, %v1748
        %1910 = vadd.xlane.f32.xlu0 %v1909
        %v1911 = vpop.xlane.xlu0 %1910
        %v1912 = vadd.f32 %v1750, %v1752
        %1913 = vadd.xlane.f32.xlu0 %v1912
        %v1914 = vpop.xlane.xlu0 %1913
        %v1915 = vadd.f32 %v1754, %v1756
        %1916 = vadd.xlane.f32.xlu0 %v1915
        %v1917 = vpop.xlane.xlu0 %1916
        %v1918 = vadd.f32 %v1758, %v1760
        %1919 = vadd.xlane.f32.xlu0 %v1918
        %v1920 = vpop.xlane.xlu0 %1919
        %v1921 = vadd.f32 %v1793, %v1827
        %v1922 = vadd.f32 %v1794, %v1830
        %v1923 = vadd.f32 %v1795, %v1833
        %v1924 = vadd.f32 %v1796, %v1836
        %v1925 = vadd.f32 %v1797, %v1839
        %v1926 = vadd.f32 %v1798, %v1842
        %v1927 = vadd.f32 %v1799, %v1845
        %v1928 = vadd.f32 %v1800, %v1848
        %v1929 = vadd.f32 %v1801, %v1851
        %v1930 = vadd.f32 %v1802, %v1854
        %v1931 = vadd.f32 %v1803, %v1857
        %v1932 = vadd.f32 %v1804, %v1860
        %v1933 = vadd.f32 %v1805, %v1863
        %v1934 = vadd.f32 %v1806, %v1866
        %v1935 = vadd.f32 %v1807, %v1869
        %v1936 = vadd.f32 %v1808, %v1872
        %v1937 = vadd.f32 %v1809, %v1875
        %v1938 = vadd.f32 %v1810, %v1878
        %v1939 = vadd.f32 %v1811, %v1881
        %v1940 = vadd.f32 %v1812, %v1884
        %v1941 = vadd.f32 %v1813, %v1887
        %v1942 = vadd.f32 %v1814, %v1890
        %v1943 = vadd.f32 %v1815, %v1893
        %v1944 = vadd.f32 %v1816, %v1896
        %v1945 = vadd.f32 %v1817, %v1899
        %v1946 = vadd.f32 %v1818, %v1902
        %v1947 = vadd.f32 %v1819, %v1905
        %v1948 = vadd.f32 %v1820, %v1908
        %v1949 = vadd.f32 %v1821, %v1911
        %v1950 = vadd.f32 %v1822, %v1914
        %v1951 = vadd.f32 %v1823, %v1917
        %v1952 = vadd.f32 %v1824, %v1920
        %vm1953 = vcmask 7168
        %1954 = vst.msk [vmem:[#allocation3] sm:$0xff] %vm1953, %v1921
        %1955 = vst.msk [vmem:[#allocation3 + $0x8] sm:$0xff] %vm1953, %v1922
        %1956 = vst.msk [vmem:[#allocation3 + $0x10] sm:$0xff] %vm1953, %v1923
        %1957 = vst.msk [vmem:[#allocation3 + $0x18] sm:$0xff] %vm1953, %v1924
        %1958 = vst.msk [vmem:[#allocation3 + $0x20] sm:$0xff] %vm1953, %v1925
        %1959 = vst.msk [vmem:[#allocation3 + $0x28] sm:$0xff] %vm1953, %v1926
        %1960 = vst.msk [vmem:[#allocation3 + $0x30] sm:$0xff] %vm1953, %v1927
        %1961 = vst.msk [vmem:[#allocation3 + $0x38] sm:$0xff] %vm1953, %v1928
        %1962 = vst.msk [vmem:[#allocation3 + $0x40] sm:$0xff] %vm1953, %v1929
        %1963 = vst.msk [vmem:[#allocation3 + $0x48] sm:$0xff] %vm1953, %v1930
        %1964 = vst.msk [vmem:[#allocation3 + $0x50] sm:$0xff] %vm1953, %v1931
        %1965 = vst.msk [vmem:[#allocation3 + $0x58] sm:$0xff] %vm1953, %v1932
        %1966 = vst.msk [vmem:[#allocation3 + $0x60] sm:$0xff] %vm1953, %v1933
        %1967 = vst.msk [vmem:[#allocation3 + $0x68] sm:$0xff] %vm1953, %v1934
        %1968 = vst.msk [vmem:[#allocation3 + $0x70] sm:$0xff] %vm1953, %v1935
        %1969 = vst.msk [vmem:[#allocation3 + $0x78] sm:$0xff] %vm1953, %v1936
        %1970 = vst.msk [vmem:[#allocation3 + $0x80] sm:$0xff] %vm1953, %v1937
        %1971 = vst.msk [vmem:[#allocation3 + $0x88] sm:$0xff] %vm1953, %v1938
        %1972 = vst.msk [vmem:[#allocation3 + $0x90] sm:$0xff] %vm1953, %v1939
        %1973 = vst.msk [vmem:[#allocation3 + $0x98] sm:$0xff] %vm1953, %v1940
        %1974 = vst.msk [vmem:[#allocation3 + $0xa0] sm:$0xff] %vm1953, %v1941
        %1975 = vst.msk [vmem:[#allocation3 + $0xa8] sm:$0xff] %vm1953, %v1942
        %1976 = vst.msk [vmem:[#allocation3 + $0xb0] sm:$0xff] %vm1953, %v1943
        %1977 = vst.msk [vmem:[#allocation3 + $0xb8] sm:$0xff] %vm1953, %v1944
        %1978 = vst.msk [vmem:[#allocation3 + $0xc0] sm:$0xff] %vm1953, %v1945
        %1979 = vst.msk [vmem:[#allocation3 + $0xc8] sm:$0xff] %vm1953, %v1946
        %1980 = vst.msk [vmem:[#allocation3 + $0xd0] sm:$0xff] %vm1953, %v1947
        %1981 = vst.msk [vmem:[#allocation3 + $0xd8] sm:$0xff] %vm1953, %v1948
        %1982 = vst.msk [vmem:[#allocation3 + $0xe0] sm:$0xff] %vm1953, %v1949
        %1983 = vst.msk [vmem:[#allocation3 + $0xe8] sm:$0xff] %vm1953, %v1950
        %1984 = vst.msk [vmem:[#allocation3 + $0xf0] sm:$0xff] %vm1953, %v1951
        %1985 = vst.msk [vmem:[#allocation3 + $0xf8] sm:$0xff] %vm1953, %v1952
        %v1986 = vld [vmem:[#allocation4] sm:$0xff]
        %v1987 = vld [vmem:[#allocation4 + $0x8] sm:$0xff]
        %v1988 = vld [vmem:[#allocation4 + $0x10] sm:$0xff]
        %v1989 = vld [vmem:[#allocation4 + $0x18] sm:$0xff]
        %v1990 = vld [vmem:[#allocation4 + $0x20] sm:$0xff]
        %v1991 = vld [vmem:[#allocation4 + $0x28] sm:$0xff]
        %v1992 = vld [vmem:[#allocation4 + $0x30] sm:$0xff]
        %v1993 = vld [vmem:[#allocation4 + $0x38] sm:$0xff]
        %v1994 = vld [vmem:[#allocation4 + $0x40] sm:$0xff]
        %v1995 = vld [vmem:[#allocation4 + $0x48] sm:$0xff]
        %v1996 = vld [vmem:[#allocation4 + $0x50] sm:$0xff]
        %v1997 = vld [vmem:[#allocation4 + $0x58] sm:$0xff]
        %v1998 = vld [vmem:[#allocation4 + $0x60] sm:$0xff]
        %v1999 = vld [vmem:[#allocation4 + $0x68] sm:$0xff]
        %v2000 = vld [vmem:[#allocation4 + $0x70] sm:$0xff]
        %v2001 = vld [vmem:[#allocation4 + $0x78] sm:$0xff]
        %v2002 = vld [vmem:[#allocation4 + $0x80] sm:$0xff]
        %v2003 = vld [vmem:[#allocation4 + $0x88] sm:$0xff]
        %v2004 = vld [vmem:[#allocation4 + $0x90] sm:$0xff]
        %v2005 = vld [vmem:[#allocation4 + $0x98] sm:$0xff]
        %v2006 = vld [vmem:[#allocation4 + $0xa0] sm:$0xff]
        %v2007 = vld [vmem:[#allocation4 + $0xa8] sm:$0xff]
        %v2008 = vld [vmem:[#allocation4 + $0xb0] sm:$0xff]
        %v2009 = vld [vmem:[#allocation4 + $0xb8] sm:$0xff]
        %v2010 = vld [vmem:[#allocation4 + $0xc0] sm:$0xff]
        %v2011 = vld [vmem:[#allocation4 + $0xc8] sm:$0xff]
        %v2012 = vld [vmem:[#allocation4 + $0xd0] sm:$0xff]
        %v2013 = vld [vmem:[#allocation4 + $0xd8] sm:$0xff]
        %v2014 = vld [vmem:[#allocation4 + $0xe0] sm:$0xff]
        %v2015 = vld [vmem:[#allocation4 + $0xe8] sm:$0xff]
        %v2016 = vld [vmem:[#allocation4 + $0xf0] sm:$0xff]
        %v2017 = vld [vmem:[#allocation4 + $0xf8] sm:$0xff]
        %2019 = vset.pattern.permute.xlu0 0
        %2020 = vperm.xlu0 %2019, %v1346
        %v2021 = vpop.permute.xlu0 %2020
        %2024 = vset.pattern.permute.xlu0 0
        %2025 = vperm.xlu0 %2024, %v1348
        %v2026 = vpop.permute.xlu0 %2025
        %2029 = vset.pattern.permute.xlu0 0
        %2030 = vperm.xlu0 %2029, %v1350
        %v2031 = vpop.permute.xlu0 %2030
        %2034 = vset.pattern.permute.xlu0 0
        %2035 = vperm.xlu0 %2034, %v1352
        %v2036 = vpop.permute.xlu0 %2035
        %2039 = vset.pattern.permute.xlu0 0
        %2040 = vperm.xlu0 %2039, %v1354
        %v2041 = vpop.permute.xlu0 %2040
        %2044 = vset.pattern.permute.xlu0 0
        %2045 = vperm.xlu0 %2044, %v1356
        %v2046 = vpop.permute.xlu0 %2045
        %2049 = vset.pattern.permute.xlu0 0
        %2050 = vperm.xlu0 %2049, %v1358
        %v2051 = vpop.permute.xlu0 %2050
        %2054 = vset.pattern.permute.xlu0 0
        %2055 = vperm.xlu0 %2054, %v1360
        %v2056 = vpop.permute.xlu0 %2055
        %2059 = vset.pattern.permute.xlu0 0
        %2060 = vperm.xlu0 %2059, %v1362
        %v2061 = vpop.permute.xlu0 %2060
        %2064 = vset.pattern.permute.xlu0 0
        %2065 = vperm.xlu0 %2064, %v1364
        %v2066 = vpop.permute.xlu0 %2065
        %2069 = vset.pattern.permute.xlu0 0
        %2070 = vperm.xlu0 %2069, %v1366
        %v2071 = vpop.permute.xlu0 %2070
        %2074 = vset.pattern.permute.xlu0 0
        %2075 = vperm.xlu0 %2074, %v1368
        %v2076 = vpop.permute.xlu0 %2075
        %2079 = vset.pattern.permute.xlu0 0
        %2080 = vperm.xlu0 %2079, %v1370
        %v2081 = vpop.permute.xlu0 %2080
        %2084 = vset.pattern.permute.xlu0 0
        %2085 = vperm.xlu0 %2084, %v1372
        %v2086 = vpop.permute.xlu0 %2085
        %2089 = vset.pattern.permute.xlu0 0
        %2090 = vperm.xlu0 %2089, %v1374
        %v2091 = vpop.permute.xlu0 %2090
        %2094 = vset.pattern.permute.xlu0 0
        %2095 = vperm.xlu0 %2094, %v1376
        %v2096 = vpop.permute.xlu0 %2095
        %2099 = vset.pattern.permute.xlu0 0
        %2100 = vperm.xlu0 %2099, %v1378
        %v2101 = vpop.permute.xlu0 %2100
        %2104 = vset.pattern.permute.xlu0 0
        %2105 = vperm.xlu0 %2104, %v1380
        %v2106 = vpop.permute.xlu0 %2105
        %2109 = vset.pattern.permute.xlu0 0
        %2110 = vperm.xlu0 %2109, %v1382
        %v2111 = vpop.permute.xlu0 %2110
        %2114 = vset.pattern.permute.xlu0 0
        %2115 = vperm.xlu0 %2114, %v1384
        %v2116 = vpop.permute.xlu0 %2115
        %2119 = vset.pattern.permute.xlu0 0
        %2120 = vperm.xlu0 %2119, %v1386
        %v2121 = vpop.permute.xlu0 %2120
        %2124 = vset.pattern.permute.xlu0 0
        %2125 = vperm.xlu0 %2124, %v1388
        %v2126 = vpop.permute.xlu0 %2125
        %2129 = vset.pattern.permute.xlu0 0
        %2130 = vperm.xlu0 %2129, %v1390
        %v2131 = vpop.permute.xlu0 %2130
        %2134 = vset.pattern.permute.xlu0 0
        %2135 = vperm.xlu0 %2134, %v1392
        %v2136 = vpop.permute.xlu0 %2135
        %2139 = vset.pattern.permute.xlu0 0
        %2140 = vperm.xlu0 %2139, %v1394
        %v2141 = vpop.permute.xlu0 %2140
        %2144 = vset.pattern.permute.xlu0 0
        %2145 = vperm.xlu0 %2144, %v1396
        %v2146 = vpop.permute.xlu0 %2145
        %2149 = vset.pattern.permute.xlu0 0
        %2150 = vperm.xlu0 %2149, %v1398
        %v2151 = vpop.permute.xlu0 %2150
        %2154 = vset.pattern.permute.xlu0 0
        %2155 = vperm.xlu0 %2154, %v1400
        %v2156 = vpop.permute.xlu0 %2155
        %2159 = vset.pattern.permute.xlu0 0
        %2160 = vperm.xlu0 %2159, %v1402
        %v2161 = vpop.permute.xlu0 %2160
        %2164 = vset.pattern.permute.xlu0 0
        %2165 = vperm.xlu0 %2164, %v1404
        %v2166 = vpop.permute.xlu0 %2165
        %2169 = vset.pattern.permute.xlu0 0
        %2170 = vperm.xlu0 %2169, %v1406
        %v2171 = vpop.permute.xlu0 %2170
        %2174 = vset.pattern.permute.xlu0 0
        %2175 = vperm.xlu0 %2174, %v1408
        %v2176 = vpop.permute.xlu0 %2175
        %v2178 = vmul.f32 %v2021, %v1986
        %v2179 = vmul.f32 %v2026, %v1987
        %v2180 = vmul.f32 %v2031, %v1988
        %v2181 = vmul.f32 %v2036, %v1989
        %v2182 = vmul.f32 %v2041, %v1990
        %v2183 = vmul.f32 %v2046, %v1991
        %v2184 = vmul.f32 %v2051, %v1992
        %v2185 = vmul.f32 %v2056, %v1993
        %v2186 = vmul.f32 %v2061, %v1994
        %v2187 = vmul.f32 %v2066, %v1995
        %v2188 = vmul.f32 %v2071, %v1996
        %v2189 = vmul.f32 %v2076, %v1997
        %v2190 = vmul.f32 %v2081, %v1998
        %v2191 = vmul.f32 %v2086, %v1999
        %v2192 = vmul.f32 %v2091, %v2000
        %v2193 = vmul.f32 %v2096, %v2001
        %v2194 = vmul.f32 %v2101, %v2002
        %v2195 = vmul.f32 %v2106, %v2003
        %v2196 = vmul.f32 %v2111, %v2004
        %v2197 = vmul.f32 %v2116, %v2005
        %v2198 = vmul.f32 %v2121, %v2006
        %v2199 = vmul.f32 %v2126, %v2007
        %v2200 = vmul.f32 %v2131, %v2008
        %v2201 = vmul.f32 %v2136, %v2009
        %v2202 = vmul.f32 %v2141, %v2010
        %v2203 = vmul.f32 %v2146, %v2011
        %v2204 = vmul.f32 %v2151, %v2012
        %v2205 = vmul.f32 %v2156, %v2013
        %v2206 = vmul.f32 %v2161, %v2014
        %v2207 = vmul.f32 %v2166, %v2015
        %v2208 = vmul.f32 %v2171, %v2016
        %v2209 = vmul.f32 %v2176, %v2017
        %v2210 = vpack.c.bf16 %v1638, %v1634
        %v2211 = vpack.c.bf16 %v1640, %v1636
        %v2212 = vpack.c.bf16 %v1646, %v1642
        %v2213 = vpack.c.bf16 %v1648, %v1644
        %v2214 = vpack.c.bf16 %v1654, %v1650
        %v2215 = vpack.c.bf16 %v1656, %v1652
        %v2216 = vpack.c.bf16 %v1662, %v1658
        %v2217 = vpack.c.bf16 %v1664, %v1660
        %v2218 = vpack.c.bf16 %v1670, %v1666
        %v2219 = vpack.c.bf16 %v1672, %v1668
        %v2220 = vpack.c.bf16 %v1678, %v1674
        %v2221 = vpack.c.bf16 %v1680, %v1676
        %v2222 = vpack.c.bf16 %v1686, %v1682
        %v2223 = vpack.c.bf16 %v1688, %v1684
        %v2224 = vpack.c.bf16 %v1694, %v1690
        %v2225 = vpack.c.bf16 %v1696, %v1692
        %v2226 = vpack.c.bf16 %v1702, %v1698
        %v2227 = vpack.c.bf16 %v1704, %v1700
        %v2228 = vpack.c.bf16 %v1710, %v1706
        %v2229 = vpack.c.bf16 %v1712, %v1708
        %v2230 = vpack.c.bf16 %v1718, %v1714
        %v2231 = vpack.c.bf16 %v1720, %v1716
        %v2232 = vpack.c.bf16 %v1726, %v1722
        %v2233 = vpack.c.bf16 %v1728, %v1724
        %v2234 = vpack.c.bf16 %v1734, %v1730
        %v2235 = vpack.c.bf16 %v1736, %v1732
        %v2236 = vpack.c.bf16 %v1742, %v1738
        %v2237 = vpack.c.bf16 %v1744, %v1740
        %v2238 = vpack.c.bf16 %v1750, %v1746
        %v2239 = vpack.c.bf16 %v1752, %v1748
        %v2240 = vpack.c.bf16 %v1758, %v1754
        %v2241 = vpack.c.bf16 %v1760, %v1756
        %v2242 = vld [vmem:[%s353] sm:$0xf]
        %v2243 = vld [vmem:[%s353 + $0x4] sm:$0xf]
        %v2244 = vld [vmem:[%s353 + $0x8] sm:$0xf]
        %v2245 = vld [vmem:[%s353 + $0xc] sm:$0xf]
        %v2246 = vld [vmem:[%s353 + $0x10] sm:$0xf]
        %v2247 = vld [vmem:[%s353 + $0x14] sm:$0xf]
        %v2248 = vld [vmem:[%s353 + $0x18] sm:$0xf]
        %v2249 = vld [vmem:[%s353 + $0x1c] sm:$0xf]
        %v2250 = vld [vmem:[%s353 + $0x20] sm:$0xf]
        %v2251 = vld [vmem:[%s353 + $0x24] sm:$0xf]
        %v2252 = vld [vmem:[%s353 + $0x28] sm:$0xf]
        %v2253 = vld [vmem:[%s353 + $0x2c] sm:$0xf]
        %v2254 = vld [vmem:[%s353 + $0x30] sm:$0xf]
        %v2255 = vld [vmem:[%s353 + $0x34] sm:$0xf]
        %v2256 = vld [vmem:[%s353 + $0x38] sm:$0xf]
        %v2257 = vld [vmem:[%s353 + $0x3c] sm:$0xf]
        %v2258 = vld [vmem:[%s353 + $0x40] sm:$0xf]
        %v2259 = vld [vmem:[%s353 + $0x44] sm:$0xf]
        %v2260 = vld [vmem:[%s353 + $0x48] sm:$0xf]
        %v2261 = vld [vmem:[%s353 + $0x4c] sm:$0xf]
        %v2262 = vld [vmem:[%s353 + $0x50] sm:$0xf]
        %v2263 = vld [vmem:[%s353 + $0x54] sm:$0xf]
        %v2264 = vld [vmem:[%s353 + $0x58] sm:$0xf]
        %v2265 = vld [vmem:[%s353 + $0x5c] sm:$0xf]
        %v2266 = vld [vmem:[%s353 + $0x60] sm:$0xf]
        %v2267 = vld [vmem:[%s353 + $0x64] sm:$0xf]
        %v2268 = vld [vmem:[%s353 + $0x68] sm:$0xf]
        %v2269 = vld [vmem:[%s353 + $0x6c] sm:$0xf]
        %v2270 = vld [vmem:[%s353 + $0x70] sm:$0xf]
        %v2271 = vld [vmem:[%s353 + $0x74] sm:$0xf]
        %v2272 = vld [vmem:[%s353 + $0x78] sm:$0xf]
        %v2273 = vld [vmem:[%s353 + $0x7c] sm:$0xf]
        %v2306 = vunpack.c.l.b16 %v2242
        %v2307 = vunpack.c.l.b16 %v2243
        %v2308 = vunpack.c.l.b16 %v2244
        %v2309 = vunpack.c.l.b16 %v2245
        %v2310 = vunpack.c.l.b16 %v2246
        %v2311 = vunpack.c.l.b16 %v2247
        %v2312 = vunpack.c.l.b16 %v2248
        %v2313 = vunpack.c.l.b16 %v2249
        %v2314 = vunpack.c.l.b16 %v2250
        %v2315 = vunpack.c.l.b16 %v2251
        %v2316 = vunpack.c.l.b16 %v2252
        %v2317 = vunpack.c.l.b16 %v2253
        %v2318 = vunpack.c.l.b16 %v2254
        %v2319 = vunpack.c.l.b16 %v2255
        %v2320 = vunpack.c.l.b16 %v2256
        %v2321 = vunpack.c.l.b16 %v2257
        %v2322 = vunpack.c.l.b16 %v2258
        %v2323 = vunpack.c.l.b16 %v2259
        %v2324 = vunpack.c.l.b16 %v2260
        %v2325 = vunpack.c.l.b16 %v2261
        %v2326 = vunpack.c.l.b16 %v2262
        %v2327 = vunpack.c.l.b16 %v2263
        %v2328 = vunpack.c.l.b16 %v2264
        %v2329 = vunpack.c.l.b16 %v2265
        %v2330 = vunpack.c.l.b16 %v2266
        %v2331 = vunpack.c.l.b16 %v2267
        %v2332 = vunpack.c.l.b16 %v2268
        %v2333 = vunpack.c.l.b16 %v2269
        %v2334 = vunpack.c.l.b16 %v2270
        %v2335 = vunpack.c.l.b16 %v2271
        %v2336 = vunpack.c.l.b16 %v2272
        %v2337 = vunpack.c.l.b16 %v2273
        %v2338 = vpack.c.b16 %v2307, %v2306
        %v2339 = vpack.c.b16 %v2309, %v2308
        %v2340 = vpack.c.b16 %v2311, %v2310
        %v2341 = vpack.c.b16 %v2313, %v2312
        %v2342 = vpack.c.b16 %v2315, %v2314
        %v2343 = vpack.c.b16 %v2317, %v2316
        %v2344 = vpack.c.b16 %v2319, %v2318
        %v2345 = vpack.c.b16 %v2321, %v2320
        %v2346 = vpack.c.b16 %v2323, %v2322
        %v2347 = vpack.c.b16 %v2325, %v2324
        %v2348 = vpack.c.b16 %v2327, %v2326
        %v2349 = vpack.c.b16 %v2329, %v2328
        %v2350 = vpack.c.b16 %v2331, %v2330
        %v2351 = vpack.c.b16 %v2333, %v2332
        %v2352 = vpack.c.b16 %v2335, %v2334
        %v2353 = vpack.c.b16 %v2337, %v2336
        %2370 = vmatprep.subr.bf16.mxu0 0
        %2371 = vmatpush1.bf16.msra.mxu0 %v2338
        %2372 = vmatprep.subr.bf16.mxu0 0
        %2373 = vmatpush1.bf16.msra.mxu0 %v2339
        %2374 = vmatprep.subr.bf16.mxu0 0
        %2375 = vmatpush1.bf16.msra.mxu0 %v2340
        %2376 = vmatprep.subr.bf16.mxu0 0
        %2377 = vmatpush1.bf16.msra.mxu0 %v2341
        %2378 = vmatprep.subr.bf16.mxu0 0
        %2379 = vmatpush1.bf16.msra.mxu0 %v2342
        %2380 = vmatprep.subr.bf16.mxu0 0
        %2381 = vmatpush1.bf16.msra.mxu0 %v2343
        %2382 = vmatprep.subr.bf16.mxu0 0
        %2383 = vmatpush1.bf16.msra.mxu0 %v2344
        %2384 = vmatprep.subr.bf16.mxu0 0
        %2385 = vmatpush1.bf16.msra.mxu0 %v2345
        %2386 = vmatprep.subr.bf16.mxu0 0
        %2387 = vmatpush1.bf16.msra.mxu0 %v2346
        %2388 = vmatprep.subr.bf16.mxu0 0
        %2389 = vmatpush1.bf16.msra.mxu0 %v2347
        %2390 = vmatprep.subr.bf16.mxu0 0
        %2391 = vmatpush1.bf16.msra.mxu0 %v2348
        %2392 = vmatprep.subr.bf16.mxu0 0
        %2393 = vmatpush1.bf16.msra.mxu0 %v2349
        %2394 = vmatprep.subr.bf16.mxu0 0
        %2395 = vmatpush1.bf16.msra.mxu0 %v2350
        %2396 = vmatprep.subr.bf16.mxu0 0
        %2397 = vmatpush1.bf16.msra.mxu0 %v2351
        %2398 = vmatprep.subr.bf16.mxu0 0
        %2399 = vmatpush1.bf16.msra.mxu0 %v2352
        %2400 = vmatprep.subr.bf16.mxu0 0
        %2401 = vmatpush1.bf16.msra.mxu0 %v2353
        %2402 = vmatprep.mubr.bf16.mxu0 %v2211
        %2403 = vmatmul.mubr.bf16.gmra.mrb[0].mxu0 %v2210
        %v2404 = vpop.f32.mrb[0].mxu0
        %v2405 = vadd.f32 0.0, %v2404
        %v2406 = vpop.f32.mrb[0].mxu0
        %v2407 = vpop.f32.mrb[0].mxu0
        %v2408 = vadd.f32 0.0, %v2407
        %v2409 = vpop.f32.mrb[0].mxu0
        %2410 = vmatprep.mubr.bf16.mxu0 %v2213
        %2411 = vmatmul.mubr.bf16.gmra.mrb[0].mxu0 %v2212
        %v2412 = vpop.f32.mrb[0].mxu0
        %v2413 = vadd.f32 0.0, %v2412
        %v2414 = vpop.f32.mrb[0].mxu0
        %v2415 = vpop.f32.mrb[0].mxu0
        %v2416 = vadd.f32 0.0, %v2415
        %v2417 = vpop.f32.mrb[0].mxu0
        %2418 = vmatprep.mubr.bf16.mxu0 %v2215
        %2419 = vmatmul.mubr.bf16.gmra.mrb[0].mxu0 %v2214
        %v2420 = vpop.f32.mrb[0].mxu0
        %v2421 = vadd.f32 0.0, %v2420
        %v2422 = vpop.f32.mrb[0].mxu0
        %v2423 = vpop.f32.mrb[0].mxu0
        %v2424 = vadd.f32 0.0, %v2423
        %v2425 = vpop.f32.mrb[0].mxu0
        %2426 = vmatprep.mubr.bf16.mxu0 %v2217
        %2427 = vmatmul.mubr.bf16.gmra.mrb[0].mxu0 %v2216
        %v2428 = vpop.f32.mrb[0].mxu0
        %v2429 = vadd.f32 0.0, %v2428
        %v2430 = vpop.f32.mrb[0].mxu0
        %v2431 = vpop.f32.mrb[0].mxu0
        %v2432 = vadd.f32 0.0, %v2431
        %v2433 = vpop.f32.mrb[0].mxu0
        %2434 = vmatprep.mubr.bf16.mxu0 %v2219
        %2435 = vmatmul.mubr.bf16.gmra.mrb[0].mxu0 %v2218
        %v2436 = vpop.f32.mrb[0].mxu0
        %v2437 = vadd.f32 0.0, %v2436
        %v2438 = vpop.f32.mrb[0].mxu0
        %v2439 = vpop.f32.mrb[0].mxu0
        %v2440 = vadd.f32 0.0, %v2439
        %v2441 = vpop.f32.mrb[0].mxu0
        %2442 = vmatprep.mubr.bf16.mxu0 %v2221
        %2443 = vmatmul.mubr.bf16.gmra.mrb[0].mxu0 %v2220
        %v2444 = vpop.f32.mrb[0].mxu0
        %v2445 = vadd.f32 0.0, %v2444
        %v2446 = vpop.f32.mrb[0].mxu0
        %v2447 = vpop.f32.mrb[0].mxu0
        %v2448 = vadd.f32 0.0, %v2447
        %v2449 = vpop.f32.mrb[0].mxu0
        %2450 = vmatprep.mubr.bf16.mxu0 %v2223
        %2451 = vmatmul.mubr.bf16.gmra.mrb[0].mxu0 %v2222
        %v2452 = vpop.f32.mrb[0].mxu0
        %v2453 = vadd.f32 0.0, %v2452
        %v2454 = vpop.f32.mrb[0].mxu0
        %v2455 = vpop.f32.mrb[0].mxu0
        %v2456 = vadd.f32 0.0, %v2455
        %v2457 = vpop.f32.mrb[0].mxu0
        %2458 = vmatprep.mubr.bf16.mxu0 %v2225
        %2459 = vmatmul.mubr.bf16.gmra.mrb[0].mxu0 %v2224
        %v2460 = vpop.f32.mrb[0].mxu0
        %v2461 = vadd.f32 0.0, %v2460
        %v2462 = vpop.f32.mrb[0].mxu0
        %v2463 = vpop.f32.mrb[0].mxu0
        %v2464 = vadd.f32 0.0, %v2463
        %v2465 = vpop.f32.mrb[0].mxu0
        %2466 = vmatprep.mubr.bf16.mxu0 %v2227
        %2467 = vmatmul.mubr.bf16.gmra.mrb[0].mxu0 %v2226
        %v2468 = vpop.f32.mrb[0].mxu0
        %v2469 = vadd.f32 0.0, %v2468
        %v2470 = vpop.f32.mrb[0].mxu0
        %v2471 = vpop.f32.mrb[0].mxu0
        %v2472 = vadd.f32 0.0, %v2471
        %v2473 = vpop.f32.mrb[0].mxu0
        %2474 = vmatprep.mubr.bf16.mxu0 %v2229
        %2475 = vmatmul.mubr.bf16.gmra.mrb[0].mxu0 %v2228
        %v2476 = vpop.f32.mrb[0].mxu0
        %v2477 = vadd.f32 0.0, %v2476
        %v2478 = vpop.f32.mrb[0].mxu0
        %v2479 = vpop.f32.mrb[0].mxu0
        %v2480 = vadd.f32 0.0, %v2479
        %v2481 = vpop.f32.mrb[0].mxu0
        %2482 = vmatprep.mubr.bf16.mxu0 %v2231
        %2483 = vmatmul.mubr.bf16.gmra.mrb[0].mxu0 %v2230
        %v2484 = vpop.f32.mrb[0].mxu0
        %v2485 = vadd.f32 0.0, %v2484
        %v2486 = vpop.f32.mrb[0].mxu0
        %v2487 = vpop.f32.mrb[0].mxu0
        %v2488 = vadd.f32 0.0, %v2487
        %v2489 = vpop.f32.mrb[0].mxu0
        %2490 = vmatprep.mubr.bf16.mxu0 %v2233
        %2491 = vmatmul.mubr.bf16.gmra.mrb[0].mxu0 %v2232
        %v2492 = vpop.f32.mrb[0].mxu0
        %v2493 = vadd.f32 0.0, %v2492
        %v2494 = vpop.f32.mrb[0].mxu0
        %v2495 = vpop.f32.mrb[0].mxu0
        %v2496 = vadd.f32 0.0, %v2495
        %v2497 = vpop.f32.mrb[0].mxu0
        %2498 = vmatprep.mubr.bf16.mxu0 %v2235
        %2499 = vmatmul.mubr.bf16.gmra.mrb[0].mxu0 %v2234
        %v2500 = vpop.f32.mrb[0].mxu0
        %v2501 = vadd.f32 0.0, %v2500
        %v2502 = vpop.f32.mrb[0].mxu0
        %v2503 = vpop.f32.mrb[0].mxu0
        %v2504 = vadd.f32 0.0, %v2503
        %v2505 = vpop.f32.mrb[0].mxu0
        %2506 = vmatprep.mubr.bf16.mxu0 %v2237
        %2507 = vmatmul.mubr.bf16.gmra.mrb[0].mxu0 %v2236
        %v2508 = vpop.f32.mrb[0].mxu0
        %v2509 = vadd.f32 0.0, %v2508
        %v2510 = vpop.f32.mrb[0].mxu0
        %v2511 = vpop.f32.mrb[0].mxu0
        %v2512 = vadd.f32 0.0, %v2511
        %v2513 = vpop.f32.mrb[0].mxu0
        %2514 = vmatprep.mubr.bf16.mxu0 %v2239
        %2515 = vmatmul.mubr.bf16.gmra.mrb[0].mxu0 %v2238
        %v2516 = vpop.f32.mrb[0].mxu0
        %v2517 = vadd.f32 0.0, %v2516
        %v2518 = vpop.f32.mrb[0].mxu0
        %v2519 = vpop.f32.mrb[0].mxu0
        %v2520 = vadd.f32 0.0, %v2519
        %v2521 = vpop.f32.mrb[0].mxu0
        %2522 = vmatprep.mubr.bf16.mxu0 %v2241
        %2523 = vmatmul.mubr.bf16.gmra.mrb[0].mxu0 %v2240
        %v2524 = vpop.f32.mrb[0].mxu0
        %v2525 = vadd.f32 0.0, %v2524
        %v2526 = vpop.f32.mrb[0].mxu0
        %v2527 = vpop.f32.mrb[0].mxu0
        %v2528 = vadd.f32 0.0, %v2527
        %v2529 = vpop.f32.mrb[0].mxu0
        %2530 = vdwg.mxu0
        %v2531 = vadd.f32 %v2178, %v2405
        %v2532 = vadd.f32 %v2179, %v2408
        %v2533 = vadd.f32 %v2180, %v2413
        %v2534 = vadd.f32 %v2181, %v2416
        %v2535 = vadd.f32 %v2182, %v2421
        %v2536 = vadd.f32 %v2183, %v2424
        %v2537 = vadd.f32 %v2184, %v2429
        %v2538 = vadd.f32 %v2185, %v2432
        %v2539 = vadd.f32 %v2186, %v2437
        %v2540 = vadd.f32 %v2187, %v2440
        %v2541 = vadd.f32 %v2188, %v2445
        %v2542 = vadd.f32 %v2189, %v2448
        %v2543 = vadd.f32 %v2190, %v2453
        %v2544 = vadd.f32 %v2191, %v2456
        %v2545 = vadd.f32 %v2192, %v2461
        %v2546 = vadd.f32 %v2193, %v2464
        %v2547 = vadd.f32 %v2194, %v2469
        %v2548 = vadd.f32 %v2195, %v2472
        %v2549 = vadd.f32 %v2196, %v2477
        %v2550 = vadd.f32 %v2197, %v2480
        %v2551 = vadd.f32 %v2198, %v2485
        %v2552 = vadd.f32 %v2199, %v2488
        %v2553 = vadd.f32 %v2200, %v2493
        %v2554 = vadd.f32 %v2201, %v2496
        %v2555 = vadd.f32 %v2202, %v2501
        %v2556 = vadd.f32 %v2203, %v2504
        %v2557 = vadd.f32 %v2204, %v2509
        %v2558 = vadd.f32 %v2205, %v2512
        %v2559 = vadd.f32 %v2206, %v2517
        %v2560 = vadd.f32 %v2207, %v2520
        %v2561 = vadd.f32 %v2208, %v2525
        %v2562 = vadd.f32 %v2209, %v2528
        %2563 = vst [vmem:[#allocation4] sm:$0xff] %v2531
        %2564 = vst [vmem:[#allocation4 + $0x8] sm:$0xff] %v2532
        %2565 = vst [vmem:[#allocation4 + $0x10] sm:$0xff] %v2533
        %2566 = vst [vmem:[#allocation4 + $0x18] sm:$0xff] %v2534
        %2567 = vst [vmem:[#allocation4 + $0x20] sm:$0xff] %v2535
        %2568 = vst [vmem:[#allocation4 + $0x28] sm:$0xff] %v2536
        %2569 = vst [vmem:[#allocation4 + $0x30] sm:$0xff] %v2537
        %2570 = vst [vmem:[#allocation4 + $0x38] sm:$0xff] %v2538
        %2571 = vst [vmem:[#allocation4 + $0x40] sm:$0xff] %v2539
        %2572 = vst [vmem:[#allocation4 + $0x48] sm:$0xff] %v2540
        %2573 = vst [vmem:[#allocation4 + $0x50] sm:$0xff] %v2541
        %2574 = vst [vmem:[#allocation4 + $0x58] sm:$0xff] %v2542
        %2575 = vst [vmem:[#allocation4 + $0x60] sm:$0xff] %v2543
        %2576 = vst [vmem:[#allocation4 + $0x68] sm:$0xff] %v2544
        %2577 = vst [vmem:[#allocation4 + $0x70] sm:$0xff] %v2545
        %2578 = vst [vmem:[#allocation4 + $0x78] sm:$0xff] %v2546
        %2579 = vst [vmem:[#allocation4 + $0x80] sm:$0xff] %v2547
        %2580 = vst [vmem:[#allocation4 + $0x88] sm:$0xff] %v2548
        %2581 = vst [vmem:[#allocation4 + $0x90] sm:$0xff] %v2549
        %2582 = vst [vmem:[#allocation4 + $0x98] sm:$0xff] %v2550
        %2583 = vst [vmem:[#allocation4 + $0xa0] sm:$0xff] %v2551
        %2584 = vst [vmem:[#allocation4 + $0xa8] sm:$0xff] %v2552
        %2585 = vst [vmem:[#allocation4 + $0xb0] sm:$0xff] %v2553
        %2586 = vst [vmem:[#allocation4 + $0xb8] sm:$0xff] %v2554
        %2587 = vst [vmem:[#allocation4 + $0xc0] sm:$0xff] %v2555
        %2588 = vst [vmem:[#allocation4 + $0xc8] sm:$0xff] %v2556
        %2589 = vst [vmem:[#allocation4 + $0xd0] sm:$0xff] %v2557
        %2590 = vst [vmem:[#allocation4 + $0xd8] sm:$0xff] %v2558
        %2591 = vst [vmem:[#allocation4 + $0xe0] sm:$0xff] %v2559
        %2592 = vst [vmem:[#allocation4 + $0xe8] sm:$0xff] %v2560
        %2593 = vst [vmem:[#allocation4 + $0xf0] sm:$0xff] %v2561
        %2594 = vst [vmem:[#allocation4 + $0xf8] sm:$0xff] %v2562
        %2595 = vst.msk [vmem:[#allocation2] sm:$0xff] %vm1953, %v1281
        %2596 = vst.msk [vmem:[#allocation2 + $0x8] sm:$0xff] %vm1953, %v1282
        %2597 = vst.msk [vmem:[#allocation2 + $0x10] sm:$0xff] %vm1953, %v1283
        %2598 = vst.msk [vmem:[#allocation2 + $0x18] sm:$0xff] %vm1953, %v1284
        %2599 = vst.msk [vmem:[#allocation2 + $0x20] sm:$0xff] %vm1953, %v1285
        %2600 = vst.msk [vmem:[#allocation2 + $0x28] sm:$0xff] %vm1953, %v1286
        %2601 = vst.msk [vmem:[#allocation2 + $0x30] sm:$0xff] %vm1953, %v1287
        %2602 = vst.msk [vmem:[#allocation2 + $0x38] sm:$0xff] %vm1953, %v1288
        %2603 = vst.msk [vmem:[#allocation2 + $0x40] sm:$0xff] %vm1953, %v1289
        %2604 = vst.msk [vmem:[#allocation2 + $0x48] sm:$0xff] %vm1953, %v1290
        %2605 = vst.msk [vmem:[#allocation2 + $0x50] sm:$0xff] %vm1953, %v1291
        %2606 = vst.msk [vmem:[#allocation2 + $0x58] sm:$0xff] %vm1953, %v1292
        %2607 = vst.msk [vmem:[#allocation2 + $0x60] sm:$0xff] %vm1953, %v1293
        %2608 = vst.msk [vmem:[#allocation2 + $0x68] sm:$0xff] %vm1953, %v1294
        %2609 = vst.msk [vmem:[#allocation2 + $0x70] sm:$0xff] %vm1953, %v1295
        %2610 = vst.msk [vmem:[#allocation2 + $0x78] sm:$0xff] %vm1953, %v1296
        %2611 = vst.msk [vmem:[#allocation2 + $0x80] sm:$0xff] %vm1953, %v1297
        %2612 = vst.msk [vmem:[#allocation2 + $0x88] sm:$0xff] %vm1953, %v1298
        %2613 = vst.msk [vmem:[#allocation2 + $0x90] sm:$0xff] %vm1953, %v1299
        %2614 = vst.msk [vmem:[#allocation2 + $0x98] sm:$0xff] %vm1953, %v1300
        %2615 = vst.msk [vmem:[#allocation2 + $0xa0] sm:$0xff] %vm1953, %v1301
        %2616 = vst.msk [vmem:[#allocation2 + $0xa8] sm:$0xff] %vm1953, %v1302
        %2617 = vst.msk [vmem:[#allocation2 + $0xb0] sm:$0xff] %vm1953, %v1303
        %2618 = vst.msk [vmem:[#allocation2 + $0xb8] sm:$0xff] %vm1953, %v1304
        %2619 = vst.msk [vmem:[#allocation2 + $0xc0] sm:$0xff] %vm1953, %v1305
        %2620 = vst.msk [vmem:[#allocation2 + $0xc8] sm:$0xff] %vm1953, %v1306
        %2621 = vst.msk [vmem:[#allocation2 + $0xd0] sm:$0xff] %vm1953, %v1307
        %2622 = vst.msk [vmem:[#allocation2 + $0xd8] sm:$0xff] %vm1953, %v1308
        %2623 = vst.msk [vmem:[#allocation2 + $0xe0] sm:$0xff] %vm1953, %v1309
        %2624 = vst.msk [vmem:[#allocation2 + $0xe8] sm:$0xff] %vm1953, %v1310
        %2625 = vst.msk [vmem:[#allocation2 + $0xf0] sm:$0xff] %vm1953, %v1311
        %2626 = vst.msk [vmem:[#allocation2 + $0xf8] sm:$0xff] %vm1953, %v1312
        // Predicated region
        $region57: #{llama_attention.4} parent=35 // pred_check
          %p2627 = pneg %p411
        $region58: #{llama_attention.4} parent=35 // pred_check_branch
          %2629 = sbr.rel (%p2627) target = $region60
        $region59: #{llama_attention.4} parent=35 // pred_region
          %v2630 = vld [vmem:[#allocation4] sm:$0xff]
          %v2631 = vld [vmem:[#allocation4 + $0x8] sm:$0xff]
          %v2632 = vld [vmem:[#allocation4 + $0x10] sm:$0xff]
          %v2633 = vld [vmem:[#allocation4 + $0x18] sm:$0xff]
          %v2634 = vld [vmem:[#allocation4 + $0x20] sm:$0xff]
          %v2635 = vld [vmem:[#allocation4 + $0x28] sm:$0xff]
          %v2636 = vld [vmem:[#allocation4 + $0x30] sm:$0xff]
          %v2637 = vld [vmem:[#allocation4 + $0x38] sm:$0xff]
          %v2638 = vld [vmem:[#allocation4 + $0x40] sm:$0xff]
          %v2639 = vld [vmem:[#allocation4 + $0x48] sm:$0xff]
          %v2640 = vld [vmem:[#allocation4 + $0x50] sm:$0xff]
          %v2641 = vld [vmem:[#allocation4 + $0x58] sm:$0xff]
          %v2642 = vld [vmem:[#allocation4 + $0x60] sm:$0xff]
          %v2643 = vld [vmem:[#allocation4 + $0x68] sm:$0xff]
          %v2644 = vld [vmem:[#allocation4 + $0x70] sm:$0xff]
          %v2645 = vld [vmem:[#allocation4 + $0x78] sm:$0xff]
          %v2646 = vld [vmem:[#allocation4 + $0x80] sm:$0xff]
          %v2647 = vld [vmem:[#allocation4 + $0x88] sm:$0xff]
          %v2648 = vld [vmem:[#allocation4 + $0x90] sm:$0xff]
          %v2649 = vld [vmem:[#allocation4 + $0x98] sm:$0xff]
          %v2650 = vld [vmem:[#allocation4 + $0xa0] sm:$0xff]
          %v2651 = vld [vmem:[#allocation4 + $0xa8] sm:$0xff]
          %v2652 = vld [vmem:[#allocation4 + $0xb0] sm:$0xff]
          %v2653 = vld [vmem:[#allocation4 + $0xb8] sm:$0xff]
          %v2654 = vld [vmem:[#allocation4 + $0xc0] sm:$0xff]
          %v2655 = vld [vmem:[#allocation4 + $0xc8] sm:$0xff]
          %v2656 = vld [vmem:[#allocation4 + $0xd0] sm:$0xff]
          %v2657 = vld [vmem:[#allocation4 + $0xd8] sm:$0xff]
          %v2658 = vld [vmem:[#allocation4 + $0xe0] sm:$0xff]
          %v2659 = vld [vmem:[#allocation4 + $0xe8] sm:$0xff]
          %v2660 = vld [vmem:[#allocation4 + $0xf0] sm:$0xff]
          %v2661 = vld [vmem:[#allocation4 + $0xf8] sm:$0xff]
          %v2662 = vld [vmem:[#allocation3] sm:$0xff]
          %v2663 = vld [vmem:[#allocation3 + $0x8] sm:$0xff]
          %v2664 = vld [vmem:[#allocation3 + $0x10] sm:$0xff]
          %v2665 = vld [vmem:[#allocation3 + $0x18] sm:$0xff]
          %v2666 = vld [vmem:[#allocation3 + $0x20] sm:$0xff]
          %v2667 = vld [vmem:[#allocation3 + $0x28] sm:$0xff]
          %v2668 = vld [vmem:[#allocation3 + $0x30] sm:$0xff]
          %v2669 = vld [vmem:[#allocation3 + $0x38] sm:$0xff]
          %v2670 = vld [vmem:[#allocation3 + $0x40] sm:$0xff]
          %v2671 = vld [vmem:[#allocation3 + $0x48] sm:$0xff]
          %v2672 = vld [vmem:[#allocation3 + $0x50] sm:$0xff]
          %v2673 = vld [vmem:[#allocation3 + $0x58] sm:$0xff]
          %v2674 = vld [vmem:[#allocation3 + $0x60] sm:$0xff]
          %v2675 = vld [vmem:[#allocation3 + $0x68] sm:$0xff]
          %v2676 = vld [vmem:[#allocation3 + $0x70] sm:$0xff]
          %v2677 = vld [vmem:[#allocation3 + $0x78] sm:$0xff]
          %v2678 = vld [vmem:[#allocation3 + $0x80] sm:$0xff]
          %v2679 = vld [vmem:[#allocation3 + $0x88] sm:$0xff]
          %v2680 = vld [vmem:[#allocation3 + $0x90] sm:$0xff]
          %v2681 = vld [vmem:[#allocation3 + $0x98] sm:$0xff]
          %v2682 = vld [vmem:[#allocation3 + $0xa0] sm:$0xff]
          %v2683 = vld [vmem:[#allocation3 + $0xa8] sm:$0xff]
          %v2684 = vld [vmem:[#allocation3 + $0xb0] sm:$0xff]
          %v2685 = vld [vmem:[#allocation3 + $0xb8] sm:$0xff]
          %v2686 = vld [vmem:[#allocation3 + $0xc0] sm:$0xff]
          %v2687 = vld [vmem:[#allocation3 + $0xc8] sm:$0xff]
          %v2688 = vld [vmem:[#allocation3 + $0xd0] sm:$0xff]
          %v2689 = vld [vmem:[#allocation3 + $0xd8] sm:$0xff]
          %v2690 = vld [vmem:[#allocation3 + $0xe0] sm:$0xff]
          %v2691 = vld [vmem:[#allocation3 + $0xe8] sm:$0xff]
          %v2692 = vld [vmem:[#allocation3 + $0xf0] sm:$0xff]
          %v2693 = vld [vmem:[#allocation3 + $0xf8] sm:$0xff]
          %v2694 = vrcp.pop %v2662
          %v2695 = vrcp.pop %v2663
          %v2696 = vrcp.pop %v2664
          %v2697 = vrcp.pop %v2665
          %v2698 = vrcp.pop %v2666
          %v2699 = vrcp.pop %v2667
          %v2700 = vrcp.pop %v2668
          %v2701 = vrcp.pop %v2669
          %v2702 = vrcp.pop %v2670
          %v2703 = vrcp.pop %v2671
          %v2704 = vrcp.pop %v2672
          %v2705 = vrcp.pop %v2673
          %v2706 = vrcp.pop %v2674
          %v2707 = vrcp.pop %v2675
          %v2708 = vrcp.pop %v2676
          %v2709 = vrcp.pop %v2677
          %v2710 = vrcp.pop %v2678
          %v2711 = vrcp.pop %v2679
          %v2712 = vrcp.pop %v2680
          %v2713 = vrcp.pop %v2681
          %v2714 = vrcp.pop %v2682
          %v2715 = vrcp.pop %v2683
          %v2716 = vrcp.pop %v2684
          %v2717 = vrcp.pop %v2685
          %v2718 = vrcp.pop %v2686
          %v2719 = vrcp.pop %v2687
          %v2720 = vrcp.pop %v2688
          %v2721 = vrcp.pop %v2689
          %v2722 = vrcp.pop %v2690
          %v2723 = vrcp.pop %v2691
          %v2724 = vrcp.pop %v2692
          %v2725 = vrcp.pop %v2693
          %2727 = vset.pattern.permute.xlu0 0
          %2728 = vperm.xlu0 %2727, %v2694
          %v2729 = vpop.permute.xlu0 %2728
          %2732 = vset.pattern.permute.xlu0 0
          %2733 = vperm.xlu0 %2732, %v2695
          %v2734 = vpop.permute.xlu0 %2733
          %2737 = vset.pattern.permute.xlu0 0
          %2738 = vperm.xlu0 %2737, %v2696
          %v2739 = vpop.permute.xlu0 %2738
          %2742 = vset.pattern.permute.xlu0 0
          %2743 = vperm.xlu0 %2742, %v2697
          %v2744 = vpop.permute.xlu0 %2743
          %2747 = vset.pattern.permute.xlu0 0
          %2748 = vperm.xlu0 %2747, %v2698
          %v2749 = vpop.permute.xlu0 %2748
          %2752 = vset.pattern.permute.xlu0 0
          %2753 = vperm.xlu0 %2752, %v2699
          %v2754 = vpop.permute.xlu0 %2753
          %2757 = vset.pattern.permute.xlu0 0
          %2758 = vperm.xlu0 %2757, %v2700
          %v2759 = vpop.permute.xlu0 %2758
          %2762 = vset.pattern.permute.xlu0 0
          %2763 = vperm.xlu0 %2762, %v2701
          %v2764 = vpop.permute.xlu0 %2763
          %2767 = vset.pattern.permute.xlu0 0
          %2768 = vperm.xlu0 %2767, %v2702
          %v2769 = vpop.permute.xlu0 %2768
          %2772 = vset.pattern.permute.xlu0 0
          %2773 = vperm.xlu0 %2772, %v2703
          %v2774 = vpop.permute.xlu0 %2773
          %2777 = vset.pattern.permute.xlu0 0
          %2778 = vperm.xlu0 %2777, %v2704
          %v2779 = vpop.permute.xlu0 %2778
          %2782 = vset.pattern.permute.xlu0 0
          %2783 = vperm.xlu0 %2782, %v2705
          %v2784 = vpop.permute.xlu0 %2783
          %2787 = vset.pattern.permute.xlu0 0
          %2788 = vperm.xlu0 %2787, %v2706
          %v2789 = vpop.permute.xlu0 %2788
          %2792 = vset.pattern.permute.xlu0 0
          %2793 = vperm.xlu0 %2792, %v2707
          %v2794 = vpop.permute.xlu0 %2793
          %2797 = vset.pattern.permute.xlu0 0
          %2798 = vperm.xlu0 %2797, %v2708
          %v2799 = vpop.permute.xlu0 %2798
          %2802 = vset.pattern.permute.xlu0 0
          %2803 = vperm.xlu0 %2802, %v2709
          %v2804 = vpop.permute.xlu0 %2803
          %2807 = vset.pattern.permute.xlu0 0
          %2808 = vperm.xlu0 %2807, %v2710
          %v2809 = vpop.permute.xlu0 %2808
          %2812 = vset.pattern.permute.xlu0 0
          %2813 = vperm.xlu0 %2812, %v2711
          %v2814 = vpop.permute.xlu0 %2813
          %2817 = vset.pattern.permute.xlu0 0
          %2818 = vperm.xlu0 %2817, %v2712
          %v2819 = vpop.permute.xlu0 %2818
          %2822 = vset.pattern.permute.xlu0 0
          %2823 = vperm.xlu0 %2822, %v2713
          %v2824 = vpop.permute.xlu0 %2823
          %2827 = vset.pattern.permute.xlu0 0
          %2828 = vperm.xlu0 %2827, %v2714
          %v2829 = vpop.permute.xlu0 %2828
          %2832 = vset.pattern.permute.xlu0 0
          %2833 = vperm.xlu0 %2832, %v2715
          %v2834 = vpop.permute.xlu0 %2833
          %2837 = vset.pattern.permute.xlu0 0
          %2838 = vperm.xlu0 %2837, %v2716
          %v2839 = vpop.permute.xlu0 %2838
          %2842 = vset.pattern.permute.xlu0 0
          %2843 = vperm.xlu0 %2842, %v2717
          %v2844 = vpop.permute.xlu0 %2843
          %2847 = vset.pattern.permute.xlu0 0
          %2848 = vperm.xlu0 %2847, %v2718
          %v2849 = vpop.permute.xlu0 %2848
          %2852 = vset.pattern.permute.xlu0 0
          %2853 = vperm.xlu0 %2852, %v2719
          %v2854 = vpop.permute.xlu0 %2853
          %2857 = vset.pattern.permute.xlu0 0
          %2858 = vperm.xlu0 %2857, %v2720
          %v2859 = vpop.permute.xlu0 %2858
          %2862 = vset.pattern.permute.xlu0 0
          %2863 = vperm.xlu0 %2862, %v2721
          %v2864 = vpop.permute.xlu0 %2863
          %2867 = vset.pattern.permute.xlu0 0
          %2868 = vperm.xlu0 %2867, %v2722
          %v2869 = vpop.permute.xlu0 %2868
          %2872 = vset.pattern.permute.xlu0 0
          %2873 = vperm.xlu0 %2872, %v2723
          %v2874 = vpop.permute.xlu0 %2873
          %2877 = vset.pattern.permute.xlu0 0
          %2878 = vperm.xlu0 %2877, %v2724
          %v2879 = vpop.permute.xlu0 %2878
          %2882 = vset.pattern.permute.xlu0 0
          %2883 = vperm.xlu0 %2882, %v2725
          %v2884 = vpop.permute.xlu0 %2883
          %v2886 = vmul.f32 %v2630, %v2729
          %v2887 = vmul.f32 %v2631, %v2734
          %v2888 = vmul.f32 %v2632, %v2739
          %v2889 = vmul.f32 %v2633, %v2744
          %v2890 = vmul.f32 %v2634, %v2749
          %v2891 = vmul.f32 %v2635, %v2754
          %v2892 = vmul.f32 %v2636, %v2759
          %v2893 = vmul.f32 %v2637, %v2764
          %v2894 = vmul.f32 %v2638, %v2769
          %v2895 = vmul.f32 %v2639, %v2774
          %v2896 = vmul.f32 %v2640, %v2779
          %v2897 = vmul.f32 %v2641, %v2784
          %v2898 = vmul.f32 %v2642, %v2789
          %v2899 = vmul.f32 %v2643, %v2794
          %v2900 = vmul.f32 %v2644, %v2799
          %v2901 = vmul.f32 %v2645, %v2804
          %v2902 = vmul.f32 %v2646, %v2809
          %v2903 = vmul.f32 %v2647, %v2814
          %v2904 = vmul.f32 %v2648, %v2819
          %v2905 = vmul.f32 %v2649, %v2824
          %v2906 = vmul.f32 %v2650, %v2829
          %v2907 = vmul.f32 %v2651, %v2834
          %v2908 = vmul.f32 %v2652, %v2839
          %v2909 = vmul.f32 %v2653, %v2844
          %v2910 = vmul.f32 %v2654, %v2849
          %v2911 = vmul.f32 %v2655, %v2854
          %v2912 = vmul.f32 %v2656, %v2859
          %v2913 = vmul.f32 %v2657, %v2864
          %v2914 = vmul.f32 %v2658, %v2869
          %v2915 = vmul.f32 %v2659, %v2874
          %v2916 = vmul.f32 %v2660, %v2879
          %v2917 = vmul.f32 %v2661, %v2884
          %v2918 = vpack.c.bf16 %v2887, %v2886
          %v2919 = vpack.c.bf16 %v2889, %v2888
          %v2920 = vpack.c.bf16 %v2891, %v2890
          %v2921 = vpack.c.bf16 %v2893, %v2892
          %v2922 = vpack.c.bf16 %v2895, %v2894
          %v2923 = vpack.c.bf16 %v2897, %v2896
          %v2924 = vpack.c.bf16 %v2899, %v2898
          %v2925 = vpack.c.bf16 %v2901, %v2900
          %v2926 = vpack.c.bf16 %v2903, %v2902
          %v2927 = vpack.c.bf16 %v2905, %v2904
          %v2928 = vpack.c.bf16 %v2907, %v2906
          %v2929 = vpack.c.bf16 %v2909, %v2908
          %v2930 = vpack.c.bf16 %v2911, %v2910
          %v2931 = vpack.c.bf16 %v2913, %v2912
          %v2932 = vpack.c.bf16 %v2915, %v2914
          %v2933 = vpack.c.bf16 %v2917, %v2916
          %v2950 = vunpack.c.l.b16 %v2918
          %v2951 = vunpack.c.h.b16 %v2918
          %v2952 = vunpack.c.l.b16 %v2919
          %v2953 = vunpack.c.h.b16 %v2919
          %v2954 = vunpack.c.l.b16 %v2920
          %v2955 = vunpack.c.h.b16 %v2920
          %v2956 = vunpack.c.l.b16 %v2921
          %v2957 = vunpack.c.h.b16 %v2921
          %v2958 = vunpack.c.l.b16 %v2922
          %v2959 = vunpack.c.h.b16 %v2922
          %v2960 = vunpack.c.l.b16 %v2923
          %v2961 = vunpack.c.h.b16 %v2923
          %v2962 = vunpack.c.l.b16 %v2924
          %v2963 = vunpack.c.h.b16 %v2924
          %v2964 = vunpack.c.l.b16 %v2925
          %v2965 = vunpack.c.h.b16 %v2925
          %v2966 = vunpack.c.l.b16 %v2926
          %v2967 = vunpack.c.h.b16 %v2926
          %v2968 = vunpack.c.l.b16 %v2927
          %v2969 = vunpack.c.h.b16 %v2927
          %v2970 = vunpack.c.l.b16 %v2928
          %v2971 = vunpack.c.h.b16 %v2928
          %v2972 = vunpack.c.l.b16 %v2929
          %v2973 = vunpack.c.h.b16 %v2929
          %v2974 = vunpack.c.l.b16 %v2930
          %v2975 = vunpack.c.h.b16 %v2930
          %v2976 = vunpack.c.l.b16 %v2931
          %v2977 = vunpack.c.h.b16 %v2931
          %v2978 = vunpack.c.l.b16 %v2932
          %v2979 = vunpack.c.h.b16 %v2932
          %v2980 = vunpack.c.l.b16 %v2933
          %v2981 = vunpack.c.h.b16 %v2933
          %v2982 = vpack.c.b16 %v2950, %v2950
          %v2983 = vpack.c.b16 %v2951, %v2951
          %v2984 = vpack.c.b16 %v2952, %v2952
          %v2985 = vpack.c.b16 %v2953, %v2953
          %v2986 = vpack.c.b16 %v2954, %v2954
          %v2987 = vpack.c.b16 %v2955, %v2955
          %v2988 = vpack.c.b16 %v2956, %v2956
          %v2989 = vpack.c.b16 %v2957, %v2957
          %v2990 = vpack.c.b16 %v2958, %v2958
          %v2991 = vpack.c.b16 %v2959, %v2959
          %v2992 = vpack.c.b16 %v2960, %v2960
          %v2993 = vpack.c.b16 %v2961, %v2961
          %v2994 = vpack.c.b16 %v2962, %v2962
          %v2995 = vpack.c.b16 %v2963, %v2963
          %v2996 = vpack.c.b16 %v2964, %v2964
          %v2997 = vpack.c.b16 %v2965, %v2965
          %v2998 = vpack.c.b16 %v2966, %v2966
          %v2999 = vpack.c.b16 %v2967, %v2967
          %v3000 = vpack.c.b16 %v2968, %v2968
          %v3001 = vpack.c.b16 %v2969, %v2969
          %v3002 = vpack.c.b16 %v2970, %v2970
          %v3003 = vpack.c.b16 %v2971, %v2971
          %v3004 = vpack.c.b16 %v2972, %v2972
          %v3005 = vpack.c.b16 %v2973, %v2973
          %v3006 = vpack.c.b16 %v2974, %v2974
          %v3007 = vpack.c.b16 %v2975, %v2975
          %v3008 = vpack.c.b16 %v2976, %v2976
          %v3009 = vpack.c.b16 %v2977, %v2977
          %v3010 = vpack.c.b16 %v2978, %v2978
          %v3011 = vpack.c.b16 %v2979, %v2979
          %v3012 = vpack.c.b16 %v2980, %v2980
          %v3013 = vpack.c.b16 %v2981, %v2981
          %3046 = vst [vmem:[%s401] sm:$0xf] %v2982
          %3047 = vst [vmem:[%s401 + $0x4] sm:$0xf] %v2983
          %3048 = vst [vmem:[%s401 + $0x8] sm:$0xf] %v2984
          %3049 = vst [vmem:[%s401 + $0xc] sm:$0xf] %v2985
          %3050 = vst [vmem:[%s401 + $0x10] sm:$0xf] %v2986
          %3051 = vst [vmem:[%s401 + $0x14] sm:$0xf] %v2987
          %3052 = vst [vmem:[%s401 + $0x18] sm:$0xf] %v2988
          %3053 = vst [vmem:[%s401 + $0x1c] sm:$0xf] %v2989
          %3054 = vst [vmem:[%s401 + $0x20] sm:$0xf] %v2990
          %3055 = vst [vmem:[%s401 + $0x24] sm:$0xf] %v2991
          %3056 = vst [vmem:[%s401 + $0x28] sm:$0xf] %v2992
          %3057 = vst [vmem:[%s401 + $0x2c] sm:$0xf] %v2993
          %3058 = vst [vmem:[%s401 + $0x30] sm:$0xf] %v2994
          %3059 = vst [vmem:[%s401 + $0x34] sm:$0xf] %v2995
          %3060 = vst [vmem:[%s401 + $0x38] sm:$0xf] %v2996
          %3061 = vst [vmem:[%s401 + $0x3c] sm:$0xf] %v2997
          %3062 = vst [vmem:[%s401 + $0x40] sm:$0xf] %v2998
          %3063 = vst [vmem:[%s401 + $0x44] sm:$0xf] %v2999
          %3064 = vst [vmem:[%s401 + $0x48] sm:$0xf] %v3000
          %3065 = vst [vmem:[%s401 + $0x4c] sm:$0xf] %v3001
          %3066 = vst [vmem:[%s401 + $0x50] sm:$0xf] %v3002
          %3067 = vst [vmem:[%s401 + $0x54] sm:$0xf] %v3003
          %3068 = vst [vmem:[%s401 + $0x58] sm:$0xf] %v3004
          %3069 = vst [vmem:[%s401 + $0x5c] sm:$0xf] %v3005
          %3070 = vst [vmem:[%s401 + $0x60] sm:$0xf] %v3006
          %3071 = vst [vmem:[%s401 + $0x64] sm:$0xf] %v3007
          %3072 = vst [vmem:[%s401 + $0x68] sm:$0xf] %v3008
          %3073 = vst [vmem:[%s401 + $0x6c] sm:$0xf] %v3009
          %3074 = vst [vmem:[%s401 + $0x70] sm:$0xf] %v3010
          %3075 = vst [vmem:[%s401 + $0x74] sm:$0xf] %v3011
          %3076 = vst [vmem:[%s401 + $0x78] sm:$0xf] %v3012
          %3077 = vst [vmem:[%s401 + $0x7c] sm:$0xf] %v3013
        $region60: #{llama_attention.4} parent=35 // pred_fallthru
          _
        %s3078 = sand.u32 %s189, 1
        %s3079 = scalar_lea.sflag [#allocation7], %s3078
        %s3080 = sand.u32 %s189, 1
        %s3081 = smul.addr %s3080, 128
        %s3082 = scalar_lea.vmem [#allocation13], %s3081
        // Predicated region
        $region61: #{llama_attention.4} parent=35 // pred_check
          %p3083 = pneg %p199
        $region62: #{llama_attention.4} parent=35 // pred_check_branch
          %3085 = sbr.rel (%p3083) target = $region64
        $region63: #{llama_attention.4} parent=35 // pred_region
          %s3086 = smul.u32 32, %s35
          %s3088 = ssub.s32 2048, 2048
          %3089 = vsyncadd %s3079, %s3088
          %s3090 = smul.addr %s3086, 2
          %s3091 = sadd.s32 %s34, %s3090
          %s3092 = smul.addr %s33, 64
          %s3093 = sadd.s32 %s3091, %s3092
          %s3094 = smul.addr %s3093, 64
          %s3095 = scalar_lea.hbm %s4, %s3094
          %s3096 = sshll.u32 %s3082, 4
          %s3097 = int_to_ptr.vmem [resolvable:$true] %s3096
          %3102 = dma.vmem_to_hbm [thread:$0]  %s3097, 2048, %s3095, %s3079, 64, 128, 4
        $region64: #{llama_attention.4} parent=35 // pred_fallthru
          _
      $region36: #{llama_attention.4} parent=5 // pred_fallthru
        _
      %p3103 = scmp.le.s32.totalorder 2, %s22
      // Predicated region
      $region65: #{llama_attention.4} parent=5 // pred_check
        %p3104 = pneg %p3103
      $region66: #{llama_attention.4} parent=5 // pred_check_branch
        %3106 = sbr.rel (%p3104) target = $region68
      $region67: #{llama_attention.4} parent=5 // pred_region
        %s3107 = ssub.s32 %s22, 2
        // Predicated region
        $region69: #{llama_attention.4} parent=67 // pred_check
          %p3108 = pneg %p205
        $region70: #{llama_attention.4} parent=67 // pred_check_branch
          %3110 = sbr.rel (%p3108) target = $region72
        $region71: #{llama_attention.4} parent=67 // pred_region
          %s3111 = sand.u32 %s190, 1
          %s3112 = scalar_lea.sflag [#allocation7], %s3111
          %s3113 = sand.u32 %s190, 1
          %s3114 = smul.addr %s3113, 128
          %s3115 = scalar_lea.vmem [#allocation13], %s3114
          %3116 = dma.done %s3112, 2048
        $region72: #{llama_attention.4} parent=67 // pred_fallthru
          _
      $region68: #{llama_attention.4} parent=5 // pred_fallthru
        _
    $region6: #{llama_attention.4} parent=1 // loop_footer
      %s26 = sadd.s32 1, %s22
    $region7: #{llama_attention.4} parent=1 // loop_footer_branch
      %21 = sbr.rel target = $region3
    $region8: #{llama_attention.4} parent=1 // loop_exit
      _
    %3117 = vsyncpa [#allocation6], 1
    %s3118 = scalar_lea.sflag [#allocation6], 1
    %3119 = vsyncpa %s3118, 1
    %3120 = vsyncpa [#allocation9], 1
    %s3121 = scalar_lea.sflag [#allocation9], 1
    %3122 = vsyncpa %s3121, 1
    %3123 = vsyncpa [#allocation12], 1
    %s3124 = scalar_lea.sflag [#allocation12], 1
    %3125 = vsyncpa %s3124, 1
    %3126 = vsyncpa [#allocation7], 1
    %s3127 = scalar_lea.sflag [#allocation7], 1
    %3128 = vsyncpa %s3127, 1

</llo_original>
